<compile_context>
chip_gen: v6e
topology: v6e:2x2x1
jax: 0.10.0
libtpu: 0.0.40
codegen_flags: <defaults>
</compile_context>

<pallas_src>
import functools
import math

import jax
import jax.numpy as jnp
import numpy as np
from jax.experimental import pallas as pl
from jax.experimental.pallas import tpu as pltpu

LN_EPS = 1e-5
MASK_NEG = 1e9     # additive bias magnitude for masked attention entries (f32 only)
LANES = 128        # lane width of the packed weight / mask / output slabs


def _layernorm(x, gamma, beta):
    mu = jnp.mean(x, axis=-1, keepdims=True)
    var = jnp.mean((x - mu) ** 2, axis=-1, keepdims=True)
    return (x - mu) * jax.lax.rsqrt(var + LN_EPS) * gamma + beta


def _round_up(x, m):
    return (x + m - 1) // m * m


# ---------------------------------------------------------------------------
# One-time parameter preprocessing: fuse + pack everything into one bf16 slab
# ---------------------------------------------------------------------------
def pack_params(params, mut_types):
    """Fuse K/V (and Q/K/V for the self-attention block) and pack every weight,
    bias, LayerNorm parameter and embedding into a single lane-dense bf16 slab
    of shape (rows, 128).

    Returns (slab_bf16, layout) where layout maps name -> (row_off, rows, cols)
    with static Python ints. Every entry starts at an 8-row-aligned offset so
    bf16 sublane packing never straddles an entry boundary.
    """
    entries = []  # (name, np.float32 2-D array)

    def add(name, arr):
        a = np.asarray(arr, dtype=np.float32)
        if a.ndim == 1:
            a = a.reshape(1, -1)
        assert a.ndim == 2 and a.shape[1] <= LANES, f"{name}: widen LANES"
        entries.append((name, a))

    def cat(*xs):
        return np.concatenate([np.asarray(x, dtype=np.float32) for x in xs], axis=-1)

    def add_block(prefix, p, self_attn):
        if self_attn:
            add(prefix + "wqkv", cat(p["wq"], p["wk"], p["wv"]))
            add(prefix + "bqkv", cat(p["bq"], p["bk"], p["bv"]))
        else:
            add(prefix + "wq", p["wq"])
            add(prefix + "bq", p["bq"])
            add(prefix + "wkv", cat(p["wk"], p["wv"]))
            add(prefix + "bkv", cat(p["bk"], p["bv"]))
        add(prefix + "wo", p["wo"])
        add(prefix + "bo", p["bo"])
        add(prefix + "w1", p["w1"])
        add(prefix + "b1", p["b1"])
        add(prefix + "w2", p["w2"])
        add(prefix + "b2", p["b2"])
        add(prefix + "ln1_g", p["ln1_g"])
        add(prefix + "ln1_b", p["ln1_b"])
        add(prefix + "ln2_g", p["ln2_g"])
        add(prefix + "ln2_b", p["ln2_b"])

    add("sys_emb", params["system_embedding"])
    for i, mt in enumerate(mut_types):
        add(f"mut{i}/emb", params["mut_embedding"][mt])
        add_block(f"mut{i}/", params["mut_tree_convs"][mt], self_attn=False)
    add_block("sys/", params["system_tree_conv"], self_attn=True)

    ce = params["compound"]
    add("cenc/we1", ce["we1"]); add("cenc/be1", ce["be1"])
    add("cenc/we2", ce["we2"]); add("cenc/be2", ce["be2"])
    add("cenc/wm", ce["wm"]);   add("cenc/bm", ce["bm"])
    add("cenc/norm_g", ce["norm_g"]); add("cenc/norm_b", ce["norm_b"])
    add("pred/w", params["predictor"]["w"])
    add("pred/b", params["predictor"]["b"])

    layout, off = {}, 0
    for name, a in entries:
        r, c = a.shape
        layout[name] = (off, r, c)
        off += _round_up(r, 8)
    total_rows = _round_up(max(off, 8), 8)

    slab = np.zeros((total_rows, LANES), np.float32)
    for name, a in entries:
        o, r, c = layout[name]
        slab[o:o + r, :c] = a
    return jnp.asarray(slab).astype(jnp.bfloat16), layout


def _pack_masks(mut_dict, hierarchical_masks, mut_types):
    """Pack all per-layer attention masks into one lane-dense (L, B, S, 128) slab."""
    masks = [mut_dict[mt] for mt in mut_types] + list(hierarchical_masks)
    key_lens = tuple(int(m.shape[-1]) for m in masks)
    padded = [jnp.pad(m.astype(jnp.float32),
                      ((0, 0), (0, 0), (0, LANES - m.shape[-1]))) for m in masks]
    return jnp.stack(padded, axis=0), key_lens


# ---------------------------------------------------------------------------
# Single fused Pallas kernel: entire forward pass, no grid
# ---------------------------------------------------------------------------
def fused_forward_kernel(layout, key_lens, dims, num_heads,
                         w_ref, mask_ref, comp_ref, out_ref):
    B, S, H, n_mut, n_hier = dims

    def ld(name):
        off, r, c = layout[name]          # static Python ints -> static ref slice
        return w_ref[off:off + r, :c].astype(jnp.float32)

    def softmax(s):
        e = jnp.exp(s - jnp.max(s, axis=-1, keepdims=True))
        return e * pl.reciprocal(jnp.sum(e, axis=-1, keepdims=True), approx=True)

    scale = 1.0 / math.sqrt(H // num_heads)

    def block(x, kv, mask, prefix, self_attn):
        """One HierarchicalTransformer block (post-LN: attn -> add&norm -> FFN -> add&norm).

        x   : (B, Sq, H) queries, or (Sq, H) batch-shared queries (first layer)
        kv  : (Sk, H) batch-shared key/value source (cross-attention only)
        mask: (B, Sq, Sk) with 1 = attend, 0 = masked
        """
        batch_shared_q = (x.ndim == 2)
        Sq = x.shape[-2]
        Sk = mask.shape[-1]
        x2 = x if batch_shared_q else x.reshape(B * Sq, H)
        bias = (mask - 1.0) * MASK_NEG    # additive bias, kept in f32

        if self_attn:
            qkv = jnp.dot(x2, ld(prefix + "wqkv"),
                          preferred_element_type=jnp.float32) + ld(prefix + "bqkv")
            q, k, v = qkv[:, :H], qkv[:, H:2 * H], qkv[:, 2 * H:]
            kv_shared = batch_shared_q
        else:
            q = jnp.dot(x2, ld(prefix + "wq"),
                        preferred_element_type=jnp.float32) + ld(prefix + "bq")
            kvp = jnp.dot(kv, ld(prefix + "wkv"),
                          preferred_element_type=jnp.float32) + ld(prefix + "bkv")
            k, v = kvp[:, :H], kvp[:, H:]
            kv_shared = True

        if num_heads == 1:
            if kv_shared:
                s = jnp.dot(q, k.T, preferred_element_type=jnp.float32)
                s = (jnp.broadcast_to(s[None], (B, Sq, Sk)) if batch_shared_q
                     else s.reshape(B, Sq, Sk))
            else:
                s = jnp.einsum("bqd,bkd->bqk", q.reshape(B, Sq, H), k.reshape(B, Sk, H),
                               preferred_element_type=jnp.float32)
            pr = softmax(s * scale + bias)
            if kv_shared:
                attn = jnp.dot(pr.reshape(B * Sq, Sk), v,
                               preferred_element_type=jnp.float32)
            else:
                attn = jnp.einsum("bqk,bkd->bqd", pr, v.reshape(B, Sk, H),
                                  preferred_element_type=jnp.float32).reshape(B * Sq, H)
        else:
            # Generic multi-head fallback (not traced at the configured H=32 -> 1 head).
            dh = H // num_heads
            qb = (jnp.broadcast_to(q[None], (B, Sq, H)) if batch_shared_q
                  else q.reshape(B, Sq, H))
            q4 = qb.reshape(B, Sq, num_heads, dh)
            if kv_shared:
                k4 = k.reshape(Sk, num_heads, dh)
                v4 = v.reshape(Sk, num_heads, dh)
                s = jnp.einsum("bqhd,khd->bhqk", q4, k4, preferred_element_type=jnp.float32)
            else:
                k4 = k.reshape(B, Sk, num_heads, dh)
                v4 = v.reshape(B, Sk, num_heads, dh)
                s = jnp.einsum("bqhd,bkhd->bhqk", q4, k4, preferred_element_type=jnp.float32)
            pr = softmax(s * scale + bias[:, None])
            if kv_shared:
                attn = jnp.einsum("bhqk,khd->bqhd", pr, v4, preferred_element_type=jnp.float32)
            else:
                attn = jnp.einsum("bhqk,bkhd->bqhd", pr, v4, preferred_element_type=jnp.float32)
            attn = attn.reshape(B * Sq, H)

        o = jnp.dot(attn, ld(prefix + "wo"),
                    preferred_element_type=jnp.float32) + ld(prefix + "bo")
        res = o.reshape(B, Sq, H) + x     # broadcasts over batch if x is (Sq, H)
        y = _layernorm(res.reshape(B * Sq, H), ld(prefix + "ln1_g"), ld(prefix + "ln1_b"))
        ff = jnp.maximum(jnp.dot(y, ld(prefix + "w1"),
                                 preferred_element_type=jnp.float32) + ld(prefix + "b1"), 0.0)
        ff = jnp.dot(ff, ld(prefix + "w2"),
                     preferred_element_type=jnp.float32) + ld(prefix + "b2")
        z = _layernorm(y + ff, ld(prefix + "ln2_g"), ld(prefix + "ln2_b"))
        return z.reshape(B, Sq, H)

    # -- mutation-tree cross-attention blocks (queries start batch-invariant) --
    sys_emb = ld("sys_emb")                              # (S, H), shared across batch
    for i in range(n_mut):
        mask = mask_ref[i][:, :, :key_lens[i]]           # (B, S, G)
        sys_emb = block(sys_emb, ld(f"mut{i}/emb"), mask, f"mut{i}/", self_attn=False)

    # -- hierarchical self-attention passes (shared system_tree_conv weights) --
    for j in range(n_hier):
        l = n_mut + j
        mask = mask_ref[l][:, :, :key_lens[l]]           # (B, S, S)
        sys_emb = block(sys_emb, None, mask, "sys/", self_attn=True)

    # -- drug branch: compound_encoder (2-layer ReLU MLP) -> mapper -> norm --
    comp = comp_ref[...].astype(jnp.float32)
    h = jnp.maximum(jnp.dot(comp, ld("cenc/we1"),
                            preferred_element_type=jnp.float32) + ld("cenc/be1"), 0.0)
    h = jnp.maximum(jnp.dot(h, ld("cenc/we2"),
                            preferred_element_type=jnp.float32) + ld("cenc/be2"), 0.0)
    drug = jnp.dot(h, ld("cenc/wm"), preferred_element_type=jnp.float32) + ld("cenc/bm")
    drug = _layernorm(drug, ld("cenc/norm_g"), ld("cenc/norm_b"))          # (B, H)

    # -- drug_response_predictor on the root system embedding --
    root = sys_emb[:, 0, :]                                                 # (B, H)
    pred = jnp.dot(root, ld("pred/w"),
                   preferred_element_type=jnp.float32) + ld("pred/b")      # (B, 1)

    # Lane-dense (B, 128) output slab: [drug_emb | pred | zero pad].
    pad = jnp.zeros((B, LANES - H - 1), jnp.float32)
    out_ref[...] = jnp.concatenate([drug, pred, pad], axis=-1).astype(out_ref.dtype)


# ---------------------------------------------------------------------------
# Wrapper
# ---------------------------------------------------------------------------
def _cost_estimate(wslab, mask_slab, compound, layout, key_lens, dims):
    B, S, H, _, _ = dims
    ffn = layout["sys/w1"][2]
    flops = 0
    for kl in key_lens:
        flops += 2 * B * S * H * (4 * H + 2 * ffn)       # q/k/v/o projections + FFN
        flops += 2 * B * S * kl * 2 * H                  # scores + attn @ V
    cf, h0 = layout["cenc/we1"][1], layout["cenc/we1"][2]
    h1 = layout["cenc/we2"][2]
    flops += 2 * B * (cf * h0 + h0 * h1 + h1 * H + H)
    transcendentals = int(sum(B * S * (kl + 1) for kl in key_lens))
    bytes_accessed = int(wslab.size * wslab.dtype.itemsize
                         + (mask_slab.size + compound.size + B * LANES) * 4)
    return pl.CostEstimate(flops=int(flops), transcendentals=transcendentals,
                           bytes_accessed=bytes_accessed)


def drug_response_forward(wslab, layout, compound, mut_dict, hierarchical_masks,
                          mut_types, num_heads):
    B = compound.shape[0]
    _, S, H = layout["sys_emb"]
    dims = (B, S, H, len(mut_types), len(hierarchical_masks))

    mask_slab, key_lens = _pack_masks(mut_dict, hierarchical_masks, mut_types)
    compound = compound.astype(jnp.float32)

    vmem = pl.BlockSpec(memory_space=pltpu.MemorySpace.VMEM)
    out = pl.pallas_call(
        functools.partial(fused_forward_kernel, layout, key_lens, dims, num_heads),
        in_specs=[vmem, vmem, vmem],
        out_specs=vmem,
        out_shape=jax.ShapeDtypeStruct((B, LANES), jnp.float32),
        cost_estimate=_cost_estimate(wslab, mask_slab, compound, layout, key_lens, dims),
    )(wslab, mask_slab, compound)
    return out[:, H:H + 1], out[:, :H]   # prediction, drug embedding


# ---------------------------------------------------------------------------
# Pure-JAX reference (same math) for a sanity check
# ---------------------------------------------------------------------------
def _block_ref(x, kv, bias, p, num_heads):
    H = x.shape[-1]
    dh = H // num_heads
    q = x @ p["wq"] + p["bq"]
    k = kv @ p["wk"] + p["bk"]
    v = kv @ p["wv"] + p["bv"]
    outs = []
    for h in range(num_heads):
        qh, kh, vh = (t[..., h * dh:(h + 1) * dh] for t in (q, k, v))
        s = jnp.einsum("bqd,bkd->bqk", qh, kh) / math.sqrt(dh) + bias
        p_ = jax.nn.softmax(s, axis=-1)
        outs.append(jnp.einsum("bqk,bkd->bqd", p_, vh))
    attn = jnp.concatenate(outs, -1) @ p["wo"] + p["bo"]
    y = _layernorm(x + attn, p["ln1_g"], p["ln1_b"])
    ff = jnp.maximum(y @ p["w1"] + p["b1"], 0.0) @ p["w2"] + p["b2"]
    return _layernorm(y + ff, p["ln2_g"], p["ln2_b"])


def forward_ref(params, mut_dict, compound, hierarchical_masks, mut_types, num_heads):
    B = compound.shape[0]
    sys_emb = jnp.broadcast_to(params["system_embedding"][None],
                               (B,) + params["system_embedding"].shape)
    for mt in mut_types:
        mut_emb = jnp.broadcast_to(params["mut_embedding"][mt][None],
                                   (B,) + params["mut_embedding"][mt].shape)
        bias = (mut_dict[mt] - 1.0) * MASK_NEG
        sys_emb = _block_ref(sys_emb, mut_emb, bias,
                             params["mut_tree_convs"][mt], num_heads)
    for hm in hierarchical_masks:
        bias = (hm - 1.0) * MASK_NEG
        sys_emb = _block_ref(sys_emb, sys_emb, bias,
                             params["system_tree_conv"], num_heads)
    return sys_emb[:, 0] @ params["predictor"]["w"] + params["predictor"]["b"]


def drug_ref(params, compound):
    ce = params["compound"]
    h = jnp.maximum(compound @ ce["we1"] + ce["be1"], 0.0)
    h = jnp.maximum(h @ ce["we2"] + ce["be2"], 0.0)
    return _layernorm(h @ ce["wm"] + ce["bm"], ce["norm_g"], ce["norm_b"])


# ---------------------------------------------------------------------------
# Main
# ---------------------------------------------------------------------------
if __name__ == "__main__":
    B = 2
    n_systems = 8
    n_genes = 16
    hidden = 32
    num_heads = max(1, hidden // 32)      # int(hidden_dims / 32)
    ffn = hidden * 4
    mut_types = ["mutation", "deletion"]
    comp_feats = 8
    comp_hidden = [16, 16]                # compound_encoder.hidden_layers

    key = jax.random.PRNGKey(0)
    keys = iter(jax.random.split(key, 256))

    def dense(fan_in, fan_out):
        w = jax.random.normal(next(keys), (fan_in, fan_out), jnp.float32) * 0.02
        b = jnp.zeros((1, fan_out), jnp.float32)
        return w, b

    def make_block_params():
        p = {}
        for name in ("q", "k", "v", "o"):
            p["w" + name], p["b" + name] = dense(hidden, hidden)
        p["ln1_g"] = jnp.ones((1, hidden), jnp.float32)
        p["ln1_b"] = jnp.zeros((1, hidden), jnp.float32)
        p["w1"], p["b1"] = dense(hidden, ffn)
        p["w2"], p["b2"] = dense(ffn, hidden)
        p["ln2_g"] = jnp.ones((1, hidden), jnp.float32)
        p["ln2_b"] = jnp.zeros((1, hidden), jnp.float32)
        return p

    params = {
        "system_embedding": jax.random.normal(next(keys), (n_systems, hidden), jnp.float32) * 0.02,
        "mut_embedding": {mt: jax.random.normal(next(keys), (n_genes, hidden), jnp.float32) * 0.02
                          for mt in mut_types},
        "mut_tree_convs": {mt: make_block_params() for mt in mut_types},
        "system_tree_conv": make_block_params(),
    }
    we1, be1 = dense(comp_feats, comp_hidden[0])
    we2, be2 = dense(comp_hidden[0], comp_hidden[1])
    wm, bm = dense(comp_hidden[-1], hidden)
    params["compound"] = {"we1": we1, "be1": be1, "we2": we2, "be2": be2,
                          "wm": wm, "bm": bm,
                          "norm_g": jnp.ones((1, hidden), jnp.float32),
                          "norm_b": jnp.zeros((1, hidden), jnp.float32)}
    pw, pb = dense(hidden, 1)
    params["predictor"] = {"w": pw, "b": pb}

    # One-time parameter preprocessing (hoisted out of the per-call path):
    # fuse K/V + QKV and pack everything into a single lane-dense bf16 slab.
    wslab, layout = pack_params(params, mut_types)

    # Inputs: compound features, per-mutation-type system->gene masks, hierarchical masks.
    compound = jax.random.normal(next(keys), (B, comp_feats), jnp.float32)
    mut_dict = {mt: jax.random.bernoulli(next(keys), 0.5, (B, n_systems, n_genes)).astype(jnp.float32)
                for mt in mut_types}
    hierarchical_masks = [
        jax.random.bernoulli(next(keys), 0.6, (B, n_systems, n_systems)).astype(jnp.float32)
        for _ in range(2)
    ]

    pred, drug_emb = drug_response_forward(wslab, layout, compound, mut_dict,
                                           hierarchical_masks, mut_types, num_heads)
    jax.block_until_ready(pred)
    jax.block_until_ready(drug_emb)

    # Reference uses the same bf16-rounded parameters the kernel consumes.
    params_q = jax.tree_util.tree_map(
        lambda x: x.astype(jnp.bfloat16).astype(jnp.float32), params)
    pred_ref = forward_ref(params_q, mut_dict, compound, hierarchical_masks,
                           mut_types, num_heads)
    drug_emb_ref = drug_ref(params_q, compound)

    assert pred.shape == (B, 1) and drug_emb.shape == (B, hidden)
    assert jnp.allclose(pred, pred_ref, atol=2e-3, rtol=2e-3)
    assert jnp.allclose(drug_emb, drug_emb_ref, atol=2e-3, rtol=2e-3)
    print("KERNEL_OK")
</pallas_src>

<mosaic_0001>
module attributes {stable_mosaic.version = 11 : i64} {
  func.func @fused_forward_kernel(%arg0: memref<1104x128xbf16, #tpu.memory_space<vmem>>, %arg1: memref<4x2x8x128xf32, #tpu.memory_space<vmem>>, %arg2: memref<2x8xf32, #tpu.memory_space<vmem>>, %arg3: memref<2x128xf32, #tpu.memory_space<vmem>>) attributes {dimension_semantics = [], scalar_prefetch = 0 : i64, scratch_operands = 0 : i64, tpu.core_type = #tpu.core_type<tc>} {
    %c0 = arith.constant 0 : index
    %c0_0 = arith.constant 0 : index
    %0 = vector.load %arg0[%c0, %c0_0] : memref<1104x128xbf16, #tpu.memory_space<vmem>>, vector<8x32xbf16>
    %1 = arith.extf %0 : vector<8x32xbf16> to vector<8x32xf32>
    %c0_1 = arith.constant 0 : index
    %c0_2 = arith.constant 0 : index
    %c0_3 = arith.constant 0 : index
    %c0_4 = arith.constant 0 : index
    %2 = vector.load %arg1[%c0_1, %c0_2, %c0_3, %c0_4] : memref<4x2x8x128xf32, #tpu.memory_space<vmem>>, vector<1x2x8x128xf32>
    %3 = vector.shape_cast %2 : vector<1x2x8x128xf32> to vector<2x8x128xf32>
    %4 = vector.extract_strided_slice %3 {offsets = [0, 0, 0], sizes = [2, 8, 16], strides = [1, 1, 1]} : vector<2x8x128xf32> to vector<2x8x16xf32>
    %c8 = arith.constant 8 : index
    %c0_5 = arith.constant 0 : index
    %5 = vector.load %arg0[%c8, %c0_5] : memref<1104x128xbf16, #tpu.memory_space<vmem>>, vector<16x32xbf16>
    %6 = arith.extf %5 : vector<16x32xbf16> to vector<16x32xf32>
    %cst = arith.constant 1.000000e+00 : f32
    %7 = vector.broadcast %cst : f32 to vector<2x8x16xf32>
    %8 = arith.subf %4, %7 : vector<2x8x16xf32>
    %cst_6 = arith.constant 1.000000e+09 : f32
    %9 = vector.broadcast %cst_6 : f32 to vector<2x8x16xf32>
    %10 = arith.mulf %8, %9 : vector<2x8x16xf32>
    %c24 = arith.constant 24 : index
    %c0_7 = arith.constant 0 : index
    %11 = vector.load %arg0[%c24, %c0_7] : memref<1104x128xbf16, #tpu.memory_space<vmem>>, vector<32x32xbf16>
    %12 = arith.extf %11 : vector<32x32xbf16> to vector<32x32xf32>
    %cst_8 = arith.constant dense<0.000000e+00> : vector<8x32xf32>
    %13 = tpu.matmul %1, %12, %cst_8 {dimension_numbers = #tpu.dot_dimension_numbers<[1], [0], [0], [1], [0, 0, 1, 1], [], []>} : vector<8x32xf32>, vector<32x32xf32>, vector<8x32xf32> -> vector<8x32xf32>
    %c56 = arith.constant 56 : index
    %c0_9 = arith.constant 0 : index
    %14 = vector.load %arg0[%c56, %c0_9] : memref<1104x128xbf16, #tpu.memory_space<vmem>>, vector<1x32xbf16>
    %15 = arith.extf %14 : vector<1x32xbf16> to vector<1x32xf32>
    %16 = vector.broadcast %15 : vector<1x32xf32> to vector<8x32xf32>
    %17 = arith.addf %13, %16 : vector<8x32xf32>
    %c64 = arith.constant 64 : index
    %c0_10 = arith.constant 0 : index
    %18 = vector.load %arg0[%c64, %c0_10] : memref<1104x128xbf16, #tpu.memory_space<vmem>>, vector<32x64xbf16>
    %19 = arith.extf %18 : vector<32x64xbf16> to vector<32x64xf32>
    %cst_11 = arith.constant dense<0.000000e+00> : vector<16x64xf32>
    %20 = tpu.matmul %6, %19, %cst_11 {dimension_numbers = #tpu.dot_dimension_numbers<[1], [0], [0], [1], [0, 0, 1, 1], [], []>} : vector<16x32xf32>, vector<32x64xf32>, vector<16x64xf32> -> vector<16x64xf32>
    %c96 = arith.constant 96 : index
    %c0_12 = arith.constant 0 : index
    %21 = vector.load %arg0[%c96, %c0_12] : memref<1104x128xbf16, #tpu.memory_space<vmem>>, vector<1x64xbf16>
    %22 = arith.extf %21 : vector<1x64xbf16> to vector<1x64xf32>
    %23 = vector.broadcast %22 : vector<1x64xf32> to vector<16x64xf32>
    %24 = arith.addf %20, %23 : vector<16x64xf32>
    %25 = vector.extract_strided_slice %24 {offsets = [0, 0], sizes = [16, 32], strides = [1, 1]} : vector<16x64xf32> to vector<16x32xf32>
    %26 = vector.extract_strided_slice %24 {offsets = [0, 32], sizes = [16, 32], strides = [1, 1]} : vector<16x64xf32> to vector<16x32xf32>
    %27 = tpu.transpose %25, [1, 0] : vector<16x32xf32> -> vector<32x16xf32>
    %cst_13 = arith.constant dense<0.000000e+00> : vector<8x16xf32>
    %28 = tpu.matmul %17, %27, %cst_13 {dimension_numbers = #tpu.dot_dimension_numbers<[1], [0], [0], [1], [0, 0, 1, 1], [], []>} : vector<8x32xf32>, vector<32x16xf32>, vector<8x16xf32> -> vector<8x16xf32>
    %29 = vector.shape_cast %28 : vector<8x16xf32> to vector<1x8x16xf32>
    %30 = vector.shape_cast %29 : vector<1x8x16xf32> to vector<1x8x16xf32>
    %31 = vector.broadcast %30 : vector<1x8x16xf32> to vector<2x8x16xf32>
    %cst_14 = arith.constant 0.176776692 : f32
    %32 = vector.broadcast %cst_14 : f32 to vector<2x8x16xf32>
    %33 = arith.mulf %31, %32 : vector<2x8x16xf32>
    %34 = arith.addf %33, %10 : vector<2x8x16xf32>
    %cst_15 = arith.constant dense<0xFF800000> : vector<2x8xf32>
    %35 = vector.multi_reduction <maximumf>, %34, %cst_15 [2] : vector<2x8x16xf32> to vector<2x8xf32>
    %36 = vector.shape_cast %35 : vector<2x8xf32> to vector<2x8x1xf32>
    %37 = vector.broadcast %36 : vector<2x8x1xf32> to vector<2x8x16xf32>
    %38 = arith.subf %34, %37 : vector<2x8x16xf32>
    %39 = math.exp %38 : vector<2x8x16xf32>
    %cst_16 = arith.constant dense<0.000000e+00> : vector<2x8xf32>
    %40 = vector.multi_reduction <add>, %39, %cst_16 [2] : vector<2x8x16xf32> to vector<2x8xf32>
    %41 = vector.shape_cast %40 : vector<2x8xf32> to vector<2x8x1xf32>
    %42 = tpu.reciprocal %41 {approx = true} : vector<2x8x1xf32> -> vector<2x8x1xf32>
    %43 = vector.broadcast %42 : vector<2x8x1xf32> to vector<2x8x16xf32>
    %44 = arith.mulf %39, %43 : vector<2x8x16xf32>
    %45 = vector.shape_cast %44 : vector<2x8x16xf32> to vector<16x16xf32>
    %cst_17 = arith.constant dense<0.000000e+00> : vector<16x32xf32>
    %46 = tpu.matmul %45, %26, %cst_17 {dimension_numbers = #tpu.dot_dimension_numbers<[1], [0], [0], [1], [0, 0, 1, 1], [], []>} : vector<16x16xf32>, vector<16x32xf32>, vector<16x32xf32> -> vector<16x32xf32>
    %c104 = arith.constant 104 : index
    %c0_18 = arith.constant 0 : index
    %47 = vector.load %arg0[%c104, %c0_18] : memref<1104x128xbf16, #tpu.memory_space<vmem>>, vector<32x32xbf16>
    %48 = arith.extf %47 : vector<32x32xbf16> to vector<32x32xf32>
    %cst_19 = arith.constant dense<0.000000e+00> : vector<16x32xf32>
    %49 = tpu.matmul %46, %48, %cst_19 {dimension_numbers = #tpu.dot_dimension_numbers<[1], [0], [0], [1], [0, 0, 1, 1], [], []>} : vector<16x32xf32>, vector<32x32xf32>, vector<16x32xf32> -> vector<16x32xf32>
    %c136 = arith.constant 136 : index
    %c0_20 = arith.constant 0 : index
    %50 = vector.load %arg0[%c136, %c0_20] : memref<1104x128xbf16, #tpu.memory_space<vmem>>, vector<1x32xbf16>
    %51 = arith.extf %50 : vector<1x32xbf16> to vector<1x32xf32>
    %52 = vector.broadcast %51 : vector<1x32xf32> to vector<16x32xf32>
    %53 = arith.addf %49, %52 : vector<16x32xf32>
    %54 = vector.shape_cast %53 : vector<16x32xf32> to vector<2x8x32xf32>
    %55 = vector.shape_cast %1 : vector<8x32xf32> to vector<1x8x32xf32>
    %56 = vector.broadcast %55 : vector<1x8x32xf32> to vector<2x8x32xf32>
    %57 = arith.addf %54, %56 : vector<2x8x32xf32>
    %58 = vector.shape_cast %57 : vector<2x8x32xf32> to vector<16x32xf32>
    %c320 = arith.constant 320 : index
    %c0_21 = arith.constant 0 : index
    %59 = vector.load %arg0[%c320, %c0_21] : memref<1104x128xbf16, #tpu.memory_space<vmem>>, vector<1x32xbf16>
    %60 = arith.extf %59 : vector<1x32xbf16> to vector<1x32xf32>
    %c328 = arith.constant 328 : index
    %c0_22 = arith.constant 0 : index
    %61 = vector.load %arg0[%c328, %c0_22] : memref<1104x128xbf16, #tpu.memory_space<vmem>>, vector<1x32xbf16>
    %62 = arith.extf %61 : vector<1x32xbf16> to vector<1x32xf32>
    %cst_23 = arith.constant dense<0.000000e+00> : vector<16xf32>
    %63 = vector.multi_reduction <add>, %58, %cst_23 [1] : vector<16x32xf32> to vector<16xf32>
    %64 = vector.shape_cast %63 : vector<16xf32> to vector<16x1xf32>
    %cst_24 = arith.constant 3.200000e+01 : f32
    %65 = vector.broadcast %cst_24 : f32 to vector<16x1xf32>
    %66 = arith.divf %64, %65 : vector<16x1xf32>
    %67 = vector.broadcast %66 : vector<16x1xf32> to vector<16x32xf32>
    %68 = arith.subf %58, %67 : vector<16x32xf32>
    %69 = arith.mulf %68, %68 : vector<16x32xf32>
    %cst_25 = arith.constant dense<0.000000e+00> : vector<16xf32>
    %70 = vector.multi_reduction <add>, %69, %cst_25 [1] : vector<16x32xf32> to vector<16xf32>
    %71 = vector.shape_cast %70 : vector<16xf32> to vector<16x1xf32>
    %cst_26 = arith.constant 3.200000e+01 : f32
    %72 = vector.broadcast %cst_26 : f32 to vector<16x1xf32>
    %73 = arith.divf %71, %72 : vector<16x1xf32>
    %74 = vector.broadcast %66 : vector<16x1xf32> to vector<16x32xf32>
    %75 = arith.subf %58, %74 : vector<16x32xf32>
    %cst_27 = arith.constant 9.99999974E-6 : f32
    %76 = vector.broadcast %cst_27 : f32 to vector<16x1xf32>
    %77 = arith.addf %73, %76 : vector<16x1xf32>
    %78 = math.rsqrt %77 : vector<16x1xf32>
    %79 = vector.broadcast %78 : vector<16x1xf32> to vector<16x32xf32>
    %80 = arith.mulf %75, %79 : vector<16x32xf32>
    %81 = vector.broadcast %60 : vector<1x32xf32> to vector<16x32xf32>
    %82 = arith.mulf %80, %81 : vector<16x32xf32>
    %83 = vector.broadcast %62 : vector<1x32xf32> to vector<16x32xf32>
    %84 = arith.addf %82, %83 : vector<16x32xf32>
    %c144 = arith.constant 144 : index
    %c0_28 = arith.constant 0 : index
    %85 = vector.load %arg0[%c144, %c0_28] : memref<1104x128xbf16, #tpu.memory_space<vmem>>, vector<32x128xbf16>
    %86 = arith.extf %85 : vector<32x128xbf16> to vector<32x128xf32>
    %cst_29 = arith.constant dense<0.000000e+00> : vector<16x128xf32>
    %87 = tpu.matmul %84, %86, %cst_29 {dimension_numbers = #tpu.dot_dimension_numbers<[1], [0], [0], [1], [0, 0, 1, 1], [], []>} : vector<16x32xf32>, vector<32x128xf32>, vector<16x128xf32> -> vector<16x128xf32>
    %c176 = arith.constant 176 : index
    %c0_30 = arith.constant 0 : index
    %88 = vector.load %arg0[%c176, %c0_30] : memref<1104x128xbf16, #tpu.memory_space<vmem>>, vector<1x128xbf16>
    %89 = arith.extf %88 : vector<1x128xbf16> to vector<1x128xf32>
    %90 = vector.broadcast %89 : vector<1x128xf32> to vector<16x128xf32>
    %91 = arith.addf %87, %90 : vector<16x128xf32>
    %cst_31 = arith.constant 0.000000e+00 : f32
    %92 = vector.broadcast %cst_31 : f32 to vector<16x128xf32>
    %93 = arith.maximumf %91, %92 : vector<16x128xf32>
    %c184 = arith.constant 184 : index
    %c0_32 = arith.constant 0 : index
    %94 = vector.load %arg0[%c184, %c0_32] : memref<1104x128xbf16, #tpu.memory_space<vmem>>, vector<128x32xbf16>
    %95 = arith.extf %94 : vector<128x32xbf16> to vector<128x32xf32>
    %cst_33 = arith.constant dense<0.000000e+00> : vector<16x32xf32>
    %96 = tpu.matmul %93, %95, %cst_33 {dimension_numbers = #tpu.dot_dimension_numbers<[1], [0], [0], [1], [0, 0, 1, 1], [], []>} : vector<16x128xf32>, vector<128x32xf32>, vector<16x32xf32> -> vector<16x32xf32>
    %c312 = arith.constant 312 : index
    %c0_34 = arith.constant 0 : index
    %97 = vector.load %arg0[%c312, %c0_34] : memref<1104x128xbf16, #tpu.memory_space<vmem>>, vector<1x32xbf16>
    %98 = arith.extf %97 : vector<1x32xbf16> to vector<1x32xf32>
    %99 = vector.broadcast %98 : vector<1x32xf32> to vector<16x32xf32>
    %100 = arith.addf %96, %99 : vector<16x32xf32>
    %101 = arith.addf %84, %100 : vector<16x32xf32>
    %c336 = arith.constant 336 : index
    %c0_35 = arith.constant 0 : index
    %102 = vector.load %arg0[%c336, %c0_35] : memref<1104x128xbf16, #tpu.memory_space<vmem>>, vector<1x32xbf16>
    %103 = arith.extf %102 : vector<1x32xbf16> to vector<1x32xf32>
    %c344 = arith.constant 344 : index
    %c0_36 = arith.constant 0 : index
    %104 = vector.load %arg0[%c344, %c0_36] : memref<1104x128xbf16, #tpu.memory_space<vmem>>, vector<1x32xbf16>
    %105 = arith.extf %104 : vector<1x32xbf16> to vector<1x32xf32>
    %cst_37 = arith.constant dense<0.000000e+00> : vector<16xf32>
    %106 = vector.multi_reduction <add>, %101, %cst_37 [1] : vector<16x32xf32> to vector<16xf32>
    %107 = vector.shape_cast %106 : vector<16xf32> to vector<16x1xf32>
    %cst_38 = arith.constant 3.200000e+01 : f32
    %108 = vector.broadcast %cst_38 : f32 to vector<16x1xf32>
    %109 = arith.divf %107, %108 : vector<16x1xf32>
    %110 = vector.broadcast %109 : vector<16x1xf32> to vector<16x32xf32>
    %111 = arith.subf %101, %110 : vector<16x32xf32>
    %112 = arith.mulf %111, %111 : vector<16x32xf32>
    %cst_39 = arith.constant dense<0.000000e+00> : vector<16xf32>
    %113 = vector.multi_reduction <add>, %112, %cst_39 [1] : vector<16x32xf32> to vector<16xf32>
    %114 = vector.shape_cast %113 : vector<16xf32> to vector<16x1xf32>
    %cst_40 = arith.constant 3.200000e+01 : f32
    %115 = vector.broadcast %cst_40 : f32 to vector<16x1xf32>
    %116 = arith.divf %114, %115 : vector<16x1xf32>
    %117 = vector.broadcast %109 : vector<16x1xf32> to vector<16x32xf32>
    %118 = arith.subf %101, %117 : vector<16x32xf32>
    %cst_41 = arith.constant 9.99999974E-6 : f32
    %119 = vector.broadcast %cst_41 : f32 to vector<16x1xf32>
    %120 = arith.addf %116, %119 : vector<16x1xf32>
    %121 = math.rsqrt %120 : vector<16x1xf32>
    %122 = vector.broadcast %121 : vector<16x1xf32> to vector<16x32xf32>
    %123 = arith.mulf %118, %122 : vector<16x32xf32>
    %124 = vector.broadcast %103 : vector<1x32xf32> to vector<16x32xf32>
    %125 = arith.mulf %123, %124 : vector<16x32xf32>
    %126 = vector.broadcast %105 : vector<1x32xf32> to vector<16x32xf32>
    %127 = arith.addf %125, %126 : vector<16x32xf32>
    %128 = vector.shape_cast %127 : vector<16x32xf32> to vector<2x8x32xf32>
    %c1 = arith.constant 1 : index
    %c0_42 = arith.constant 0 : index
    %c0_43 = arith.constant 0 : index
    %c0_44 = arith.constant 0 : index
    %129 = vector.load %arg1[%c1, %c0_42, %c0_43, %c0_44] : memref<4x2x8x128xf32, #tpu.memory_space<vmem>>, vector<1x2x8x128xf32>
    %130 = vector.shape_cast %129 : vector<1x2x8x128xf32> to vector<2x8x128xf32>
    %131 = vector.extract_strided_slice %130 {offsets = [0, 0, 0], sizes = [2, 8, 16], strides = [1, 1, 1]} : vector<2x8x128xf32> to vector<2x8x16xf32>
    %c352 = arith.constant 352 : index
    %c0_45 = arith.constant 0 : index
    %132 = vector.load %arg0[%c352, %c0_45] : memref<1104x128xbf16, #tpu.memory_space<vmem>>, vector<16x32xbf16>
    %133 = arith.extf %132 : vector<16x32xbf16> to vector<16x32xf32>
    %134 = vector.shape_cast %128 : vector<2x8x32xf32> to vector<16x32xf32>
    %cst_46 = arith.constant 1.000000e+00 : f32
    %135 = vector.broadcast %cst_46 : f32 to vector<2x8x16xf32>
    %136 = arith.subf %131, %135 : vector<2x8x16xf32>
    %cst_47 = arith.constant 1.000000e+09 : f32
    %137 = vector.broadcast %cst_47 : f32 to vector<2x8x16xf32>
    %138 = arith.mulf %136, %137 : vector<2x8x16xf32>
    %c368 = arith.constant 368 : index
    %c0_48 = arith.constant 0 : index
    %139 = vector.load %arg0[%c368, %c0_48] : memref<1104x128xbf16, #tpu.memory_space<vmem>>, vector<32x32xbf16>
    %140 = arith.extf %139 : vector<32x32xbf16> to vector<32x32xf32>
    %cst_49 = arith.constant dense<0.000000e+00> : vector<16x32xf32>
    %141 = tpu.matmul %134, %140, %cst_49 {dimension_numbers = #tpu.dot_dimension_numbers<[1], [0], [0], [1], [0, 0, 1, 1], [], []>} : vector<16x32xf32>, vector<32x32xf32>, vector<16x32xf32> -> vector<16x32xf32>
    %c400 = arith.constant 400 : index
    %c0_50 = arith.constant 0 : index
    %142 = vector.load %arg0[%c400, %c0_50] : memref<1104x128xbf16, #tpu.memory_space<vmem>>, vector<1x32xbf16>
    %143 = arith.extf %142 : vector<1x32xbf16> to vector<1x32xf32>
    %144 = vector.broadcast %143 : vector<1x32xf32> to vector<16x32xf32>
    %145 = arith.addf %141, %144 : vector<16x32xf32>
    %c408 = arith.constant 408 : index
    %c0_51 = arith.constant 0 : index
    %146 = vector.load %arg0[%c408, %c0_51] : memref<1104x128xbf16, #tpu.memory_space<vmem>>, vector<32x64xbf16>
    %147 = arith.extf %146 : vector<32x64xbf16> to vector<32x64xf32>
    %cst_52 = arith.constant dense<0.000000e+00> : vector<16x64xf32>
    %148 = tpu.matmul %133, %147, %cst_52 {dimension_numbers = #tpu.dot_dimension_numbers<[1], [0], [0], [1], [0, 0, 1, 1], [], []>} : vector<16x32xf32>, vector<32x64xf32>, vector<16x64xf32> -> vector<16x64xf32>
    %c440 = arith.constant 440 : index
    %c0_53 = arith.constant 0 : index
    %149 = vector.load %arg0[%c440, %c0_53] : memref<1104x128xbf16, #tpu.memory_space<vmem>>, vector<1x64xbf16>
    %150 = arith.extf %149 : vector<1x64xbf16> to vector<1x64xf32>
    %151 = vector.broadcast %150 : vector<1x64xf32> to vector<16x64xf32>
    %152 = arith.addf %148, %151 : vector<16x64xf32>
    %153 = vector.extract_strided_slice %152 {offsets = [0, 0], sizes = [16, 32], strides = [1, 1]} : vector<16x64xf32> to vector<16x32xf32>
    %154 = vector.extract_strided_slice %152 {offsets = [0, 32], sizes = [16, 32], strides = [1, 1]} : vector<16x64xf32> to vector<16x32xf32>
    %155 = tpu.transpose %153, [1, 0] : vector<16x32xf32> -> vector<32x16xf32>
    %cst_54 = arith.constant dense<0.000000e+00> : vector<16x16xf32>
    %156 = tpu.matmul %145, %155, %cst_54 {dimension_numbers = #tpu.dot_dimension_numbers<[1], [0], [0], [1], [0, 0, 1, 1], [], []>} : vector<16x32xf32>, vector<32x16xf32>, vector<16x16xf32> -> vector<16x16xf32>
    %157 = vector.shape_cast %156 : vector<16x16xf32> to vector<2x8x16xf32>
    %cst_55 = arith.constant 0.176776692 : f32
    %158 = vector.broadcast %cst_55 : f32 to vector<2x8x16xf32>
    %159 = arith.mulf %157, %158 : vector<2x8x16xf32>
    %160 = arith.addf %159, %138 : vector<2x8x16xf32>
    %cst_56 = arith.constant dense<0xFF800000> : vector<2x8xf32>
    %161 = vector.multi_reduction <maximumf>, %160, %cst_56 [2] : vector<2x8x16xf32> to vector<2x8xf32>
    %162 = vector.shape_cast %161 : vector<2x8xf32> to vector<2x8x1xf32>
    %163 = vector.broadcast %162 : vector<2x8x1xf32> to vector<2x8x16xf32>
    %164 = arith.subf %160, %163 : vector<2x8x16xf32>
    %165 = math.exp %164 : vector<2x8x16xf32>
    %cst_57 = arith.constant dense<0.000000e+00> : vector<2x8xf32>
    %166 = vector.multi_reduction <add>, %165, %cst_57 [2] : vector<2x8x16xf32> to vector<2x8xf32>
    %167 = vector.shape_cast %166 : vector<2x8xf32> to vector<2x8x1xf32>
    %168 = tpu.reciprocal %167 {approx = true} : vector<2x8x1xf32> -> vector<2x8x1xf32>
    %169 = vector.broadcast %168 : vector<2x8x1xf32> to vector<2x8x16xf32>
    %170 = arith.mulf %165, %169 : vector<2x8x16xf32>
    %171 = vector.shape_cast %170 : vector<2x8x16xf32> to vector<16x16xf32>
    %cst_58 = arith.constant dense<0.000000e+00> : vector<16x32xf32>
    %172 = tpu.matmul %171, %154, %cst_58 {dimension_numbers = #tpu.dot_dimension_numbers<[1], [0], [0], [1], [0, 0, 1, 1], [], []>} : vector<16x16xf32>, vector<16x32xf32>, vector<16x32xf32> -> vector<16x32xf32>
    %c448 = arith.constant 448 : index
    %c0_59 = arith.constant 0 : index
    %173 = vector.load %arg0[%c448, %c0_59] : memref<1104x128xbf16, #tpu.memory_space<vmem>>, vector<32x32xbf16>
    %174 = arith.extf %173 : vector<32x32xbf16> to vector<32x32xf32>
    %cst_60 = arith.constant dense<0.000000e+00> : vector<16x32xf32>
    %175 = tpu.matmul %172, %174, %cst_60 {dimension_numbers = #tpu.dot_dimension_numbers<[1], [0], [0], [1], [0, 0, 1, 1], [], []>} : vector<16x32xf32>, vector<32x32xf32>, vector<16x32xf32> -> vector<16x32xf32>
    %c480 = arith.constant 480 : index
    %c0_61 = arith.constant 0 : index
    %176 = vector.load %arg0[%c480, %c0_61] : memref<1104x128xbf16, #tpu.memory_space<vmem>>, vector<1x32xbf16>
    %177 = arith.extf %176 : vector<1x32xbf16> to vector<1x32xf32>
    %178 = vector.broadcast %177 : vector<1x32xf32> to vector<16x32xf32>
    %179 = arith.addf %175, %178 : vector<16x32xf32>
    %180 = vector.shape_cast %179 : vector<16x32xf32> to vector<2x8x32xf32>
    %181 = arith.addf %180, %128 : vector<2x8x32xf32>
    %182 = vector.shape_cast %181 : vector<2x8x32xf32> to vector<16x32xf32>
    %c664 = arith.constant 664 : index
    %c0_62 = arith.constant 0 : index
    %183 = vector.load %arg0[%c664, %c0_62] : memref<1104x128xbf16, #tpu.memory_space<vmem>>, vector<1x32xbf16>
    %184 = arith.extf %183 : vector<1x32xbf16> to vector<1x32xf32>
    %c672 = arith.constant 672 : index
    %c0_63 = arith.constant 0 : index
    %185 = vector.load %arg0[%c672, %c0_63] : memref<1104x128xbf16, #tpu.memory_space<vmem>>, vector<1x32xbf16>
    %186 = arith.extf %185 : vector<1x32xbf16> to vector<1x32xf32>
    %cst_64 = arith.constant dense<0.000000e+00> : vector<16xf32>
    %187 = vector.multi_reduction <add>, %182, %cst_64 [1] : vector<16x32xf32> to vector<16xf32>
    %188 = vector.shape_cast %187 : vector<16xf32> to vector<16x1xf32>
    %cst_65 = arith.constant 3.200000e+01 : f32
    %189 = vector.broadcast %cst_65 : f32 to vector<16x1xf32>
    %190 = arith.divf %188, %189 : vector<16x1xf32>
    %191 = vector.broadcast %190 : vector<16x1xf32> to vector<16x32xf32>
    %192 = arith.subf %182, %191 : vector<16x32xf32>
    %193 = arith.mulf %192, %192 : vector<16x32xf32>
    %cst_66 = arith.constant dense<0.000000e+00> : vector<16xf32>
    %194 = vector.multi_reduction <add>, %193, %cst_66 [1] : vector<16x32xf32> to vector<16xf32>
    %195 = vector.shape_cast %194 : vector<16xf32> to vector<16x1xf32>
    %cst_67 = arith.constant 3.200000e+01 : f32
    %196 = vector.broadcast %cst_67 : f32 to vector<16x1xf32>
    %197 = arith.divf %195, %196 : vector<16x1xf32>
    %198 = vector.broadcast %190 : vector<16x1xf32> to vector<16x32xf32>
    %199 = arith.subf %182, %198 : vector<16x32xf32>
    %cst_68 = arith.constant 9.99999974E-6 : f32
    %200 = vector.broadcast %cst_68 : f32 to vector<16x1xf32>
    %201 = arith.addf %197, %200 : vector<16x1xf32>
    %202 = math.rsqrt %201 : vector<16x1xf32>
    %203 = vector.broadcast %202 : vector<16x1xf32> to vector<16x32xf32>
    %204 = arith.mulf %199, %203 : vector<16x32xf32>
    %205 = vector.broadcast %184 : vector<1x32xf32> to vector<16x32xf32>
    %206 = arith.mulf %204, %205 : vector<16x32xf32>
    %207 = vector.broadcast %186 : vector<1x32xf32> to vector<16x32xf32>
    %208 = arith.addf %206, %207 : vector<16x32xf32>
    %c488 = arith.constant 488 : index
    %c0_69 = arith.constant 0 : index
    %209 = vector.load %arg0[%c488, %c0_69] : memref<1104x128xbf16, #tpu.memory_space<vmem>>, vector<32x128xbf16>
    %210 = arith.extf %209 : vector<32x128xbf16> to vector<32x128xf32>
    %cst_70 = arith.constant dense<0.000000e+00> : vector<16x128xf32>
    %211 = tpu.matmul %208, %210, %cst_70 {dimension_numbers = #tpu.dot_dimension_numbers<[1], [0], [0], [1], [0, 0, 1, 1], [], []>} : vector<16x32xf32>, vector<32x128xf32>, vector<16x128xf32> -> vector<16x128xf32>
    %c520 = arith.constant 520 : index
    %c0_71 = arith.constant 0 : index
    %212 = vector.load %arg0[%c520, %c0_71] : memref<1104x128xbf16, #tpu.memory_space<vmem>>, vector<1x128xbf16>
    %213 = arith.extf %212 : vector<1x128xbf16> to vector<1x128xf32>
    %214 = vector.broadcast %213 : vector<1x128xf32> to vector<16x128xf32>
    %215 = arith.addf %211, %214 : vector<16x128xf32>
    %cst_72 = arith.constant 0.000000e+00 : f32
    %216 = vector.broadcast %cst_72 : f32 to vector<16x128xf32>
    %217 = arith.maximumf %215, %216 : vector<16x128xf32>
    %c528 = arith.constant 528 : index
    %c0_73 = arith.constant 0 : index
    %218 = vector.load %arg0[%c528, %c0_73] : memref<1104x128xbf16, #tpu.memory_space<vmem>>, vector<128x32xbf16>
    %219 = arith.extf %218 : vector<128x32xbf16> to vector<128x32xf32>
    %cst_74 = arith.constant dense<0.000000e+00> : vector<16x32xf32>
    %220 = tpu.matmul %217, %219, %cst_74 {dimension_numbers = #tpu.dot_dimension_numbers<[1], [0], [0], [1], [0, 0, 1, 1], [], []>} : vector<16x128xf32>, vector<128x32xf32>, vector<16x32xf32> -> vector<16x32xf32>
    %c656 = arith.constant 656 : index
    %c0_75 = arith.constant 0 : index
    %221 = vector.load %arg0[%c656, %c0_75] : memref<1104x128xbf16, #tpu.memory_space<vmem>>, vector<1x32xbf16>
    %222 = arith.extf %221 : vector<1x32xbf16> to vector<1x32xf32>
    %223 = vector.broadcast %222 : vector<1x32xf32> to vector<16x32xf32>
    %224 = arith.addf %220, %223 : vector<16x32xf32>
    %225 = arith.addf %208, %224 : vector<16x32xf32>
    %c680 = arith.constant 680 : index
    %c0_76 = arith.constant 0 : index
    %226 = vector.load %arg0[%c680, %c0_76] : memref<1104x128xbf16, #tpu.memory_space<vmem>>, vector<1x32xbf16>
    %227 = arith.extf %226 : vector<1x32xbf16> to vector<1x32xf32>
    %c688 = arith.constant 688 : index
    %c0_77 = arith.constant 0 : index
    %228 = vector.load %arg0[%c688, %c0_77] : memref<1104x128xbf16, #tpu.memory_space<vmem>>, vector<1x32xbf16>
    %229 = arith.extf %228 : vector<1x32xbf16> to vector<1x32xf32>
    %cst_78 = arith.constant dense<0.000000e+00> : vector<16xf32>
    %230 = vector.multi_reduction <add>, %225, %cst_78 [1] : vector<16x32xf32> to vector<16xf32>
    %231 = vector.shape_cast %230 : vector<16xf32> to vector<16x1xf32>
    %cst_79 = arith.constant 3.200000e+01 : f32
    %232 = vector.broadcast %cst_79 : f32 to vector<16x1xf32>
    %233 = arith.divf %231, %232 : vector<16x1xf32>
    %234 = vector.broadcast %233 : vector<16x1xf32> to vector<16x32xf32>
    %235 = arith.subf %225, %234 : vector<16x32xf32>
    %236 = arith.mulf %235, %235 : vector<16x32xf32>
    %cst_80 = arith.constant dense<0.000000e+00> : vector<16xf32>
    %237 = vector.multi_reduction <add>, %236, %cst_80 [1] : vector<16x32xf32> to vector<16xf32>
    %238 = vector.shape_cast %237 : vector<16xf32> to vector<16x1xf32>
    %cst_81 = arith.constant 3.200000e+01 : f32
    %239 = vector.broadcast %cst_81 : f32 to vector<16x1xf32>
    %240 = arith.divf %238, %239 : vector<16x1xf32>
    %241 = vector.broadcast %233 : vector<16x1xf32> to vector<16x32xf32>
    %242 = arith.subf %225, %241 : vector<16x32xf32>
    %cst_82 = arith.constant 9.99999974E-6 : f32
    %243 = vector.broadcast %cst_82 : f32 to vector<16x1xf32>
    %244 = arith.addf %240, %243 : vector<16x1xf32>
    %245 = math.rsqrt %244 : vector<16x1xf32>
    %246 = vector.broadcast %245 : vector<16x1xf32> to vector<16x32xf32>
    %247 = arith.mulf %242, %246 : vector<16x32xf32>
    %248 = vector.broadcast %227 : vector<1x32xf32> to vector<16x32xf32>
    %249 = arith.mulf %247, %248 : vector<16x32xf32>
    %250 = vector.broadcast %229 : vector<1x32xf32> to vector<16x32xf32>
    %251 = arith.addf %249, %250 : vector<16x32xf32>
    %252 = vector.shape_cast %251 : vector<16x32xf32> to vector<2x8x32xf32>
    %c2 = arith.constant 2 : index
    %c0_83 = arith.constant 0 : index
    %c0_84 = arith.constant 0 : index
    %c0_85 = arith.constant 0 : index
    %253 = vector.load %arg1[%c2, %c0_83, %c0_84, %c0_85] : memref<4x2x8x128xf32, #tpu.memory_space<vmem>>, vector<1x2x8x128xf32>
    %254 = vector.shape_cast %253 : vector<1x2x8x128xf32> to vector<2x8x128xf32>
    %255 = vector.extract_strided_slice %254 {offsets = [0, 0, 0], sizes = [2, 8, 8], strides = [1, 1, 1]} : vector<2x8x128xf32> to vector<2x8x8xf32>
    %256 = vector.shape_cast %252 : vector<2x8x32xf32> to vector<16x32xf32>
    %cst_86 = arith.constant 1.000000e+00 : f32
    %257 = vector.broadcast %cst_86 : f32 to vector<2x8x8xf32>
    %258 = arith.subf %255, %257 : vector<2x8x8xf32>
    %cst_87 = arith.constant 1.000000e+09 : f32
    %259 = vector.broadcast %cst_87 : f32 to vector<2x8x8xf32>
    %260 = arith.mulf %258, %259 : vector<2x8x8xf32>
    %c696 = arith.constant 696 : index
    %c0_88 = arith.constant 0 : index
    %261 = vector.load %arg0[%c696, %c0_88] : memref<1104x128xbf16, #tpu.memory_space<vmem>>, vector<32x96xbf16>
    %262 = arith.extf %261 : vector<32x96xbf16> to vector<32x96xf32>
    %cst_89 = arith.constant dense<0.000000e+00> : vector<16x96xf32>
    %263 = tpu.matmul %256, %262, %cst_89 {dimension_numbers = #tpu.dot_dimension_numbers<[1], [0], [0], [1], [0, 0, 1, 1], [], []>} : vector<16x32xf32>, vector<32x96xf32>, vector<16x96xf32> -> vector<16x96xf32>
    %c728 = arith.constant 728 : index
    %c0_90 = arith.constant 0 : index
    %264 = vector.load %arg0[%c728, %c0_90] : memref<1104x128xbf16, #tpu.memory_space<vmem>>, vector<1x96xbf16>
    %265 = arith.extf %264 : vector<1x96xbf16> to vector<1x96xf32>
    %266 = vector.broadcast %265 : vector<1x96xf32> to vector<16x96xf32>
    %267 = arith.addf %263, %266 : vector<16x96xf32>
    %268 = vector.extract_strided_slice %267 {offsets = [0, 0], sizes = [16, 32], strides = [1, 1]} : vector<16x96xf32> to vector<16x32xf32>
    %269 = vector.extract_strided_slice %267 {offsets = [0, 32], sizes = [16, 32], strides = [1, 1]} : vector<16x96xf32> to vector<16x32xf32>
    %270 = vector.extract_strided_slice %267 {offsets = [0, 64], sizes = [16, 32], strides = [1, 1]} : vector<16x96xf32> to vector<16x32xf32>
    %271 = vector.shape_cast %268 : vector<16x32xf32> to vector<2x8x32xf32>
    %272 = vector.shape_cast %269 : vector<16x32xf32> to vector<2x8x32xf32>
    "tpu.trace_start"() <{level = 10 : i32, message = "bqd,bkd->bqk"}> : () -> ()
    %cst_91 = arith.constant dense<0.000000e+00> : vector<2x8x8xf32>
    %273 = tpu.matmul %271, %272, %cst_91 {dimension_numbers = #tpu.dot_dimension_numbers<[2], [2], [1], [1], [0, 0, 0, 1, 1, 1], [0], [0]>} : vector<2x8x32xf32>, vector<2x8x32xf32>, vector<2x8x8xf32> -> vector<2x8x8xf32>
    "tpu.trace_stop"() : () -> ()
    %cst_92 = arith.constant 0.176776692 : f32
    %274 = vector.broadcast %cst_92 : f32 to vector<2x8x8xf32>
    %275 = arith.mulf %273, %274 : vector<2x8x8xf32>
    %276 = arith.addf %275, %260 : vector<2x8x8xf32>
    %cst_93 = arith.constant dense<0xFF800000> : vector<2x8xf32>
    %277 = vector.multi_reduction <maximumf>, %276, %cst_93 [2] : vector<2x8x8xf32> to vector<2x8xf32>
    %278 = vector.shape_cast %277 : vector<2x8xf32> to vector<2x8x1xf32>
    %279 = vector.broadcast %278 : vector<2x8x1xf32> to vector<2x8x8xf32>
    %280 = arith.subf %276, %279 : vector<2x8x8xf32>
    %281 = math.exp %280 : vector<2x8x8xf32>
    %cst_94 = arith.constant dense<0.000000e+00> : vector<2x8xf32>
    %282 = vector.multi_reduction <add>, %281, %cst_94 [2] : vector<2x8x8xf32> to vector<2x8xf32>
    %283 = vector.shape_cast %282 : vector<2x8xf32> to vector<2x8x1xf32>
    %284 = tpu.reciprocal %283 {approx = true} : vector<2x8x1xf32> -> vector<2x8x1xf32>
    %285 = vector.broadcast %284 : vector<2x8x1xf32> to vector<2x8x8xf32>
    %286 = arith.mulf %281, %285 : vector<2x8x8xf32>
    %287 = vector.shape_cast %270 : vector<16x32xf32> to vector<2x8x32xf32>
    "tpu.trace_start"() <{level = 10 : i32, message = "bqk,bkd->bqd"}> : () -> ()
    %cst_95 = arith.constant dense<0.000000e+00> : vector<2x8x32xf32>
    %288 = tpu.matmul %286, %287, %cst_95 {dimension_numbers = #tpu.dot_dimension_numbers<[2], [1], [1], [2], [0, 0, 0, 1, 1, 2], [0], [0]>} : vector<2x8x8xf32>, vector<2x8x32xf32>, vector<2x8x32xf32> -> vector<2x8x32xf32>
    "tpu.trace_stop"() : () -> ()
    %289 = vector.shape_cast %288 : vector<2x8x32xf32> to vector<16x32xf32>
    %c736 = arith.constant 736 : index
    %c0_96 = arith.constant 0 : index
    %290 = vector.load %arg0[%c736, %c0_96] : memref<1104x128xbf16, #tpu.memory_space<vmem>>, vector<32x32xbf16>
    %291 = arith.extf %290 : vector<32x32xbf16> to vector<32x32xf32>
    %cst_97 = arith.constant dense<0.000000e+00> : vector<16x32xf32>
    %292 = tpu.matmul %289, %291, %cst_97 {dimension_numbers = #tpu.dot_dimension_numbers<[1], [0], [0], [1], [0, 0, 1, 1], [], []>} : vector<16x32xf32>, vector<32x32xf32>, vector<16x32xf32> -> vector<16x32xf32>
    %c768 = arith.constant 768 : index
    %c0_98 = arith.constant 0 : index
    %293 = vector.load %arg0[%c768, %c0_98] : memref<1104x128xbf16, #tpu.memory_space<vmem>>, vector<1x32xbf16>
    %294 = arith.extf %293 : vector<1x32xbf16> to vector<1x32xf32>
    %295 = vector.broadcast %294 : vector<1x32xf32> to vector<16x32xf32>
    %296 = arith.addf %292, %295 : vector<16x32xf32>
    %297 = vector.shape_cast %296 : vector<16x32xf32> to vector<2x8x32xf32>
    %298 = arith.addf %297, %252 : vector<2x8x32xf32>
    %299 = vector.shape_cast %298 : vector<2x8x32xf32> to vector<16x32xf32>
    %c952 = arith.constant 952 : index
    %c0_99 = arith.constant 0 : index
    %300 = vector.load %arg0[%c952, %c0_99] : memref<1104x128xbf16, #tpu.memory_space<vmem>>, vector<1x32xbf16>
    %301 = arith.extf %300 : vector<1x32xbf16> to vector<1x32xf32>
    %c960 = arith.constant 960 : index
    %c0_100 = arith.constant 0 : index
    %302 = vector.load %arg0[%c960, %c0_100] : memref<1104x128xbf16, #tpu.memory_space<vmem>>, vector<1x32xbf16>
    %303 = arith.extf %302 : vector<1x32xbf16> to vector<1x32xf32>
    %cst_101 = arith.constant dense<0.000000e+00> : vector<16xf32>
    %304 = vector.multi_reduction <add>, %299, %cst_101 [1] : vector<16x32xf32> to vector<16xf32>
    %305 = vector.shape_cast %304 : vector<16xf32> to vector<16x1xf32>
    %cst_102 = arith.constant 3.200000e+01 : f32
    %306 = vector.broadcast %cst_102 : f32 to vector<16x1xf32>
    %307 = arith.divf %305, %306 : vector<16x1xf32>
    %308 = vector.broadcast %307 : vector<16x1xf32> to vector<16x32xf32>
    %309 = arith.subf %299, %308 : vector<16x32xf32>
    %310 = arith.mulf %309, %309 : vector<16x32xf32>
    %cst_103 = arith.constant dense<0.000000e+00> : vector<16xf32>
    %311 = vector.multi_reduction <add>, %310, %cst_103 [1] : vector<16x32xf32> to vector<16xf32>
    %312 = vector.shape_cast %311 : vector<16xf32> to vector<16x1xf32>
    %cst_104 = arith.constant 3.200000e+01 : f32
    %313 = vector.broadcast %cst_104 : f32 to vector<16x1xf32>
    %314 = arith.divf %312, %313 : vector<16x1xf32>
    %315 = vector.broadcast %307 : vector<16x1xf32> to vector<16x32xf32>
    %316 = arith.subf %299, %315 : vector<16x32xf32>
    %cst_105 = arith.constant 9.99999974E-6 : f32
    %317 = vector.broadcast %cst_105 : f32 to vector<16x1xf32>
    %318 = arith.addf %314, %317 : vector<16x1xf32>
    %319 = math.rsqrt %318 : vector<16x1xf32>
    %320 = vector.broadcast %319 : vector<16x1xf32> to vector<16x32xf32>
    %321 = arith.mulf %316, %320 : vector<16x32xf32>
    %322 = vector.broadcast %301 : vector<1x32xf32> to vector<16x32xf32>
    %323 = arith.mulf %321, %322 : vector<16x32xf32>
    %324 = vector.broadcast %303 : vector<1x32xf32> to vector<16x32xf32>
    %325 = arith.addf %323, %324 : vector<16x32xf32>
    %c776 = arith.constant 776 : index
    %c0_106 = arith.constant 0 : index
    %326 = vector.load %arg0[%c776, %c0_106] : memref<1104x128xbf16, #tpu.memory_space<vmem>>, vector<32x128xbf16>
    %327 = arith.extf %326 : vector<32x128xbf16> to vector<32x128xf32>
    %cst_107 = arith.constant dense<0.000000e+00> : vector<16x128xf32>
    %328 = tpu.matmul %325, %327, %cst_107 {dimension_numbers = #tpu.dot_dimension_numbers<[1], [0], [0], [1], [0, 0, 1, 1], [], []>} : vector<16x32xf32>, vector<32x128xf32>, vector<16x128xf32> -> vector<16x128xf32>
    %c808 = arith.constant 808 : index
    %c0_108 = arith.constant 0 : index
    %329 = vector.load %arg0[%c808, %c0_108] : memref<1104x128xbf16, #tpu.memory_space<vmem>>, vector<1x128xbf16>
    %330 = arith.extf %329 : vector<1x128xbf16> to vector<1x128xf32>
    %331 = vector.broadcast %330 : vector<1x128xf32> to vector<16x128xf32>
    %332 = arith.addf %328, %331 : vector<16x128xf32>
    %cst_109 = arith.constant 0.000000e+00 : f32
    %333 = vector.broadcast %cst_109 : f32 to vector<16x128xf32>
    %334 = arith.maximumf %332, %333 : vector<16x128xf32>
    %c816 = arith.constant 816 : index
    %c0_110 = arith.constant 0 : index
    %335 = vector.load %arg0[%c816, %c0_110] : memref<1104x128xbf16, #tpu.memory_space<vmem>>, vector<128x32xbf16>
    %336 = arith.extf %335 : vector<128x32xbf16> to vector<128x32xf32>
    %cst_111 = arith.constant dense<0.000000e+00> : vector<16x32xf32>
    %337 = tpu.matmul %334, %336, %cst_111 {dimension_numbers = #tpu.dot_dimension_numbers<[1], [0], [0], [1], [0, 0, 1, 1], [], []>} : vector<16x128xf32>, vector<128x32xf32>, vector<16x32xf32> -> vector<16x32xf32>
    %c944 = arith.constant 944 : index
    %c0_112 = arith.constant 0 : index
    %338 = vector.load %arg0[%c944, %c0_112] : memref<1104x128xbf16, #tpu.memory_space<vmem>>, vector<1x32xbf16>
    %339 = arith.extf %338 : vector<1x32xbf16> to vector<1x32xf32>
    %340 = vector.broadcast %339 : vector<1x32xf32> to vector<16x32xf32>
    %341 = arith.addf %337, %340 : vector<16x32xf32>
    %342 = arith.addf %325, %341 : vector<16x32xf32>
    %c968 = arith.constant 968 : index
    %c0_113 = arith.constant 0 : index
    %343 = vector.load %arg0[%c968, %c0_113] : memref<1104x128xbf16, #tpu.memory_space<vmem>>, vector<1x32xbf16>
    %344 = arith.extf %343 : vector<1x32xbf16> to vector<1x32xf32>
    %c976 = arith.constant 976 : index
    %c0_114 = arith.constant 0 : index
    %345 = vector.load %arg0[%c976, %c0_114] : memref<1104x128xbf16, #tpu.memory_space<vmem>>, vector<1x32xbf16>
    %346 = arith.extf %345 : vector<1x32xbf16> to vector<1x32xf32>
    %cst_115 = arith.constant dense<0.000000e+00> : vector<16xf32>
    %347 = vector.multi_reduction <add>, %342, %cst_115 [1] : vector<16x32xf32> to vector<16xf32>
    %348 = vector.shape_cast %347 : vector<16xf32> to vector<16x1xf32>
    %cst_116 = arith.constant 3.200000e+01 : f32
    %349 = vector.broadcast %cst_116 : f32 to vector<16x1xf32>
    %350 = arith.divf %348, %349 : vector<16x1xf32>
    %351 = vector.broadcast %350 : vector<16x1xf32> to vector<16x32xf32>
    %352 = arith.subf %342, %351 : vector<16x32xf32>
    %353 = arith.mulf %352, %352 : vector<16x32xf32>
    %cst_117 = arith.constant dense<0.000000e+00> : vector<16xf32>
    %354 = vector.multi_reduction <add>, %353, %cst_117 [1] : vector<16x32xf32> to vector<16xf32>
    %355 = vector.shape_cast %354 : vector<16xf32> to vector<16x1xf32>
    %cst_118 = arith.constant 3.200000e+01 : f32
    %356 = vector.broadcast %cst_118 : f32 to vector<16x1xf32>
    %357 = arith.divf %355, %356 : vector<16x1xf32>
    %358 = vector.broadcast %350 : vector<16x1xf32> to vector<16x32xf32>
    %359 = arith.subf %342, %358 : vector<16x32xf32>
    %cst_119 = arith.constant 9.99999974E-6 : f32
    %360 = vector.broadcast %cst_119 : f32 to vector<16x1xf32>
    %361 = arith.addf %357, %360 : vector<16x1xf32>
    %362 = math.rsqrt %361 : vector<16x1xf32>
    %363 = vector.broadcast %362 : vector<16x1xf32> to vector<16x32xf32>
    %364 = arith.mulf %359, %363 : vector<16x32xf32>
    %365 = vector.broadcast %344 : vector<1x32xf32> to vector<16x32xf32>
    %366 = arith.mulf %364, %365 : vector<16x32xf32>
    %367 = vector.broadcast %346 : vector<1x32xf32> to vector<16x32xf32>
    %368 = arith.addf %366, %367 : vector<16x32xf32>
    %369 = vector.shape_cast %368 : vector<16x32xf32> to vector<2x8x32xf32>
    %c3 = arith.constant 3 : index
    %c0_120 = arith.constant 0 : index
    %c0_121 = arith.constant 0 : index
    %c0_122 = arith.constant 0 : index
    %370 = vector.load %arg1[%c3, %c0_120, %c0_121, %c0_122] : memref<4x2x8x128xf32, #tpu.memory_space<vmem>>, vector<1x2x8x128xf32>
    %371 = vector.shape_cast %370 : vector<1x2x8x128xf32> to vector<2x8x128xf32>
    %372 = vector.extract_strided_slice %371 {offsets = [0, 0, 0], sizes = [2, 8, 8], strides = [1, 1, 1]} : vector<2x8x128xf32> to vector<2x8x8xf32>
    %373 = vector.shape_cast %369 : vector<2x8x32xf32> to vector<16x32xf32>
    %cst_123 = arith.constant 1.000000e+00 : f32
    %374 = vector.broadcast %cst_123 : f32 to vector<2x8x8xf32>
    %375 = arith.subf %372, %374 : vector<2x8x8xf32>
    %cst_124 = arith.constant 1.000000e+09 : f32
    %376 = vector.broadcast %cst_124 : f32 to vector<2x8x8xf32>
    %377 = arith.mulf %375, %376 : vector<2x8x8xf32>
    %c696_125 = arith.constant 696 : index
    %c0_126 = arith.constant 0 : index
    %378 = vector.load %arg0[%c696_125, %c0_126] : memref<1104x128xbf16, #tpu.memory_space<vmem>>, vector<32x96xbf16>
    %379 = arith.extf %378 : vector<32x96xbf16> to vector<32x96xf32>
    %cst_127 = arith.constant dense<0.000000e+00> : vector<16x96xf32>
    %380 = tpu.matmul %373, %379, %cst_127 {dimension_numbers = #tpu.dot_dimension_numbers<[1], [0], [0], [1], [0, 0, 1, 1], [], []>} : vector<16x32xf32>, vector<32x96xf32>, vector<16x96xf32> -> vector<16x96xf32>
    %c728_128 = arith.constant 728 : index
    %c0_129 = arith.constant 0 : index
    %381 = vector.load %arg0[%c728_128, %c0_129] : memref<1104x128xbf16, #tpu.memory_space<vmem>>, vector<1x96xbf16>
    %382 = arith.extf %381 : vector<1x96xbf16> to vector<1x96xf32>
    %383 = vector.broadcast %382 : vector<1x96xf32> to vector<16x96xf32>
    %384 = arith.addf %380, %383 : vector<16x96xf32>
    %385 = vector.extract_strided_slice %384 {offsets = [0, 0], sizes = [16, 32], strides = [1, 1]} : vector<16x96xf32> to vector<16x32xf32>
    %386 = vector.extract_strided_slice %384 {offsets = [0, 32], sizes = [16, 32], strides = [1, 1]} : vector<16x96xf32> to vector<16x32xf32>
    %387 = vector.extract_strided_slice %384 {offsets = [0, 64], sizes = [16, 32], strides = [1, 1]} : vector<16x96xf32> to vector<16x32xf32>
    %388 = vector.shape_cast %385 : vector<16x32xf32> to vector<2x8x32xf32>
    %389 = vector.shape_cast %386 : vector<16x32xf32> to vector<2x8x32xf32>
    "tpu.trace_start"() <{level = 10 : i32, message = "bqd,bkd->bqk"}> : () -> ()
    %cst_130 = arith.constant dense<0.000000e+00> : vector<2x8x8xf32>
    %390 = tpu.matmul %388, %389, %cst_130 {dimension_numbers = #tpu.dot_dimension_numbers<[2], [2], [1], [1], [0, 0, 0, 1, 1, 1], [0], [0]>} : vector<2x8x32xf32>, vector<2x8x32xf32>, vector<2x8x8xf32> -> vector<2x8x8xf32>
    "tpu.trace_stop"() : () -> ()
    %cst_131 = arith.constant 0.176776692 : f32
    %391 = vector.broadcast %cst_131 : f32 to vector<2x8x8xf32>
    %392 = arith.mulf %390, %391 : vector<2x8x8xf32>
    %393 = arith.addf %392, %377 : vector<2x8x8xf32>
    %cst_132 = arith.constant dense<0xFF800000> : vector<2x8xf32>
    %394 = vector.multi_reduction <maximumf>, %393, %cst_132 [2] : vector<2x8x8xf32> to vector<2x8xf32>
    %395 = vector.shape_cast %394 : vector<2x8xf32> to vector<2x8x1xf32>
    %396 = vector.broadcast %395 : vector<2x8x1xf32> to vector<2x8x8xf32>
    %397 = arith.subf %393, %396 : vector<2x8x8xf32>
    %398 = math.exp %397 : vector<2x8x8xf32>
    %cst_133 = arith.constant dense<0.000000e+00> : vector<2x8xf32>
    %399 = vector.multi_reduction <add>, %398, %cst_133 [2] : vector<2x8x8xf32> to vector<2x8xf32>
    %400 = vector.shape_cast %399 : vector<2x8xf32> to vector<2x8x1xf32>
    %401 = tpu.reciprocal %400 {approx = true} : vector<2x8x1xf32> -> vector<2x8x1xf32>
    %402 = vector.broadcast %401 : vector<2x8x1xf32> to vector<2x8x8xf32>
    %403 = arith.mulf %398, %402 : vector<2x8x8xf32>
    %404 = vector.shape_cast %387 : vector<16x32xf32> to vector<2x8x32xf32>
    "tpu.trace_start"() <{level = 10 : i32, message = "bqk,bkd->bqd"}> : () -> ()
    %cst_134 = arith.constant dense<0.000000e+00> : vector<2x8x32xf32>
    %405 = tpu.matmul %403, %404, %cst_134 {dimension_numbers = #tpu.dot_dimension_numbers<[2], [1], [1], [2], [0, 0, 0, 1, 1, 2], [0], [0]>} : vector<2x8x8xf32>, vector<2x8x32xf32>, vector<2x8x32xf32> -> vector<2x8x32xf32>
    "tpu.trace_stop"() : () -> ()
    %406 = vector.shape_cast %405 : vector<2x8x32xf32> to vector<16x32xf32>
    %c736_135 = arith.constant 736 : index
    %c0_136 = arith.constant 0 : index
    %407 = vector.load %arg0[%c736_135, %c0_136] : memref<1104x128xbf16, #tpu.memory_space<vmem>>, vector<32x32xbf16>
    %408 = arith.extf %407 : vector<32x32xbf16> to vector<32x32xf32>
    %cst_137 = arith.constant dense<0.000000e+00> : vector<16x32xf32>
    %409 = tpu.matmul %406, %408, %cst_137 {dimension_numbers = #tpu.dot_dimension_numbers<[1], [0], [0], [1], [0, 0, 1, 1], [], []>} : vector<16x32xf32>, vector<32x32xf32>, vector<16x32xf32> -> vector<16x32xf32>
    %c768_138 = arith.constant 768 : index
    %c0_139 = arith.constant 0 : index
    %410 = vector.load %arg0[%c768_138, %c0_139] : memref<1104x128xbf16, #tpu.memory_space<vmem>>, vector<1x32xbf16>
    %411 = arith.extf %410 : vector<1x32xbf16> to vector<1x32xf32>
    %412 = vector.broadcast %411 : vector<1x32xf32> to vector<16x32xf32>
    %413 = arith.addf %409, %412 : vector<16x32xf32>
    %414 = vector.shape_cast %413 : vector<16x32xf32> to vector<2x8x32xf32>
    %415 = arith.addf %414, %369 : vector<2x8x32xf32>
    %416 = vector.shape_cast %415 : vector<2x8x32xf32> to vector<16x32xf32>
    %c952_140 = arith.constant 952 : index
    %c0_141 = arith.constant 0 : index
    %417 = vector.load %arg0[%c952_140, %c0_141] : memref<1104x128xbf16, #tpu.memory_space<vmem>>, vector<1x32xbf16>
    %418 = arith.extf %417 : vector<1x32xbf16> to vector<1x32xf32>
    %c960_142 = arith.constant 960 : index
    %c0_143 = arith.constant 0 : index
    %419 = vector.load %arg0[%c960_142, %c0_143] : memref<1104x128xbf16, #tpu.memory_space<vmem>>, vector<1x32xbf16>
    %420 = arith.extf %419 : vector<1x32xbf16> to vector<1x32xf32>
    %cst_144 = arith.constant dense<0.000000e+00> : vector<16xf32>
    %421 = vector.multi_reduction <add>, %416, %cst_144 [1] : vector<16x32xf32> to vector<16xf32>
    %422 = vector.shape_cast %421 : vector<16xf32> to vector<16x1xf32>
    %cst_145 = arith.constant 3.200000e+01 : f32
    %423 = vector.broadcast %cst_145 : f32 to vector<16x1xf32>
    %424 = arith.divf %422, %423 : vector<16x1xf32>
    %425 = vector.broadcast %424 : vector<16x1xf32> to vector<16x32xf32>
    %426 = arith.subf %416, %425 : vector<16x32xf32>
    %427 = arith.mulf %426, %426 : vector<16x32xf32>
    %cst_146 = arith.constant dense<0.000000e+00> : vector<16xf32>
    %428 = vector.multi_reduction <add>, %427, %cst_146 [1] : vector<16x32xf32> to vector<16xf32>
    %429 = vector.shape_cast %428 : vector<16xf32> to vector<16x1xf32>
    %cst_147 = arith.constant 3.200000e+01 : f32
    %430 = vector.broadcast %cst_147 : f32 to vector<16x1xf32>
    %431 = arith.divf %429, %430 : vector<16x1xf32>
    %432 = vector.broadcast %424 : vector<16x1xf32> to vector<16x32xf32>
    %433 = arith.subf %416, %432 : vector<16x32xf32>
    %cst_148 = arith.constant 9.99999974E-6 : f32
    %434 = vector.broadcast %cst_148 : f32 to vector<16x1xf32>
    %435 = arith.addf %431, %434 : vector<16x1xf32>
    %436 = math.rsqrt %435 : vector<16x1xf32>
    %437 = vector.broadcast %436 : vector<16x1xf32> to vector<16x32xf32>
    %438 = arith.mulf %433, %437 : vector<16x32xf32>
    %439 = vector.broadcast %418 : vector<1x32xf32> to vector<16x32xf32>
    %440 = arith.mulf %438, %439 : vector<16x32xf32>
    %441 = vector.broadcast %420 : vector<1x32xf32> to vector<16x32xf32>
    %442 = arith.addf %440, %441 : vector<16x32xf32>
    %c776_149 = arith.constant 776 : index
    %c0_150 = arith.constant 0 : index
    %443 = vector.load %arg0[%c776_149, %c0_150] : memref<1104x128xbf16, #tpu.memory_space<vmem>>, vector<32x128xbf16>
    %444 = arith.extf %443 : vector<32x128xbf16> to vector<32x128xf32>
    %cst_151 = arith.constant dense<0.000000e+00> : vector<16x128xf32>
    %445 = tpu.matmul %442, %444, %cst_151 {dimension_numbers = #tpu.dot_dimension_numbers<[1], [0], [0], [1], [0, 0, 1, 1], [], []>} : vector<16x32xf32>, vector<32x128xf32>, vector<16x128xf32> -> vector<16x128xf32>
    %c808_152 = arith.constant 808 : index
    %c0_153 = arith.constant 0 : index
    %446 = vector.load %arg0[%c808_152, %c0_153] : memref<1104x128xbf16, #tpu.memory_space<vmem>>, vector<1x128xbf16>
    %447 = arith.extf %446 : vector<1x128xbf16> to vector<1x128xf32>
    %448 = vector.broadcast %447 : vector<1x128xf32> to vector<16x128xf32>
    %449 = arith.addf %445, %448 : vector<16x128xf32>
    %cst_154 = arith.constant 0.000000e+00 : f32
    %450 = vector.broadcast %cst_154 : f32 to vector<16x128xf32>
    %451 = arith.maximumf %449, %450 : vector<16x128xf32>
    %c816_155 = arith.constant 816 : index
    %c0_156 = arith.constant 0 : index
    %452 = vector.load %arg0[%c816_155, %c0_156] : memref<1104x128xbf16, #tpu.memory_space<vmem>>, vector<128x32xbf16>
    %453 = arith.extf %452 : vector<128x32xbf16> to vector<128x32xf32>
    %cst_157 = arith.constant dense<0.000000e+00> : vector<16x32xf32>
    %454 = tpu.matmul %451, %453, %cst_157 {dimension_numbers = #tpu.dot_dimension_numbers<[1], [0], [0], [1], [0, 0, 1, 1], [], []>} : vector<16x128xf32>, vector<128x32xf32>, vector<16x32xf32> -> vector<16x32xf32>
    %c944_158 = arith.constant 944 : index
    %c0_159 = arith.constant 0 : index
    %455 = vector.load %arg0[%c944_158, %c0_159] : memref<1104x128xbf16, #tpu.memory_space<vmem>>, vector<1x32xbf16>
    %456 = arith.extf %455 : vector<1x32xbf16> to vector<1x32xf32>
    %457 = vector.broadcast %456 : vector<1x32xf32> to vector<16x32xf32>
    %458 = arith.addf %454, %457 : vector<16x32xf32>
    %459 = arith.addf %442, %458 : vector<16x32xf32>
    %c968_160 = arith.constant 968 : index
    %c0_161 = arith.constant 0 : index
    %460 = vector.load %arg0[%c968_160, %c0_161] : memref<1104x128xbf16, #tpu.memory_space<vmem>>, vector<1x32xbf16>
    %461 = arith.extf %460 : vector<1x32xbf16> to vector<1x32xf32>
    %c976_162 = arith.constant 976 : index
    %c0_163 = arith.constant 0 : index
    %462 = vector.load %arg0[%c976_162, %c0_163] : memref<1104x128xbf16, #tpu.memory_space<vmem>>, vector<1x32xbf16>
    %463 = arith.extf %462 : vector<1x32xbf16> to vector<1x32xf32>
    %cst_164 = arith.constant dense<0.000000e+00> : vector<16xf32>
    %464 = vector.multi_reduction <add>, %459, %cst_164 [1] : vector<16x32xf32> to vector<16xf32>
    %465 = vector.shape_cast %464 : vector<16xf32> to vector<16x1xf32>
    %cst_165 = arith.constant 3.200000e+01 : f32
    %466 = vector.broadcast %cst_165 : f32 to vector<16x1xf32>
    %467 = arith.divf %465, %466 : vector<16x1xf32>
    %468 = vector.broadcast %467 : vector<16x1xf32> to vector<16x32xf32>
    %469 = arith.subf %459, %468 : vector<16x32xf32>
    %470 = arith.mulf %469, %469 : vector<16x32xf32>
    %cst_166 = arith.constant dense<0.000000e+00> : vector<16xf32>
    %471 = vector.multi_reduction <add>, %470, %cst_166 [1] : vector<16x32xf32> to vector<16xf32>
    %472 = vector.shape_cast %471 : vector<16xf32> to vector<16x1xf32>
    %cst_167 = arith.constant 3.200000e+01 : f32
    %473 = vector.broadcast %cst_167 : f32 to vector<16x1xf32>
    %474 = arith.divf %472, %473 : vector<16x1xf32>
    %475 = vector.broadcast %467 : vector<16x1xf32> to vector<16x32xf32>
    %476 = arith.subf %459, %475 : vector<16x32xf32>
    %cst_168 = arith.constant 9.99999974E-6 : f32
    %477 = vector.broadcast %cst_168 : f32 to vector<16x1xf32>
    %478 = arith.addf %474, %477 : vector<16x1xf32>
    %479 = math.rsqrt %478 : vector<16x1xf32>
    %480 = vector.broadcast %479 : vector<16x1xf32> to vector<16x32xf32>
    %481 = arith.mulf %476, %480 : vector<16x32xf32>
    %482 = vector.broadcast %461 : vector<1x32xf32> to vector<16x32xf32>
    %483 = arith.mulf %481, %482 : vector<16x32xf32>
    %484 = vector.broadcast %463 : vector<1x32xf32> to vector<16x32xf32>
    %485 = arith.addf %483, %484 : vector<16x32xf32>
    %486 = vector.shape_cast %485 : vector<16x32xf32> to vector<2x8x32xf32>
    %c0_169 = arith.constant 0 : index
    %c0_170 = arith.constant 0 : index
    %487 = vector.load %arg2[%c0_169, %c0_170] : memref<2x8xf32, #tpu.memory_space<vmem>>, vector<2x8xf32>
    %c984 = arith.constant 984 : index
    %c0_171 = arith.constant 0 : index
    %488 = vector.load %arg0[%c984, %c0_171] : memref<1104x128xbf16, #tpu.memory_space<vmem>>, vector<8x16xbf16>
    %489 = arith.extf %488 : vector<8x16xbf16> to vector<8x16xf32>
    %cst_172 = arith.constant dense<0.000000e+00> : vector<2x16xf32>
    %490 = tpu.matmul %487, %489, %cst_172 {dimension_numbers = #tpu.dot_dimension_numbers<[1], [0], [0], [1], [0, 0, 1, 1], [], []>} : vector<2x8xf32>, vector<8x16xf32>, vector<2x16xf32> -> vector<2x16xf32>
    %c992 = arith.constant 992 : index
    %c0_173 = arith.constant 0 : index
    %491 = vector.load %arg0[%c992, %c0_173] : memref<1104x128xbf16, #tpu.memory_space<vmem>>, vector<1x16xbf16>
    %492 = arith.extf %491 : vector<1x16xbf16> to vector<1x16xf32>
    %493 = vector.broadcast %492 : vector<1x16xf32> to vector<2x16xf32>
    %494 = arith.addf %490, %493 : vector<2x16xf32>
    %cst_174 = arith.constant 0.000000e+00 : f32
    %495 = vector.broadcast %cst_174 : f32 to vector<2x16xf32>
    %496 = arith.maximumf %494, %495 : vector<2x16xf32>
    %c1000 = arith.constant 1000 : index
    %c0_175 = arith.constant 0 : index
    %497 = vector.load %arg0[%c1000, %c0_175] : memref<1104x128xbf16, #tpu.memory_space<vmem>>, vector<16x16xbf16>
    %498 = arith.extf %497 : vector<16x16xbf16> to vector<16x16xf32>
    %cst_176 = arith.constant dense<0.000000e+00> : vector<2x16xf32>
    %499 = tpu.matmul %496, %498, %cst_176 {dimension_numbers = #tpu.dot_dimension_numbers<[1], [0], [0], [1], [0, 0, 1, 1], [], []>} : vector<2x16xf32>, vector<16x16xf32>, vector<2x16xf32> -> vector<2x16xf32>
    %c1016 = arith.constant 1016 : index
    %c0_177 = arith.constant 0 : index
    %500 = vector.load %arg0[%c1016, %c0_177] : memref<1104x128xbf16, #tpu.memory_space<vmem>>, vector<1x16xbf16>
    %501 = arith.extf %500 : vector<1x16xbf16> to vector<1x16xf32>
    %502 = vector.broadcast %501 : vector<1x16xf32> to vector<2x16xf32>
    %503 = arith.addf %499, %502 : vector<2x16xf32>
    %cst_178 = arith.constant 0.000000e+00 : f32
    %504 = vector.broadcast %cst_178 : f32 to vector<2x16xf32>
    %505 = arith.maximumf %503, %504 : vector<2x16xf32>
    %c1024 = arith.constant 1024 : index
    %c0_179 = arith.constant 0 : index
    %506 = vector.load %arg0[%c1024, %c0_179] : memref<1104x128xbf16, #tpu.memory_space<vmem>>, vector<16x32xbf16>
    %507 = arith.extf %506 : vector<16x32xbf16> to vector<16x32xf32>
    %cst_180 = arith.constant dense<0.000000e+00> : vector<2x32xf32>
    %508 = tpu.matmul %505, %507, %cst_180 {dimension_numbers = #tpu.dot_dimension_numbers<[1], [0], [0], [1], [0, 0, 1, 1], [], []>} : vector<2x16xf32>, vector<16x32xf32>, vector<2x32xf32> -> vector<2x32xf32>
    %c1040 = arith.constant 1040 : index
    %c0_181 = arith.constant 0 : index
    %509 = vector.load %arg0[%c1040, %c0_181] : memref<1104x128xbf16, #tpu.memory_space<vmem>>, vector<1x32xbf16>
    %510 = arith.extf %509 : vector<1x32xbf16> to vector<1x32xf32>
    %511 = vector.broadcast %510 : vector<1x32xf32> to vector<2x32xf32>
    %512 = arith.addf %508, %511 : vector<2x32xf32>
    %c1048 = arith.constant 1048 : index
    %c0_182 = arith.constant 0 : index
    %513 = vector.load %arg0[%c1048, %c0_182] : memref<1104x128xbf16, #tpu.memory_space<vmem>>, vector<1x32xbf16>
    %514 = arith.extf %513 : vector<1x32xbf16> to vector<1x32xf32>
    %c1056 = arith.constant 1056 : index
    %c0_183 = arith.constant 0 : index
    %515 = vector.load %arg0[%c1056, %c0_183] : memref<1104x128xbf16, #tpu.memory_space<vmem>>, vector<1x32xbf16>
    %516 = arith.extf %515 : vector<1x32xbf16> to vector<1x32xf32>
    %cst_184 = arith.constant dense<0.000000e+00> : vector<2xf32>
    %517 = vector.multi_reduction <add>, %512, %cst_184 [1] : vector<2x32xf32> to vector<2xf32>
    %518 = vector.shape_cast %517 : vector<2xf32> to vector<2x1xf32>
    %cst_185 = arith.constant 3.200000e+01 : f32
    %519 = vector.broadcast %cst_185 : f32 to vector<2x1xf32>
    %520 = arith.divf %518, %519 : vector<2x1xf32>
    %521 = vector.broadcast %520 : vector<2x1xf32> to vector<2x32xf32>
    %522 = arith.subf %512, %521 : vector<2x32xf32>
    %523 = arith.mulf %522, %522 : vector<2x32xf32>
    %cst_186 = arith.constant dense<0.000000e+00> : vector<2xf32>
    %524 = vector.multi_reduction <add>, %523, %cst_186 [1] : vector<2x32xf32> to vector<2xf32>
    %525 = vector.shape_cast %524 : vector<2xf32> to vector<2x1xf32>
    %cst_187 = arith.constant 3.200000e+01 : f32
    %526 = vector.broadcast %cst_187 : f32 to vector<2x1xf32>
    %527 = arith.divf %525, %526 : vector<2x1xf32>
    %528 = vector.broadcast %520 : vector<2x1xf32> to vector<2x32xf32>
    %529 = arith.subf %512, %528 : vector<2x32xf32>
    %cst_188 = arith.constant 9.99999974E-6 : f32
    %530 = vector.broadcast %cst_188 : f32 to vector<2x1xf32>
    %531 = arith.addf %527, %530 : vector<2x1xf32>
    %532 = math.rsqrt %531 : vector<2x1xf32>
    %533 = vector.broadcast %532 : vector<2x1xf32> to vector<2x32xf32>
    %534 = arith.mulf %529, %533 : vector<2x32xf32>
    %535 = vector.broadcast %514 : vector<1x32xf32> to vector<2x32xf32>
    %536 = arith.mulf %534, %535 : vector<2x32xf32>
    %537 = vector.broadcast %516 : vector<1x32xf32> to vector<2x32xf32>
    %538 = arith.addf %536, %537 : vector<2x32xf32>
    %539 = vector.extract_strided_slice %486 {offsets = [0, 0, 0], sizes = [2, 1, 32], strides = [1, 1, 1]} : vector<2x8x32xf32> to vector<2x1x32xf32>
    %540 = vector.shape_cast %539 : vector<2x1x32xf32> to vector<2x32xf32>
    %c1064 = arith.constant 1064 : index
    %c0_189 = arith.constant 0 : index
    %541 = vector.load %arg0[%c1064, %c0_189] : memref<1104x128xbf16, #tpu.memory_space<vmem>>, vector<32x1xbf16>
    %542 = arith.extf %541 : vector<32x1xbf16> to vector<32x1xf32>
    %cst_190 = arith.constant dense<0.000000e+00> : vector<2x1xf32>
    %543 = tpu.matmul %540, %542, %cst_190 {dimension_numbers = #tpu.dot_dimension_numbers<[1], [0], [0], [1], [0, 0, 1, 1], [], []>} : vector<2x32xf32>, vector<32x1xf32>, vector<2x1xf32> -> vector<2x1xf32>
    %c1096 = arith.constant 1096 : index
    %c0_191 = arith.constant 0 : index
    %544 = vector.load %arg0[%c1096, %c0_191] : memref<1104x128xbf16, #tpu.memory_space<vmem>>, vector<1x1xbf16>
    %545 = arith.extf %544 : vector<1x1xbf16> to vector<1x1xf32>
    %546 = vector.broadcast %545 : vector<1x1xf32> to vector<2x1xf32>
    %547 = arith.addf %543, %546 : vector<2x1xf32>
    %cst_192 = arith.constant 0.000000e+00 : f32
    %548 = vector.broadcast %cst_192 : f32 to vector<2x95xf32>
    %549 = tpu.concatenate %538, %547, %548 in 1 : vector<2x32xf32>, vector<2x1xf32>, vector<2x95xf32> -> vector<2x128xf32>
    %c0_193 = arith.constant 0 : index
    %c0_194 = arith.constant 0 : index
    %550 = vector.load %arg3[%c0_193, %c0_194] : memref<2x128xf32, #tpu.memory_space<vmem>>, vector<2x128xf32>
    tpu.vector_store %arg3[%c0_193, %c0_194], %549 {strides = array<i32>} : memref<2x128xf32, #tpu.memory_space<vmem>>, vector<2x128xf32>,
    return
  }
}

</mosaic_0001>

<llo_original>
// kernel: tpu_custom_call.1
$region0: #{tpu_custom_call.1}
  #allocation0 [shape = 'u32[]', space=smem, size = 0x4, offset = 0x4, fixed_abs, tag = 'smem constant byte address 0x4 - core index']
  #allocation1 [shape = 'u32[144,128]{1,0:T(1,128)}', space=vmem, size = 0x12000, scoped, tag = 'internal scratch']
  %s0 = inlined_call_operand.hbm [shape: bf16[1104,128], index: 0, kind: input, shape index: {}]
  %s1 = inlined_call_operand.hbm [shape: f32[4,2,8,128], index: 1, kind: input, shape index: {}]
  %s2 = inlined_call_operand.vmem [shape: f32[2,8], index: 2, kind: input, shape index: {}]
  %s3 = inlined_call_operand.hbm [shape: f32[2,128], index: 3, kind: output, shape index: {}]
  %s4 = sld [smem:[#allocation0]]
  $region30: #{tpu_custom_call.1} parent=0
    _
  %s6 = ssub.s32 1, %s4
  %s7 = scalar_select 0, %s6, %s4
  $region1: #{tpu_custom_call.1} parent=0
    #allocation2 [shape = 'u8[282624]{0}', space=vmem, size = 0x45000, scoped, tag = 'input window, operand 0, single buffered']
    #allocation3 [shape = 's32[1]{0}', space=sflag, size = 0x4, scoped, tag = 'scoped memory for tpu_custom_call.1']
    #allocation4 [shape = 's32[1]{0}', space=sflag, size = 0x4, scoped, tag = 'scoped memory for tpu_custom_call.1']
    #allocation5 [shape = 'u8[32768]{0}', space=vmem, size = 0x8000, scoped, tag = 'input window, operand 1, single buffered']
    #allocation6 [shape = 's32[1]{0}', space=sflag, size = 0x4, scoped, tag = 'scoped memory for tpu_custom_call.1']
    #allocation7 [shape = 'u8[1024]{0}', space=vmem, size = 0x400, scoped, tag = 'output window, operand 0, single buffered']
    %8 = vsyncpa [#allocation3], 0
    %9 = vsyncpa [#allocation6], 0
    %10 = vsyncpa [#allocation4], 0
    // Predicated region
    $region2: #{tpu_custom_call.1} parent=1 // pred_check
      _
    $region3: #{tpu_custom_call.1} parent=1 // pred_check_branch
      %12 = sbr.rel (0) target = $region5
    $region4: #{tpu_custom_call.1} parent=1 // pred_region
      %s14 = ssub.s32 8832, 8832
      %15 = vsyncadd [#allocation3], %s14
      %s16 = sshll.u32 [#allocation2], 4
      %s17 = int_to_ptr.vmem [resolvable:$true] %s16
      %22 = dma.hbm_to_vmem [thread:$0]  %s0, 8832, %s17, [#allocation3], 64, 64, 4
    $region5: #{tpu_custom_call.1} parent=1 // pred_fallthru
      _
    // Predicated region
    $region6: #{tpu_custom_call.1} parent=1 // pred_check
      _
    $region7: #{tpu_custom_call.1} parent=1 // pred_check_branch
      %24 = sbr.rel (0) target = $region9
    $region8: #{tpu_custom_call.1} parent=1 // pred_region
      %s26 = ssub.s32 1024, 1024
      %27 = vsyncadd [#allocation6], %s26
      %s28 = sshll.u32 [#allocation5], 4
      %s29 = int_to_ptr.vmem [resolvable:$true] %s28
      %34 = dma.hbm_to_vmem [thread:$0]  %s1, 1024, %s29, [#allocation6], 128, 128, 8
    $region9: #{tpu_custom_call.1} parent=1 // pred_fallthru
      _
    // Predicated region
    $region10: #{tpu_custom_call.1} parent=1 // pred_check
      _
    $region11: #{tpu_custom_call.1} parent=1 // pred_check_branch
      %36 = sbr.rel (0) target = $region13
    $region12: #{tpu_custom_call.1} parent=1 // pred_region
      _
    $region13: #{tpu_custom_call.1} parent=1 // pred_fallthru
      _
    // Predicated region
    $region14: #{tpu_custom_call.1} parent=1 // pred_check
      _
    $region15: #{tpu_custom_call.1} parent=1 // pred_check_branch
      %38 = sbr.rel (0) target = $region17
    $region16: #{tpu_custom_call.1} parent=1 // pred_region
      %39 = dma.done [#allocation3], 8832
    $region17: #{tpu_custom_call.1} parent=1 // pred_fallthru
      _
    // Predicated region
    $region18: #{tpu_custom_call.1} parent=1 // pred_check
      _
    $region19: #{tpu_custom_call.1} parent=1 // pred_check_branch
      %41 = sbr.rel (0) target = $region21
    $region20: #{tpu_custom_call.1} parent=1 // pred_region
      %42 = dma.done [#allocation6], 1024
    $region21: #{tpu_custom_call.1} parent=1 // pred_fallthru
      _
    %v43 = vld [vmem:[#allocation2] sm:$0xf]
    %v44 = vunpack.c.l.bf16 %v43
    %v45 = vld [vmem:[#allocation5] sm:$0xff]
    %v46 = vld [vmem:[#allocation5 + $0x8] sm:$0xff]
    %v47 = vld [vmem:[#allocation2 + $0x4] sm:$0xf]
    %v48 = vld [vmem:[#allocation2 + $0x8] sm:$0xf]
    %v49 = vunpack.c.l.bf16 %v47
    %v50 = vunpack.c.l.bf16 %v48
    %v51 = vsub.f32 %v45, 1.0
    %v52 = vsub.f32 %v46, 1.0
    %v53 = vmul.f32 %v51, 1e+09
    %v54 = vmul.f32 %v52, 1e+09
    %v55 = vld [vmem:[#allocation2 + $0xc] sm:$0xf]
    %v56 = vld [vmem:[#allocation2 + $0x10] sm:$0xf]
    %v57 = vld [vmem:[#allocation2 + $0x14] sm:$0xf]
    %v58 = vld [vmem:[#allocation2 + $0x18] sm:$0xf]
    %v59 = vunpack.c.l.bf16 %v55
    %v60 = vunpack.c.l.bf16 %v56
    %v61 = vunpack.c.l.bf16 %v57
    %v62 = vunpack.c.l.bf16 %v58
    %v63 = vld [vmem:[#allocation2 + $0x1c] sm:$0x1]
    %v64 = vunpack.c.l.bf16 %v63
    %v65 = vlaneseq
    %v66 = vshrl.u32 %v65, 7
    %v67 = vsub.s32 0, %v66
    %v68 = vrot.slane %v64, %v67
    %vm69 = vcmask 261120
    %v71 = vsel %vm69, %v44, 0
    %73 = vmatprep.subr.mxu0 0.0
    %74 = vmatpush1.msra.mxu0 0.0
    %75 = vmatprep.subr.mxu0 0.0
    %76 = vmatpush1.msra.mxu0 0.0
    %77 = vmatprep.subr.mxu0 0.0
    %78 = vmatpush1.msra.mxu0 0.0
    %79 = vmatprep.subr.mxu0 0.0
    %80 = vmatpush1.msra.mxu0 0.0
    %81 = vmatprep.subr.mxu0 0.0
    %82 = vmatpush1.msra.mxu0 0.0
    %83 = vmatprep.subr.mxu0 0.0
    %84 = vmatpush1.msra.mxu0 0.0
    %85 = vmatprep.subr.mxu0 0.0
    %86 = vmatpush1.msra.mxu0 0.0
    %87 = vmatprep.subr.mxu0 0.0
    %88 = vmatpush1.msra.mxu0 0.0
    %89 = vmatprep.subr.mxu0 0.0
    %90 = vmatpush1.msra.mxu0 0.0
    %91 = vmatprep.subr.mxu0 0.0
    %92 = vmatpush1.msra.mxu0 0.0
    %93 = vmatprep.subr.mxu0 0.0
    %94 = vmatpush1.msra.mxu0 0.0
    %95 = vmatprep.subr.mxu0 0.0
    %96 = vmatpush1.msra.mxu0 0.0
    %97 = vmatprep.subr.mxu0 0.0
    %98 = vmatpush1.msra.mxu0 %v62
    %99 = vmatprep.subr.mxu0 0.0
    %100 = vmatpush1.msra.mxu0 %v61
    %101 = vmatprep.subr.mxu0 0.0
    %102 = vmatpush1.msra.mxu0 %v60
    %103 = vmatprep.subr.mxu0 0.0
    %104 = vmatpush1.msra.mxu0 %v59
    %105 = vmatprep.subr.mxu0 0.0
    %106 = vmatpush2.msra.mxu0 0.0
    %107 = vmatprep.subr.mxu0 0.0
    %108 = vmatpush2.msra.mxu0 0.0
    %109 = vmatprep.subr.mxu0 0.0
    %110 = vmatpush2.msra.mxu0 0.0
    %111 = vmatprep.subr.mxu0 0.0
    %112 = vmatpush2.msra.mxu0 0.0
    %113 = vmatprep.subr.mxu0 0.0
    %114 = vmatpush2.msra.mxu0 0.0
    %115 = vmatprep.subr.mxu0 0.0
    %116 = vmatpush2.msra.mxu0 0.0
    %117 = vmatprep.subr.mxu0 0.0
    %118 = vmatpush2.msra.mxu0 0.0
    %119 = vmatprep.subr.mxu0 0.0
    %120 = vmatpush2.msra.mxu0 0.0
    %121 = vmatprep.subr.mxu0 0.0
    %122 = vmatpush2.msra.mxu0 0.0
    %123 = vmatprep.subr.mxu0 0.0
    %124 = vmatpush2.msra.mxu0 0.0
    %125 = vmatprep.subr.mxu0 0.0
    %126 = vmatpush2.msra.mxu0 0.0
    %127 = vmatprep.subr.mxu0 0.0
    %128 = vmatpush2.msra.mxu0 0.0
    %129 = vmatprep.subr.mxu0 0.0
    %130 = vmatpush2.msra.mxu0 0.0
    %131 = vmatprep.subr.mxu0 0.0
    %132 = vmatpush2.msra.mxu0 0.0
    %133 = vmatprep.subr.mxu0 0.0
    %134 = vmatpush2.msra.mxu0 0.0
    %135 = vmatprep.subr.mxu0 0.0
    %136 = vmatpush2.msra.mxu0 0.0
    %137 = vmatprep.mubr.f32.mxu0 0.0
    %138 = vmatmul.mubr.f32.gmra.mxu0 %v71
    %v139 = vpop.f32.mrf.mxu0
    %v140 = vadd.f32 %v68, %v139
    %v141 = vpop.f32.mrf.mxu0
    %142 = vdwg.mxu0
    %v143 = vld [vmem:[#allocation2 + $0x20] sm:$0xf]
    %v144 = vld [vmem:[#allocation2 + $0x24] sm:$0xf]
    %v145 = vld [vmem:[#allocation2 + $0x28] sm:$0xf]
    %v146 = vld [vmem:[#allocation2 + $0x2c] sm:$0xf]
    %v147 = vunpack.c.l.bf16 %v143
    %v148 = vunpack.c.l.bf16 %v144
    %v149 = vunpack.c.l.bf16 %v145
    %v150 = vunpack.c.l.bf16 %v146
    %v151 = vld [vmem:[#allocation2 + $0x30] sm:$0x1]
    %v152 = vunpack.c.l.bf16 %v151
    %v153 = vlaneseq
    %v154 = vshrl.u32 %v153, 7
    %v155 = vsub.s32 0, %v154
    %v156 = vrot.slane %v152, %v155
    %v158 = vsel %vm69, %v49, 0
    %v161 = vsel %vm69, %v50, 0
    %163 = vmatprep.subr.mxu0 0.0
    %164 = vmatpush1.msra.mxu0 0.0
    %165 = vmatprep.subr.mxu0 0.0
    %166 = vmatpush1.msra.mxu0 0.0
    %167 = vmatprep.subr.mxu0 0.0
    %168 = vmatpush1.msra.mxu0 0.0
    %169 = vmatprep.subr.mxu0 0.0
    %170 = vmatpush1.msra.mxu0 0.0
    %171 = vmatprep.subr.mxu0 0.0
    %172 = vmatpush1.msra.mxu0 0.0
    %173 = vmatprep.subr.mxu0 0.0
    %174 = vmatpush1.msra.mxu0 0.0
    %175 = vmatprep.subr.mxu0 0.0
    %176 = vmatpush1.msra.mxu0 0.0
    %177 = vmatprep.subr.mxu0 0.0
    %178 = vmatpush1.msra.mxu0 0.0
    %179 = vmatprep.subr.mxu0 0.0
    %180 = vmatpush1.msra.mxu0 0.0
    %181 = vmatprep.subr.mxu0 0.0
    %182 = vmatpush1.msra.mxu0 0.0
    %183 = vmatprep.subr.mxu0 0.0
    %184 = vmatpush1.msra.mxu0 0.0
    %185 = vmatprep.subr.mxu0 0.0
    %186 = vmatpush1.msra.mxu0 0.0
    %187 = vmatprep.subr.mxu0 0.0
    %188 = vmatpush1.msra.mxu0 %v150
    %189 = vmatprep.subr.mxu0 0.0
    %190 = vmatpush1.msra.mxu0 %v149
    %191 = vmatprep.subr.mxu0 0.0
    %192 = vmatpush1.msra.mxu0 %v148
    %193 = vmatprep.subr.mxu0 0.0
    %194 = vmatpush1.msra.mxu0 %v147
    %195 = vmatprep.subr.mxu0 0.0
    %196 = vmatpush2.msra.mxu0 0.0
    %197 = vmatprep.subr.mxu0 0.0
    %198 = vmatpush2.msra.mxu0 0.0
    %199 = vmatprep.subr.mxu0 0.0
    %200 = vmatpush2.msra.mxu0 0.0
    %201 = vmatprep.subr.mxu0 0.0
    %202 = vmatpush2.msra.mxu0 0.0
    %203 = vmatprep.subr.mxu0 0.0
    %204 = vmatpush2.msra.mxu0 0.0
    %205 = vmatprep.subr.mxu0 0.0
    %206 = vmatpush2.msra.mxu0 0.0
    %207 = vmatprep.subr.mxu0 0.0
    %208 = vmatpush2.msra.mxu0 0.0
    %209 = vmatprep.subr.mxu0 0.0
    %210 = vmatpush2.msra.mxu0 0.0
    %211 = vmatprep.subr.mxu0 0.0
    %212 = vmatpush2.msra.mxu0 0.0
    %213 = vmatprep.subr.mxu0 0.0
    %214 = vmatpush2.msra.mxu0 0.0
    %215 = vmatprep.subr.mxu0 0.0
    %216 = vmatpush2.msra.mxu0 0.0
    %217 = vmatprep.subr.mxu0 0.0
    %218 = vmatpush2.msra.mxu0 0.0
    %219 = vmatprep.subr.mxu0 0.0
    %220 = vmatpush2.msra.mxu0 0.0
    %221 = vmatprep.subr.mxu0 0.0
    %222 = vmatpush2.msra.mxu0 0.0
    %223 = vmatprep.subr.mxu0 0.0
    %224 = vmatpush2.msra.mxu0 0.0
    %225 = vmatprep.subr.mxu0 0.0
    %226 = vmatpush2.msra.mxu0 0.0
    %227 = vmatprep.mubr.f32.mxu0 0.0
    %228 = vmatmul.mubr.f32.gmra.mxu0 %v158
    %v229 = vpop.f32.mrf.mxu0
    %v230 = vadd.f32 %v156, %v229
    %v231 = vpop.f32.mrf.mxu0
    %232 = vmatprep.mubr.f32.mxu0 0.0
    %233 = vmatmul.mubr.f32.gmra.mxu0 %v161
    %v234 = vpop.f32.mrf.mxu0
    %v235 = vadd.f32 %v156, %v234
    %v236 = vpop.f32.mrf.mxu0
    %237 = vdwg.mxu0
    %v239 = vsel %vm69, %v140, 0
    %v242 = vsel %vm69, %v230, 0
    %v245 = vsel %vm69, %v235, 0
    %247 = vmatprep.subr.mxu0 0.0
    %248 = vmatpush1.xpose.msra.mxu0 0.0
    %249 = vmatprep.subr.mxu0 0.0
    %250 = vmatpush1.xpose.msra.mxu0 0.0
    %251 = vmatprep.subr.mxu0 0.0
    %252 = vmatpush1.xpose.msra.mxu0 0.0
    %253 = vmatprep.subr.mxu0 0.0
    %254 = vmatpush1.xpose.msra.mxu0 0.0
    %255 = vmatprep.subr.mxu0 0.0
    %256 = vmatpush1.xpose.msra.mxu0 0.0
    %257 = vmatprep.subr.mxu0 0.0
    %258 = vmatpush1.xpose.msra.mxu0 0.0
    %259 = vmatprep.subr.mxu0 0.0
    %260 = vmatpush1.xpose.msra.mxu0 0.0
    %261 = vmatprep.subr.mxu0 0.0
    %262 = vmatpush1.xpose.msra.mxu0 0.0
    %263 = vmatprep.subr.mxu0 0.0
    %264 = vmatpush1.xpose.msra.mxu0 0.0
    %265 = vmatprep.subr.mxu0 0.0
    %266 = vmatpush1.xpose.msra.mxu0 0.0
    %267 = vmatprep.subr.mxu0 0.0
    %268 = vmatpush1.xpose.msra.mxu0 0.0
    %269 = vmatprep.subr.mxu0 0.0
    %270 = vmatpush1.xpose.msra.mxu0 0.0
    %271 = vmatprep.subr.mxu0 0.0
    %272 = vmatpush1.xpose.msra.mxu0 0.0
    %273 = vmatprep.subr.mxu0 0.0
    %274 = vmatpush1.xpose.msra.mxu0 0.0
    %275 = vmatprep.subr.mxu0 0.0
    %276 = vmatpush1.xpose.msra.mxu0 %v245
    %277 = vmatprep.subr.mxu0 0.0
    %278 = vmatpush1.xpose.msra.mxu0 %v242
    %279 = vmatprep.subr.mxu0 0.0
    %280 = vmatpush2.xpose.msra.mxu0 0.0
    %281 = vmatprep.subr.mxu0 0.0
    %282 = vmatpush2.xpose.msra.mxu0 0.0
    %283 = vmatprep.subr.mxu0 0.0
    %284 = vmatpush2.xpose.msra.mxu0 0.0
    %285 = vmatprep.subr.mxu0 0.0
    %286 = vmatpush2.xpose.msra.mxu0 0.0
    %287 = vmatprep.subr.mxu0 0.0
    %288 = vmatpush2.xpose.msra.mxu0 0.0
    %289 = vmatprep.subr.mxu0 0.0
    %290 = vmatpush2.xpose.msra.mxu0 0.0
    %291 = vmatprep.subr.mxu0 0.0
    %292 = vmatpush2.xpose.msra.mxu0 0.0
    %293 = vmatprep.subr.mxu0 0.0
    %294 = vmatpush2.xpose.msra.mxu0 0.0
    %295 = vmatprep.subr.mxu0 0.0
    %296 = vmatpush2.xpose.msra.mxu0 0.0
    %297 = vmatprep.subr.mxu0 0.0
    %298 = vmatpush2.xpose.msra.mxu0 0.0
    %299 = vmatprep.subr.mxu0 0.0
    %300 = vmatpush2.xpose.msra.mxu0 0.0
    %301 = vmatprep.subr.mxu0 0.0
    %302 = vmatpush2.xpose.msra.mxu0 0.0
    %303 = vmatprep.subr.mxu0 0.0
    %304 = vmatpush2.xpose.msra.mxu0 0.0
    %305 = vmatprep.subr.mxu0 0.0
    %306 = vmatpush2.xpose.msra.mxu0 0.0
    %307 = vmatprep.subr.mxu0 0.0
    %308 = vmatpush2.xpose.msra.mxu0 0.0
    %309 = vmatprep.subr.mxu0 0.0
    %310 = vmatpush2.xpose.msra.mxu0 0.0
    %311 = vmatprep.mubr.f32.mxu0 0.0
    %312 = vmatmul.mubr.f32.gmra.mxu0 %v239
    %v313 = vpop.f32.mrf.mxu0
    %v314 = vadd.f32 0.0, %v313
    %v315 = vpop.f32.mrf.mxu0
    %316 = vdwg.mxu0
    %v317 = vmul.f32 %v314, 0.17677669
    %v318 = vadd.f32 %v317, %v53
    %v319 = vadd.f32 %v317, %v54
    %vm320 = vcmask 130048
    %v321 = vsel %vm320, %v318, -inf
    %322 = vmax.xlane.f32.xlu0 %v321
    %v323 = vpop.xlane.xlu0 %322
    %v324 = vsel %vm320, %v319, -inf
    %325 = vmax.xlane.f32.xlu0 %v324
    %v326 = vpop.xlane.xlu0 %325
    %v327 = vsub.f32 %v318, %v323
    %v328 = vsub.f32 %v319, %v326
    %v329 = vmul.f32 %v327, 1.442695
    %v330 = vpow.pop %v329
    %v331 = vmul.f32 %v328, 1.442695
    %v332 = vpow.pop %v331
    %v333 = vsel %vm320, %v330, 0.0
    %334 = vadd.xlane.f32.xlu0 %v333
    %v335 = vpop.xlane.xlu0 %334
    %v336 = vsel %vm320, %v332, 0.0
    %337 = vadd.xlane.f32.xlu0 %v336
    %v338 = vpop.xlane.xlu0 %337
    %v339 = vrcp.pop %v335
    %v340 = vrcp.pop %v338
    %v341 = vmul.f32 %v330, %v339
    %v342 = vmul.f32 %v332, %v340
    %343 = vrot.lane.b32.xlu0 %v230, 96
    %v344 = vpop.permute.xlu0 %343
    %345 = vrot.lane.b32.xlu0 %v235, 96
    %v346 = vpop.permute.xlu0 %345
    %v350 = vsel %vm320, %v341, 0
    %v353 = vsel %vm320, %v342, 0
    %355 = vmatprep.subr.mxu0 0.0
    %356 = vmatpush1.msra.mxu0 0.0
    %357 = vmatprep.subr.mxu0 0.0
    %358 = vmatpush1.msra.mxu0 0.0
    %359 = vmatprep.subr.mxu0 0.0
    %360 = vmatpush1.msra.mxu0 0.0
    %361 = vmatprep.subr.mxu0 0.0
    %362 = vmatpush1.msra.mxu0 0.0
    %363 = vmatprep.subr.mxu0 0.0
    %364 = vmatpush1.msra.mxu0 0.0
    %365 = vmatprep.subr.mxu0 0.0
    %366 = vmatpush1.msra.mxu0 0.0
    %367 = vmatprep.subr.mxu0 0.0
    %368 = vmatpush1.msra.mxu0 0.0
    %369 = vmatprep.subr.mxu0 0.0
    %370 = vmatpush1.msra.mxu0 0.0
    %371 = vmatprep.subr.mxu0 0.0
    %372 = vmatpush1.msra.mxu0 0.0
    %373 = vmatprep.subr.mxu0 0.0
    %374 = vmatpush1.msra.mxu0 0.0
    %375 = vmatprep.subr.mxu0 0.0
    %376 = vmatpush1.msra.mxu0 0.0
    %377 = vmatprep.subr.mxu0 0.0
    %378 = vmatpush1.msra.mxu0 0.0
    %379 = vmatprep.subr.mxu0 0.0
    %380 = vmatpush1.msra.mxu0 0.0
    %381 = vmatprep.subr.mxu0 0.0
    %382 = vmatpush1.msra.mxu0 0.0
    %383 = vmatprep.subr.mxu0 0.0
    %384 = vmatpush1.msra.mxu0 %v346
    %385 = vmatprep.subr.mxu0 0.0
    %386 = vmatpush1.msra.mxu0 %v344
    %387 = vmatprep.subr.mxu0 0.0
    %388 = vmatpush2.msra.mxu0 0.0
    %389 = vmatprep.subr.mxu0 0.0
    %390 = vmatpush2.msra.mxu0 0.0
    %391 = vmatprep.subr.mxu0 0.0
    %392 = vmatpush2.msra.mxu0 0.0
    %393 = vmatprep.subr.mxu0 0.0
    %394 = vmatpush2.msra.mxu0 0.0
    %395 = vmatprep.subr.mxu0 0.0
    %396 = vmatpush2.msra.mxu0 0.0
    %397 = vmatprep.subr.mxu0 0.0
    %398 = vmatpush2.msra.mxu0 0.0
    %399 = vmatprep.subr.mxu0 0.0
    %400 = vmatpush2.msra.mxu0 0.0
    %401 = vmatprep.subr.mxu0 0.0
    %402 = vmatpush2.msra.mxu0 0.0
    %403 = vmatprep.subr.mxu0 0.0
    %404 = vmatpush2.msra.mxu0 0.0
    %405 = vmatprep.subr.mxu0 0.0
    %406 = vmatpush2.msra.mxu0 0.0
    %407 = vmatprep.subr.mxu0 0.0
    %408 = vmatpush2.msra.mxu0 0.0
    %409 = vmatprep.subr.mxu0 0.0
    %410 = vmatpush2.msra.mxu0 0.0
    %411 = vmatprep.subr.mxu0 0.0
    %412 = vmatpush2.msra.mxu0 0.0
    %413 = vmatprep.subr.mxu0 0.0
    %414 = vmatpush2.msra.mxu0 0.0
    %415 = vmatprep.subr.mxu0 0.0
    %416 = vmatpush2.msra.mxu0 0.0
    %417 = vmatprep.subr.mxu0 0.0
    %418 = vmatpush2.msra.mxu0 0.0
    %419 = vmatprep.mubr.f32.mxu0 0.0
    %420 = vmatmul.mubr.f32.gmra.mxu0 %v350
    %v421 = vpop.f32.mrf.mxu0
    %v422 = vadd.f32 0.0, %v421
    %v423 = vpop.f32.mrf.mxu0
    %424 = vmatprep.mubr.f32.mxu0 0.0
    %425 = vmatmul.mubr.f32.gmra.mxu0 %v353
    %v426 = vpop.f32.mrf.mxu0
    %v427 = vadd.f32 0.0, %v426
    %v428 = vpop.f32.mrf.mxu0
    %429 = vdwg.mxu0
    %v430 = vld [vmem:[#allocation2 + $0x34] sm:$0xf]
    %v431 = vld [vmem:[#allocation2 + $0x38] sm:$0xf]
    %v432 = vld [vmem:[#allocation2 + $0x3c] sm:$0xf]
    %v433 = vld [vmem:[#allocation2 + $0x40] sm:$0xf]
    %v434 = vunpack.c.l.bf16 %v430
    %v435 = vunpack.c.l.bf16 %v431
    %v436 = vunpack.c.l.bf16 %v432
    %v437 = vunpack.c.l.bf16 %v433
    %v438 = vld [vmem:[#allocation2 + $0x44] sm:$0x1]
    %v439 = vunpack.c.l.bf16 %v438
    %v440 = vlaneseq
    %v441 = vshrl.u32 %v440, 7
    %v442 = vsub.s32 0, %v441
    %v443 = vrot.slane %v439, %v442
    %v445 = vsel %vm69, %v422, 0
    %v448 = vsel %vm69, %v427, 0
    %450 = vmatprep.subr.mxu0 0.0
    %451 = vmatpush1.msra.mxu0 0.0
    %452 = vmatprep.subr.mxu0 0.0
    %453 = vmatpush1.msra.mxu0 0.0
    %454 = vmatprep.subr.mxu0 0.0
    %455 = vmatpush1.msra.mxu0 0.0
    %456 = vmatprep.subr.mxu0 0.0
    %457 = vmatpush1.msra.mxu0 0.0
    %458 = vmatprep.subr.mxu0 0.0
    %459 = vmatpush1.msra.mxu0 0.0
    %460 = vmatprep.subr.mxu0 0.0
    %461 = vmatpush1.msra.mxu0 0.0
    %462 = vmatprep.subr.mxu0 0.0
    %463 = vmatpush1.msra.mxu0 0.0
    %464 = vmatprep.subr.mxu0 0.0
    %465 = vmatpush1.msra.mxu0 0.0
    %466 = vmatprep.subr.mxu0 0.0
    %467 = vmatpush1.msra.mxu0 0.0
    %468 = vmatprep.subr.mxu0 0.0
    %469 = vmatpush1.msra.mxu0 0.0
    %470 = vmatprep.subr.mxu0 0.0
    %471 = vmatpush1.msra.mxu0 0.0
    %472 = vmatprep.subr.mxu0 0.0
    %473 = vmatpush1.msra.mxu0 0.0
    %474 = vmatprep.subr.mxu0 0.0
    %475 = vmatpush1.msra.mxu0 %v437
    %476 = vmatprep.subr.mxu0 0.0
    %477 = vmatpush1.msra.mxu0 %v436
    %478 = vmatprep.subr.mxu0 0.0
    %479 = vmatpush1.msra.mxu0 %v435
    %480 = vmatprep.subr.mxu0 0.0
    %481 = vmatpush1.msra.mxu0 %v434
    %482 = vmatprep.subr.mxu0 0.0
    %483 = vmatpush2.msra.mxu0 0.0
    %484 = vmatprep.subr.mxu0 0.0
    %485 = vmatpush2.msra.mxu0 0.0
    %486 = vmatprep.subr.mxu0 0.0
    %487 = vmatpush2.msra.mxu0 0.0
    %488 = vmatprep.subr.mxu0 0.0
    %489 = vmatpush2.msra.mxu0 0.0
    %490 = vmatprep.subr.mxu0 0.0
    %491 = vmatpush2.msra.mxu0 0.0
    %492 = vmatprep.subr.mxu0 0.0
    %493 = vmatpush2.msra.mxu0 0.0
    %494 = vmatprep.subr.mxu0 0.0
    %495 = vmatpush2.msra.mxu0 0.0
    %496 = vmatprep.subr.mxu0 0.0
    %497 = vmatpush2.msra.mxu0 0.0
    %498 = vmatprep.subr.mxu0 0.0
    %499 = vmatpush2.msra.mxu0 0.0
    %500 = vmatprep.subr.mxu0 0.0
    %501 = vmatpush2.msra.mxu0 0.0
    %502 = vmatprep.subr.mxu0 0.0
    %503 = vmatpush2.msra.mxu0 0.0
    %504 = vmatprep.subr.mxu0 0.0
    %505 = vmatpush2.msra.mxu0 0.0
    %506 = vmatprep.subr.mxu0 0.0
    %507 = vmatpush2.msra.mxu0 0.0
    %508 = vmatprep.subr.mxu0 0.0
    %509 = vmatpush2.msra.mxu0 0.0
    %510 = vmatprep.subr.mxu0 0.0
    %511 = vmatpush2.msra.mxu0 0.0
    %512 = vmatprep.subr.mxu0 0.0
    %513 = vmatpush2.msra.mxu0 0.0
    %514 = vmatprep.mubr.f32.mxu0 0.0
    %515 = vmatmul.mubr.f32.gmra.mxu0 %v445
    %v516 = vpop.f32.mrf.mxu0
    %v517 = vadd.f32 %v443, %v516
    %v518 = vpop.f32.mrf.mxu0
    %519 = vmatprep.mubr.f32.mxu0 0.0
    %520 = vmatmul.mubr.f32.gmra.mxu0 %v448
    %v521 = vpop.f32.mrf.mxu0
    %v522 = vadd.f32 %v443, %v521
    %v523 = vpop.f32.mrf.mxu0
    %524 = vdwg.mxu0
    %v525 = vadd.f32 %v517, %v44
    %v526 = vadd.f32 %v522, %v44
    %v527 = vld [vmem:[#allocation2 + $0xa0] sm:$0x1]
    %v528 = vunpack.c.l.bf16 %v527
    %v529 = vld [vmem:[#allocation2 + $0xa4] sm:$0x1]
    %v530 = vunpack.c.l.bf16 %v529
    %v531 = vsel %vm69, %v525, 0.0
    %532 = vadd.xlane.f32.xlu0 %v531
    %v533 = vpop.xlane.xlu0 %532
    %v534 = vsel %vm69, %v526, 0.0
    %535 = vadd.xlane.f32.xlu0 %v534
    %v536 = vpop.xlane.xlu0 %535
    %v537 = vrcp.pop 32.0
    %v538 = vmul.f32 %v533, %v537
    %v539 = vmul.f32 %v536, %v537
    %v540 = vsub.f32 %v525, %v538
    %v541 = vsub.f32 %v526, %v539
    %v542 = vmul.f32 %v540, %v540
    %v543 = vmul.f32 %v541, %v541
    %v544 = vsel %vm69, %v542, 0.0
    %545 = vadd.xlane.f32.xlu0 %v544
    %v546 = vpop.xlane.xlu0 %545
    %v547 = vsel %vm69, %v543, 0.0
    %548 = vadd.xlane.f32.xlu0 %v547
    %v549 = vpop.xlane.xlu0 %548
    %v550 = vmul.f32 %v546, %v537
    %v551 = vmul.f32 %v549, %v537
    %v552 = vadd.f32 %v550, 1e-05
    %v553 = vadd.f32 %v551, 1e-05
    %v554 = vrsqrt.pop %v552
    %v555 = vrsqrt.pop %v553
    %v556 = vmul.f32 %v540, %v554
    %v557 = vmul.f32 %v541, %v555
    %v558 = vlaneseq
    %v559 = vshrl.u32 %v558, 7
    %v560 = vsub.s32 0, %v559
    %v561 = vrot.slane %v528, %v560
    %v562 = vmul.f32 %v556, %v561
    %v563 = vmul.f32 %v557, %v561
    %v564 = vlaneseq
    %v565 = vshrl.u32 %v564, 7
    %v566 = vsub.s32 0, %v565
    %v567 = vrot.slane %v530, %v566
    %v568 = vadd.f32 %v562, %v567
    %v569 = vadd.f32 %v563, %v567
    %v570 = vld [vmem:[#allocation2 + $0x48] sm:$0xf]
    %v571 = vld [vmem:[#allocation2 + $0x4c] sm:$0xf]
    %v572 = vld [vmem:[#allocation2 + $0x50] sm:$0xf]
    %v573 = vld [vmem:[#allocation2 + $0x54] sm:$0xf]
    %v574 = vunpack.c.l.bf16 %v570
    %v575 = vunpack.c.l.bf16 %v571
    %v576 = vunpack.c.l.bf16 %v572
    %v577 = vunpack.c.l.bf16 %v573
    %v578 = vld [vmem:[#allocation2 + $0x58] sm:$0x1]
    %v579 = vunpack.c.l.bf16 %v578
    %v580 = vlaneseq
    %v581 = vshrl.u32 %v580, 7
    %v582 = vsub.s32 0, %v581
    %v583 = vrot.slane %v579, %v582
    %v585 = vsel %vm69, %v568, 0
    %v588 = vsel %vm69, %v569, 0
    %590 = vmatprep.subr.mxu0 0.0
    %591 = vmatpush1.msra.mxu0 0.0
    %592 = vmatprep.subr.mxu0 0.0
    %593 = vmatpush1.msra.mxu0 0.0
    %594 = vmatprep.subr.mxu0 0.0
    %595 = vmatpush1.msra.mxu0 0.0
    %596 = vmatprep.subr.mxu0 0.0
    %597 = vmatpush1.msra.mxu0 0.0
    %598 = vmatprep.subr.mxu0 0.0
    %599 = vmatpush1.msra.mxu0 0.0
    %600 = vmatprep.subr.mxu0 0.0
    %601 = vmatpush1.msra.mxu0 0.0
    %602 = vmatprep.subr.mxu0 0.0
    %603 = vmatpush1.msra.mxu0 0.0
    %604 = vmatprep.subr.mxu0 0.0
    %605 = vmatpush1.msra.mxu0 0.0
    %606 = vmatprep.subr.mxu0 0.0
    %607 = vmatpush1.msra.mxu0 0.0
    %608 = vmatprep.subr.mxu0 0.0
    %609 = vmatpush1.msra.mxu0 0.0
    %610 = vmatprep.subr.mxu0 0.0
    %611 = vmatpush1.msra.mxu0 0.0
    %612 = vmatprep.subr.mxu0 0.0
    %613 = vmatpush1.msra.mxu0 0.0
    %614 = vmatprep.subr.mxu0 0.0
    %615 = vmatpush1.msra.mxu0 %v577
    %616 = vmatprep.subr.mxu0 0.0
    %617 = vmatpush1.msra.mxu0 %v576
    %618 = vmatprep.subr.mxu0 0.0
    %619 = vmatpush1.msra.mxu0 %v575
    %620 = vmatprep.subr.mxu0 0.0
    %621 = vmatpush1.msra.mxu0 %v574
    %622 = vmatprep.subr.mxu0 0.0
    %623 = vmatpush2.msra.mxu0 0.0
    %624 = vmatprep.subr.mxu0 0.0
    %625 = vmatpush2.msra.mxu0 0.0
    %626 = vmatprep.subr.mxu0 0.0
    %627 = vmatpush2.msra.mxu0 0.0
    %628 = vmatprep.subr.mxu0 0.0
    %629 = vmatpush2.msra.mxu0 0.0
    %630 = vmatprep.subr.mxu0 0.0
    %631 = vmatpush2.msra.mxu0 0.0
    %632 = vmatprep.subr.mxu0 0.0
    %633 = vmatpush2.msra.mxu0 0.0
    %634 = vmatprep.subr.mxu0 0.0
    %635 = vmatpush2.msra.mxu0 0.0
    %636 = vmatprep.subr.mxu0 0.0
    %637 = vmatpush2.msra.mxu0 0.0
    %638 = vmatprep.subr.mxu0 0.0
    %639 = vmatpush2.msra.mxu0 0.0
    %640 = vmatprep.subr.mxu0 0.0
    %641 = vmatpush2.msra.mxu0 0.0
    %642 = vmatprep.subr.mxu0 0.0
    %643 = vmatpush2.msra.mxu0 0.0
    %644 = vmatprep.subr.mxu0 0.0
    %645 = vmatpush2.msra.mxu0 0.0
    %646 = vmatprep.subr.mxu0 0.0
    %647 = vmatpush2.msra.mxu0 0.0
    %648 = vmatprep.subr.mxu0 0.0
    %649 = vmatpush2.msra.mxu0 0.0
    %650 = vmatprep.subr.mxu0 0.0
    %651 = vmatpush2.msra.mxu0 0.0
    %652 = vmatprep.subr.mxu0 0.0
    %653 = vmatpush2.msra.mxu0 0.0
    %654 = vmatprep.mubr.f32.mxu0 0.0
    %655 = vmatmul.mubr.f32.gmra.mxu0 %v585
    %v656 = vpop.f32.mrf.mxu0
    %v657 = vadd.f32 %v583, %v656
    %v658 = vpop.f32.mrf.mxu0
    %659 = vmatprep.mubr.f32.mxu0 0.0
    %660 = vmatmul.mubr.f32.gmra.mxu0 %v588
    %v661 = vpop.f32.mrf.mxu0
    %v662 = vadd.f32 %v583, %v661
    %v663 = vpop.f32.mrf.mxu0
    %664 = vdwg.mxu0
    %v665 = vmax.f32 %v657, 0.0
    %v666 = vmax.f32 %v662, 0.0
    %v667 = vld [vmem:[#allocation2 + $0x5c] sm:$0xf]
    %v668 = vld [vmem:[#allocation2 + $0x60] sm:$0xf]
    %v669 = vld [vmem:[#allocation2 + $0x64] sm:$0xf]
    %v670 = vld [vmem:[#allocation2 + $0x68] sm:$0xf]
    %v671 = vld [vmem:[#allocation2 + $0x6c] sm:$0xf]
    %v672 = vld [vmem:[#allocation2 + $0x70] sm:$0xf]
    %v673 = vld [vmem:[#allocation2 + $0x74] sm:$0xf]
    %v674 = vld [vmem:[#allocation2 + $0x78] sm:$0xf]
    %v675 = vld [vmem:[#allocation2 + $0x7c] sm:$0xf]
    %v676 = vld [vmem:[#allocation2 + $0x80] sm:$0xf]
    %v677 = vld [vmem:[#allocation2 + $0x84] sm:$0xf]
    %v678 = vld [vmem:[#allocation2 + $0x88] sm:$0xf]
    %v679 = vld [vmem:[#allocation2 + $0x8c] sm:$0xf]
    %v680 = vld [vmem:[#allocation2 + $0x90] sm:$0xf]
    %v681 = vld [vmem:[#allocation2 + $0x94] sm:$0xf]
    %v682 = vld [vmem:[#allocation2 + $0x98] sm:$0xf]
    %v683 = vunpack.c.l.bf16 %v667
    %v684 = vunpack.c.l.bf16 %v668
    %v685 = vunpack.c.l.bf16 %v669
    %v686 = vunpack.c.l.bf16 %v670
    %v687 = vunpack.c.l.bf16 %v671
    %v688 = vunpack.c.l.bf16 %v672
    %v689 = vunpack.c.l.bf16 %v673
    %v690 = vunpack.c.l.bf16 %v674
    %v691 = vunpack.c.l.bf16 %v675
    %v692 = vunpack.c.l.bf16 %v676
    %v693 = vunpack.c.l.bf16 %v677
    %v694 = vunpack.c.l.bf16 %v678
    %v695 = vunpack.c.l.bf16 %v679
    %v696 = vunpack.c.l.bf16 %v680
    %v697 = vunpack.c.l.bf16 %v681
    %v698 = vunpack.c.l.bf16 %v682
    %v699 = vld [vmem:[#allocation2 + $0x9c] sm:$0x1]
    %v700 = vunpack.c.l.bf16 %v699
    %v701 = vlaneseq
    %v702 = vshrl.u32 %v701, 7
    %v703 = vsub.s32 0, %v702
    %v704 = vrot.slane %v700, %v703
    %705 = vmatprep.subr.mxu0 0.0
    %706 = vmatpush1.msra.mxu0 %v698
    %707 = vmatprep.subr.mxu0 0.0
    %708 = vmatpush1.msra.mxu0 %v697
    %709 = vmatprep.subr.mxu0 0.0
    %710 = vmatpush1.msra.mxu0 %v696
    %711 = vmatprep.subr.mxu0 0.0
    %712 = vmatpush1.msra.mxu0 %v695
    %713 = vmatprep.subr.mxu0 0.0
    %714 = vmatpush1.msra.mxu0 %v694
    %715 = vmatprep.subr.mxu0 0.0
    %716 = vmatpush1.msra.mxu0 %v693
    %717 = vmatprep.subr.mxu0 0.0
    %718 = vmatpush1.msra.mxu0 %v692
    %719 = vmatprep.subr.mxu0 0.0
    %720 = vmatpush1.msra.mxu0 %v691
    %721 = vmatprep.subr.mxu0 0.0
    %722 = vmatpush1.msra.mxu0 %v690
    %723 = vmatprep.subr.mxu0 0.0
    %724 = vmatpush1.msra.mxu0 %v689
    %725 = vmatprep.subr.mxu0 0.0
    %726 = vmatpush1.msra.mxu0 %v688
    %727 = vmatprep.subr.mxu0 0.0
    %728 = vmatpush1.msra.mxu0 %v687
    %729 = vmatprep.subr.mxu0 0.0
    %730 = vmatpush1.msra.mxu0 %v686
    %731 = vmatprep.subr.mxu0 0.0
    %732 = vmatpush1.msra.mxu0 %v685
    %733 = vmatprep.subr.mxu0 0.0
    %734 = vmatpush1.msra.mxu0 %v684
    %735 = vmatprep.subr.mxu0 0.0
    %736 = vmatpush1.msra.mxu0 %v683
    %737 = vmatprep.subr.mxu0 0.0
    %738 = vmatpush2.msra.mxu0 0.0
    %739 = vmatprep.subr.mxu0 0.0
    %740 = vmatpush2.msra.mxu0 0.0
    %741 = vmatprep.subr.mxu0 0.0
    %742 = vmatpush2.msra.mxu0 0.0
    %743 = vmatprep.subr.mxu0 0.0
    %744 = vmatpush2.msra.mxu0 0.0
    %745 = vmatprep.subr.mxu0 0.0
    %746 = vmatpush2.msra.mxu0 0.0
    %747 = vmatprep.subr.mxu0 0.0
    %748 = vmatpush2.msra.mxu0 0.0
    %749 = vmatprep.subr.mxu0 0.0
    %750 = vmatpush2.msra.mxu0 0.0
    %751 = vmatprep.subr.mxu0 0.0
    %752 = vmatpush2.msra.mxu0 0.0
    %753 = vmatprep.subr.mxu0 0.0
    %754 = vmatpush2.msra.mxu0 0.0
    %755 = vmatprep.subr.mxu0 0.0
    %756 = vmatpush2.msra.mxu0 0.0
    %757 = vmatprep.subr.mxu0 0.0
    %758 = vmatpush2.msra.mxu0 0.0
    %759 = vmatprep.subr.mxu0 0.0
    %760 = vmatpush2.msra.mxu0 0.0
    %761 = vmatprep.subr.mxu0 0.0
    %762 = vmatpush2.msra.mxu0 0.0
    %763 = vmatprep.subr.mxu0 0.0
    %764 = vmatpush2.msra.mxu0 0.0
    %765 = vmatprep.subr.mxu0 0.0
    %766 = vmatpush2.msra.mxu0 0.0
    %767 = vmatprep.subr.mxu0 0.0
    %768 = vmatpush2.msra.mxu0 0.0
    %769 = vmatprep.mubr.f32.mxu0 0.0
    %770 = vmatmul.mubr.f32.gmra.mxu0 %v665
    %v771 = vpop.f32.mrf.mxu0
    %v772 = vadd.f32 %v704, %v771
    %v773 = vpop.f32.mrf.mxu0
    %774 = vmatprep.mubr.f32.mxu0 0.0
    %775 = vmatmul.mubr.f32.gmra.mxu0 %v666
    %v776 = vpop.f32.mrf.mxu0
    %v777 = vadd.f32 %v704, %v776
    %v778 = vpop.f32.mrf.mxu0
    %779 = vdwg.mxu0
    %v780 = vadd.f32 %v568, %v772
    %v781 = vadd.f32 %v569, %v777
    %v782 = vld [vmem:[#allocation2 + $0xa8] sm:$0x1]
    %v783 = vunpack.c.l.bf16 %v782
    %v784 = vld [vmem:[#allocation2 + $0xac] sm:$0x1]
    %v785 = vunpack.c.l.bf16 %v784
    %v786 = vsel %vm69, %v780, 0.0
    %787 = vadd.xlane.f32.xlu0 %v786
    %v788 = vpop.xlane.xlu0 %787
    %v789 = vsel %vm69, %v781, 0.0
    %790 = vadd.xlane.f32.xlu0 %v789
    %v791 = vpop.xlane.xlu0 %790
    %v792 = vmul.f32 %v788, %v537
    %v793 = vmul.f32 %v791, %v537
    %v794 = vsub.f32 %v780, %v792
    %v795 = vsub.f32 %v781, %v793
    %v796 = vmul.f32 %v794, %v794
    %v797 = vmul.f32 %v795, %v795
    %v798 = vsel %vm69, %v796, 0.0
    %799 = vadd.xlane.f32.xlu0 %v798
    %v800 = vpop.xlane.xlu0 %799
    %v801 = vsel %vm69, %v797, 0.0
    %802 = vadd.xlane.f32.xlu0 %v801
    %v803 = vpop.xlane.xlu0 %802
    %v804 = vmul.f32 %v800, %v537
    %v805 = vmul.f32 %v803, %v537
    %v806 = vadd.f32 %v804, 1e-05
    %v807 = vadd.f32 %v805, 1e-05
    %v808 = vrsqrt.pop %v806
    %v809 = vrsqrt.pop %v807
    %v810 = vmul.f32 %v794, %v808
    %v811 = vmul.f32 %v795, %v809
    %v812 = vlaneseq
    %v813 = vshrl.u32 %v812, 7
    %v814 = vsub.s32 0, %v813
    %v815 = vrot.slane %v783, %v814
    %v816 = vmul.f32 %v810, %v815
    %v817 = vmul.f32 %v811, %v815
    %v818 = vlaneseq
    %v819 = vshrl.u32 %v818, 7
    %v820 = vsub.s32 0, %v819
    %v821 = vrot.slane %v785, %v820
    %v822 = vadd.f32 %v816, %v821
    %v823 = vadd.f32 %v817, %v821
    %s824 = scalar_lea.vmem [#allocation5], 16
    %v825 = vld [vmem:[%s824] sm:$0xff]
    %v826 = vld [vmem:[%s824 + $0x8] sm:$0xff]
    %v827 = vld [vmem:[#allocation2 + $0xb0] sm:$0xf]
    %v828 = vld [vmem:[#allocation2 + $0xb4] sm:$0xf]
    %v829 = vunpack.c.l.bf16 %v827
    %v830 = vunpack.c.l.bf16 %v828
    %v831 = vsub.f32 %v825, 1.0
    %v832 = vsub.f32 %v826, 1.0
    %v833 = vmul.f32 %v831, 1e+09
    %v834 = vmul.f32 %v832, 1e+09
    %v835 = vld [vmem:[#allocation2 + $0xb8] sm:$0xf]
    %v836 = vld [vmem:[#allocation2 + $0xbc] sm:$0xf]
    %v837 = vld [vmem:[#allocation2 + $0xc0] sm:$0xf]
    %v838 = vld [vmem:[#allocation2 + $0xc4] sm:$0xf]
    %v839 = vunpack.c.l.bf16 %v835
    %v840 = vunpack.c.l.bf16 %v836
    %v841 = vunpack.c.l.bf16 %v837
    %v842 = vunpack.c.l.bf16 %v838
    %v843 = vld [vmem:[#allocation2 + $0xc8] sm:$0x1]
    %v844 = vunpack.c.l.bf16 %v843
    %v845 = vlaneseq
    %v846 = vshrl.u32 %v845, 7
    %v847 = vsub.s32 0, %v846
    %v848 = vrot.slane %v844, %v847
    %v850 = vsel %vm69, %v822, 0
    %v853 = vsel %vm69, %v823, 0
    %855 = vmatprep.subr.mxu0 0.0
    %856 = vmatpush1.msra.mxu0 0.0
    %857 = vmatprep.subr.mxu0 0.0
    %858 = vmatpush1.msra.mxu0 0.0
    %859 = vmatprep.subr.mxu0 0.0
    %860 = vmatpush1.msra.mxu0 0.0
    %861 = vmatprep.subr.mxu0 0.0
    %862 = vmatpush1.msra.mxu0 0.0
    %863 = vmatprep.subr.mxu0 0.0
    %864 = vmatpush1.msra.mxu0 0.0
    %865 = vmatprep.subr.mxu0 0.0
    %866 = vmatpush1.msra.mxu0 0.0
    %867 = vmatprep.subr.mxu0 0.0
    %868 = vmatpush1.msra.mxu0 0.0
    %869 = vmatprep.subr.mxu0 0.0
    %870 = vmatpush1.msra.mxu0 0.0
    %871 = vmatprep.subr.mxu0 0.0
    %872 = vmatpush1.msra.mxu0 0.0
    %873 = vmatprep.subr.mxu0 0.0
    %874 = vmatpush1.msra.mxu0 0.0
    %875 = vmatprep.subr.mxu0 0.0
    %876 = vmatpush1.msra.mxu0 0.0
    %877 = vmatprep.subr.mxu0 0.0
    %878 = vmatpush1.msra.mxu0 0.0
    %879 = vmatprep.subr.mxu0 0.0
    %880 = vmatpush1.msra.mxu0 %v842
    %881 = vmatprep.subr.mxu0 0.0
    %882 = vmatpush1.msra.mxu0 %v841
    %883 = vmatprep.subr.mxu0 0.0
    %884 = vmatpush1.msra.mxu0 %v840
    %885 = vmatprep.subr.mxu0 0.0
    %886 = vmatpush1.msra.mxu0 %v839
    %887 = vmatprep.subr.mxu0 0.0
    %888 = vmatpush2.msra.mxu0 0.0
    %889 = vmatprep.subr.mxu0 0.0
    %890 = vmatpush2.msra.mxu0 0.0
    %891 = vmatprep.subr.mxu0 0.0
    %892 = vmatpush2.msra.mxu0 0.0
    %893 = vmatprep.subr.mxu0 0.0
    %894 = vmatpush2.msra.mxu0 0.0
    %895 = vmatprep.subr.mxu0 0.0
    %896 = vmatpush2.msra.mxu0 0.0
    %897 = vmatprep.subr.mxu0 0.0
    %898 = vmatpush2.msra.mxu0 0.0
    %899 = vmatprep.subr.mxu0 0.0
    %900 = vmatpush2.msra.mxu0 0.0
    %901 = vmatprep.subr.mxu0 0.0
    %902 = vmatpush2.msra.mxu0 0.0
    %903 = vmatprep.subr.mxu0 0.0
    %904 = vmatpush2.msra.mxu0 0.0
    %905 = vmatprep.subr.mxu0 0.0
    %906 = vmatpush2.msra.mxu0 0.0
    %907 = vmatprep.subr.mxu0 0.0
    %908 = vmatpush2.msra.mxu0 0.0
    %909 = vmatprep.subr.mxu0 0.0
    %910 = vmatpush2.msra.mxu0 0.0
    %911 = vmatprep.subr.mxu0 0.0
    %912 = vmatpush2.msra.mxu0 0.0
    %913 = vmatprep.subr.mxu0 0.0
    %914 = vmatpush2.msra.mxu0 0.0
    %915 = vmatprep.subr.mxu0 0.0
    %916 = vmatpush2.msra.mxu0 0.0
    %917 = vmatprep.subr.mxu0 0.0
    %918 = vmatpush2.msra.mxu0 0.0
    %919 = vmatprep.mubr.f32.mxu0 0.0
    %920 = vmatmul.mubr.f32.gmra.mxu0 %v850
    %v921 = vpop.f32.mrf.mxu0
    %v922 = vadd.f32 %v848, %v921
    %v923 = vpop.f32.mrf.mxu0
    %924 = vmatprep.mubr.f32.mxu0 0.0
    %925 = vmatmul.mubr.f32.gmra.mxu0 %v853
    %v926 = vpop.f32.mrf.mxu0
    %v927 = vadd.f32 %v848, %v926
    %v928 = vpop.f32.mrf.mxu0
    %929 = vdwg.mxu0
    %v930 = vld [vmem:[#allocation2 + $0xcc] sm:$0xf]
    %v931 = vld [vmem:[#allocation2 + $0xd0] sm:$0xf]
    %v932 = vld [vmem:[#allocation2 + $0xd4] sm:$0xf]
    %v933 = vld [vmem:[#allocation2 + $0xd8] sm:$0xf]
    %v934 = vunpack.c.l.bf16 %v930
    %v935 = vunpack.c.l.bf16 %v931
    %v936 = vunpack.c.l.bf16 %v932
    %v937 = vunpack.c.l.bf16 %v933
    %v938 = vld [vmem:[#allocation2 + $0xdc] sm:$0x1]
    %v939 = vunpack.c.l.bf16 %v938
    %v940 = vlaneseq
    %v941 = vshrl.u32 %v940, 7
    %v942 = vsub.s32 0, %v941
    %v943 = vrot.slane %v939, %v942
    %v945 = vsel %vm69, %v829, 0
    %v948 = vsel %vm69, %v830, 0
    %950 = vmatprep.subr.mxu0 0.0
    %951 = vmatpush1.msra.mxu0 0.0
    %952 = vmatprep.subr.mxu0 0.0
    %953 = vmatpush1.msra.mxu0 0.0
    %954 = vmatprep.subr.mxu0 0.0
    %955 = vmatpush1.msra.mxu0 0.0
    %956 = vmatprep.subr.mxu0 0.0
    %957 = vmatpush1.msra.mxu0 0.0
    %958 = vmatprep.subr.mxu0 0.0
    %959 = vmatpush1.msra.mxu0 0.0
    %960 = vmatprep.subr.mxu0 0.0
    %961 = vmatpush1.msra.mxu0 0.0
    %962 = vmatprep.subr.mxu0 0.0
    %963 = vmatpush1.msra.mxu0 0.0
    %964 = vmatprep.subr.mxu0 0.0
    %965 = vmatpush1.msra.mxu0 0.0
    %966 = vmatprep.subr.mxu0 0.0
    %967 = vmatpush1.msra.mxu0 0.0
    %968 = vmatprep.subr.mxu0 0.0
    %969 = vmatpush1.msra.mxu0 0.0
    %970 = vmatprep.subr.mxu0 0.0
    %971 = vmatpush1.msra.mxu0 0.0
    %972 = vmatprep.subr.mxu0 0.0
    %973 = vmatpush1.msra.mxu0 0.0
    %974 = vmatprep.subr.mxu0 0.0
    %975 = vmatpush1.msra.mxu0 %v937
    %976 = vmatprep.subr.mxu0 0.0
    %977 = vmatpush1.msra.mxu0 %v936
    %978 = vmatprep.subr.mxu0 0.0
    %979 = vmatpush1.msra.mxu0 %v935
    %980 = vmatprep.subr.mxu0 0.0
    %981 = vmatpush1.msra.mxu0 %v934
    %982 = vmatprep.subr.mxu0 0.0
    %983 = vmatpush2.msra.mxu0 0.0
    %984 = vmatprep.subr.mxu0 0.0
    %985 = vmatpush2.msra.mxu0 0.0
    %986 = vmatprep.subr.mxu0 0.0
    %987 = vmatpush2.msra.mxu0 0.0
    %988 = vmatprep.subr.mxu0 0.0
    %989 = vmatpush2.msra.mxu0 0.0
    %990 = vmatprep.subr.mxu0 0.0
    %991 = vmatpush2.msra.mxu0 0.0
    %992 = vmatprep.subr.mxu0 0.0
    %993 = vmatpush2.msra.mxu0 0.0
    %994 = vmatprep.subr.mxu0 0.0
    %995 = vmatpush2.msra.mxu0 0.0
    %996 = vmatprep.subr.mxu0 0.0
    %997 = vmatpush2.msra.mxu0 0.0
    %998 = vmatprep.subr.mxu0 0.0
    %999 = vmatpush2.msra.mxu0 0.0
    %1000 = vmatprep.subr.mxu0 0.0
    %1001 = vmatpush2.msra.mxu0 0.0
    %1002 = vmatprep.subr.mxu0 0.0
    %1003 = vmatpush2.msra.mxu0 0.0
    %1004 = vmatprep.subr.mxu0 0.0
    %1005 = vmatpush2.msra.mxu0 0.0
    %1006 = vmatprep.subr.mxu0 0.0
    %1007 = vmatpush2.msra.mxu0 0.0
    %1008 = vmatprep.subr.mxu0 0.0
    %1009 = vmatpush2.msra.mxu0 0.0
    %1010 = vmatprep.subr.mxu0 0.0
    %1011 = vmatpush2.msra.mxu0 0.0
    %1012 = vmatprep.subr.mxu0 0.0
    %1013 = vmatpush2.msra.mxu0 0.0
    %1014 = vmatprep.mubr.f32.mxu0 0.0
    %1015 = vmatmul.mubr.f32.gmra.mxu0 %v945
    %v1016 = vpop.f32.mrf.mxu0
    %v1017 = vadd.f32 %v943, %v1016
    %v1018 = vpop.f32.mrf.mxu0
    %1019 = vmatprep.mubr.f32.mxu0 0.0
    %1020 = vmatmul.mubr.f32.gmra.mxu0 %v948
    %v1021 = vpop.f32.mrf.mxu0
    %v1022 = vadd.f32 %v943, %v1021
    %v1023 = vpop.f32.mrf.mxu0
    %1024 = vdwg.mxu0
    %v1026 = vsel %vm69, %v922, 0
    %v1029 = vsel %vm69, %v927, 0
    %v1032 = vsel %vm69, %v1017, 0
    %v1035 = vsel %vm69, %v1022, 0
    %1037 = vmatprep.subr.mxu0 0.0
    %1038 = vmatpush1.xpose.msra.mxu0 0.0
    %1039 = vmatprep.subr.mxu0 0.0
    %1040 = vmatpush1.xpose.msra.mxu0 0.0
    %1041 = vmatprep.subr.mxu0 0.0
    %1042 = vmatpush1.xpose.msra.mxu0 0.0
    %1043 = vmatprep.subr.mxu0 0.0
    %1044 = vmatpush1.xpose.msra.mxu0 0.0
    %1045 = vmatprep.subr.mxu0 0.0
    %1046 = vmatpush1.xpose.msra.mxu0 0.0
    %1047 = vmatprep.subr.mxu0 0.0
    %1048 = vmatpush1.xpose.msra.mxu0 0.0
    %1049 = vmatprep.subr.mxu0 0.0
    %1050 = vmatpush1.xpose.msra.mxu0 0.0
    %1051 = vmatprep.subr.mxu0 0.0
    %1052 = vmatpush1.xpose.msra.mxu0 0.0
    %1053 = vmatprep.subr.mxu0 0.0
    %1054 = vmatpush1.xpose.msra.mxu0 0.0
    %1055 = vmatprep.subr.mxu0 0.0
    %1056 = vmatpush1.xpose.msra.mxu0 0.0
    %1057 = vmatprep.subr.mxu0 0.0
    %1058 = vmatpush1.xpose.msra.mxu0 0.0
    %1059 = vmatprep.subr.mxu0 0.0
    %1060 = vmatpush1.xpose.msra.mxu0 0.0
    %1061 = vmatprep.subr.mxu0 0.0
    %1062 = vmatpush1.xpose.msra.mxu0 0.0
    %1063 = vmatprep.subr.mxu0 0.0
    %1064 = vmatpush1.xpose.msra.mxu0 0.0
    %1065 = vmatprep.subr.mxu0 0.0
    %1066 = vmatpush1.xpose.msra.mxu0 %v1035
    %1067 = vmatprep.subr.mxu0 0.0
    %1068 = vmatpush1.xpose.msra.mxu0 %v1032
    %1069 = vmatprep.subr.mxu0 0.0
    %1070 = vmatpush2.xpose.msra.mxu0 0.0
    %1071 = vmatprep.subr.mxu0 0.0
    %1072 = vmatpush2.xpose.msra.mxu0 0.0
    %1073 = vmatprep.subr.mxu0 0.0
    %1074 = vmatpush2.xpose.msra.mxu0 0.0
    %1075 = vmatprep.subr.mxu0 0.0
    %1076 = vmatpush2.xpose.msra.mxu0 0.0
    %1077 = vmatprep.subr.mxu0 0.0
    %1078 = vmatpush2.xpose.msra.mxu0 0.0
    %1079 = vmatprep.subr.mxu0 0.0
    %1080 = vmatpush2.xpose.msra.mxu0 0.0
    %1081 = vmatprep.subr.mxu0 0.0
    %1082 = vmatpush2.xpose.msra.mxu0 0.0
    %1083 = vmatprep.subr.mxu0 0.0
    %1084 = vmatpush2.xpose.msra.mxu0 0.0
    %1085 = vmatprep.subr.mxu0 0.0
    %1086 = vmatpush2.xpose.msra.mxu0 0.0
    %1087 = vmatprep.subr.mxu0 0.0
    %1088 = vmatpush2.xpose.msra.mxu0 0.0
    %1089 = vmatprep.subr.mxu0 0.0
    %1090 = vmatpush2.xpose.msra.mxu0 0.0
    %1091 = vmatprep.subr.mxu0 0.0
    %1092 = vmatpush2.xpose.msra.mxu0 0.0
    %1093 = vmatprep.subr.mxu0 0.0
    %1094 = vmatpush2.xpose.msra.mxu0 0.0
    %1095 = vmatprep.subr.mxu0 0.0
    %1096 = vmatpush2.xpose.msra.mxu0 0.0
    %1097 = vmatprep.subr.mxu0 0.0
    %1098 = vmatpush2.xpose.msra.mxu0 0.0
    %1099 = vmatprep.subr.mxu0 0.0
    %1100 = vmatpush2.xpose.msra.mxu0 0.0
    %1101 = vmatprep.mubr.f32.mxu0 0.0
    %1102 = vmatmul.mubr.f32.gmra.mxu0 %v1026
    %v1103 = vpop.f32.mrf.mxu0
    %v1104 = vadd.f32 0.0, %v1103
    %v1105 = vpop.f32.mrf.mxu0
    %1106 = vmatprep.mubr.f32.mxu0 0.0
    %1107 = vmatmul.mubr.f32.gmra.mxu0 %v1029
    %v1108 = vpop.f32.mrf.mxu0
    %v1109 = vadd.f32 0.0, %v1108
    %v1110 = vpop.f32.mrf.mxu0
    %1111 = vdwg.mxu0
    %v1112 = vmul.f32 %v1104, 0.17677669
    %v1113 = vmul.f32 %v1109, 0.17677669
    %v1114 = vadd.f32 %v1112, %v833
    %v1115 = vadd.f32 %v1113, %v834
    %v1116 = vsel %vm320, %v1114, -inf
    %1117 = vmax.xlane.f32.xlu0 %v1116
    %v1118 = vpop.xlane.xlu0 %1117
    %v1119 = vsel %vm320, %v1115, -inf
    %1120 = vmax.xlane.f32.xlu0 %v1119
    %v1121 = vpop.xlane.xlu0 %1120
    %v1122 = vsub.f32 %v1114, %v1118
    %v1123 = vsub.f32 %v1115, %v1121
    %v1124 = vmul.f32 %v1122, 1.442695
    %v1125 = vpow.pop %v1124
    %v1126 = vmul.f32 %v1123, 1.442695
    %v1127 = vpow.pop %v1126
    %v1128 = vsel %vm320, %v1125, 0.0
    %1129 = vadd.xlane.f32.xlu0 %v1128
    %v1130 = vpop.xlane.xlu0 %1129
    %v1131 = vsel %vm320, %v1127, 0.0
    %1132 = vadd.xlane.f32.xlu0 %v1131
    %v1133 = vpop.xlane.xlu0 %1132
    %v1134 = vrcp.pop %v1130
    %v1135 = vrcp.pop %v1133
    %v1136 = vmul.f32 %v1125, %v1134
    %v1137 = vmul.f32 %v1127, %v1135
    %1138 = vrot.lane.b32.xlu0 %v1017, 96
    %v1139 = vpop.permute.xlu0 %1138
    %1140 = vrot.lane.b32.xlu0 %v1022, 96
    %v1141 = vpop.permute.xlu0 %1140
    %v1145 = vsel %vm320, %v1136, 0
    %v1148 = vsel %vm320, %v1137, 0
    %1150 = vmatprep.subr.mxu0 0.0
    %1151 = vmatpush1.msra.mxu0 0.0
    %1152 = vmatprep.subr.mxu0 0.0
    %1153 = vmatpush1.msra.mxu0 0.0
    %1154 = vmatprep.subr.mxu0 0.0
    %1155 = vmatpush1.msra.mxu0 0.0
    %1156 = vmatprep.subr.mxu0 0.0
    %1157 = vmatpush1.msra.mxu0 0.0
    %1158 = vmatprep.subr.mxu0 0.0
    %1159 = vmatpush1.msra.mxu0 0.0
    %1160 = vmatprep.subr.mxu0 0.0
    %1161 = vmatpush1.msra.mxu0 0.0
    %1162 = vmatprep.subr.mxu0 0.0
    %1163 = vmatpush1.msra.mxu0 0.0
    %1164 = vmatprep.subr.mxu0 0.0
    %1165 = vmatpush1.msra.mxu0 0.0
    %1166 = vmatprep.subr.mxu0 0.0
    %1167 = vmatpush1.msra.mxu0 0.0
    %1168 = vmatprep.subr.mxu0 0.0
    %1169 = vmatpush1.msra.mxu0 0.0
    %1170 = vmatprep.subr.mxu0 0.0
    %1171 = vmatpush1.msra.mxu0 0.0
    %1172 = vmatprep.subr.mxu0 0.0
    %1173 = vmatpush1.msra.mxu0 0.0
    %1174 = vmatprep.subr.mxu0 0.0
    %1175 = vmatpush1.msra.mxu0 0.0
    %1176 = vmatprep.subr.mxu0 0.0
    %1177 = vmatpush1.msra.mxu0 0.0
    %1178 = vmatprep.subr.mxu0 0.0
    %1179 = vmatpush1.msra.mxu0 %v1141
    %1180 = vmatprep.subr.mxu0 0.0
    %1181 = vmatpush1.msra.mxu0 %v1139
    %1182 = vmatprep.subr.mxu0 0.0
    %1183 = vmatpush2.msra.mxu0 0.0
    %1184 = vmatprep.subr.mxu0 0.0
    %1185 = vmatpush2.msra.mxu0 0.0
    %1186 = vmatprep.subr.mxu0 0.0
    %1187 = vmatpush2.msra.mxu0 0.0
    %1188 = vmatprep.subr.mxu0 0.0
    %1189 = vmatpush2.msra.mxu0 0.0
    %1190 = vmatprep.subr.mxu0 0.0
    %1191 = vmatpush2.msra.mxu0 0.0
    %1192 = vmatprep.subr.mxu0 0.0
    %1193 = vmatpush2.msra.mxu0 0.0
    %1194 = vmatprep.subr.mxu0 0.0
    %1195 = vmatpush2.msra.mxu0 0.0
    %1196 = vmatprep.subr.mxu0 0.0
    %1197 = vmatpush2.msra.mxu0 0.0
    %1198 = vmatprep.subr.mxu0 0.0
    %1199 = vmatpush2.msra.mxu0 0.0
    %1200 = vmatprep.subr.mxu0 0.0
    %1201 = vmatpush2.msra.mxu0 0.0
    %1202 = vmatprep.subr.mxu0 0.0
    %1203 = vmatpush2.msra.mxu0 0.0
    %1204 = vmatprep.subr.mxu0 0.0
    %1205 = vmatpush2.msra.mxu0 0.0
    %1206 = vmatprep.subr.mxu0 0.0
    %1207 = vmatpush2.msra.mxu0 0.0
    %1208 = vmatprep.subr.mxu0 0.0
    %1209 = vmatpush2.msra.mxu0 0.0
    %1210 = vmatprep.subr.mxu0 0.0
    %1211 = vmatpush2.msra.mxu0 0.0
    %1212 = vmatprep.subr.mxu0 0.0
    %1213 = vmatpush2.msra.mxu0 0.0
    %1214 = vmatprep.mubr.f32.mxu0 0.0
    %1215 = vmatmul.mubr.f32.gmra.mxu0 %v1145
    %v1216 = vpop.f32.mrf.mxu0
    %v1217 = vadd.f32 0.0, %v1216
    %v1218 = vpop.f32.mrf.mxu0
    %1219 = vmatprep.mubr.f32.mxu0 0.0
    %1220 = vmatmul.mubr.f32.gmra.mxu0 %v1148
    %v1221 = vpop.f32.mrf.mxu0
    %v1222 = vadd.f32 0.0, %v1221
    %v1223 = vpop.f32.mrf.mxu0
    %1224 = vdwg.mxu0
    %v1225 = vld [vmem:[#allocation2 + $0xe0] sm:$0xf]
    %v1226 = vld [vmem:[#allocation2 + $0xe4] sm:$0xf]
    %v1227 = vld [vmem:[#allocation2 + $0xe8] sm:$0xf]
    %v1228 = vld [vmem:[#allocation2 + $0xec] sm:$0xf]
    %v1229 = vunpack.c.l.bf16 %v1225
    %v1230 = vunpack.c.l.bf16 %v1226
    %v1231 = vunpack.c.l.bf16 %v1227
    %v1232 = vunpack.c.l.bf16 %v1228
    %v1233 = vld [vmem:[#allocation2 + $0xf0] sm:$0x1]
    %v1234 = vunpack.c.l.bf16 %v1233
    %v1235 = vlaneseq
    %v1236 = vshrl.u32 %v1235, 7
    %v1237 = vsub.s32 0, %v1236
    %v1238 = vrot.slane %v1234, %v1237
    %v1240 = vsel %vm69, %v1217, 0
    %v1243 = vsel %vm69, %v1222, 0
    %1245 = vmatprep.subr.mxu0 0.0
    %1246 = vmatpush1.msra.mxu0 0.0
    %1247 = vmatprep.subr.mxu0 0.0
    %1248 = vmatpush1.msra.mxu0 0.0
    %1249 = vmatprep.subr.mxu0 0.0
    %1250 = vmatpush1.msra.mxu0 0.0
    %1251 = vmatprep.subr.mxu0 0.0
    %1252 = vmatpush1.msra.mxu0 0.0
    %1253 = vmatprep.subr.mxu0 0.0
    %1254 = vmatpush1.msra.mxu0 0.0
    %1255 = vmatprep.subr.mxu0 0.0
    %1256 = vmatpush1.msra.mxu0 0.0
    %1257 = vmatprep.subr.mxu0 0.0
    %1258 = vmatpush1.msra.mxu0 0.0
    %1259 = vmatprep.subr.mxu0 0.0
    %1260 = vmatpush1.msra.mxu0 0.0
    %1261 = vmatprep.subr.mxu0 0.0
    %1262 = vmatpush1.msra.mxu0 0.0
    %1263 = vmatprep.subr.mxu0 0.0
    %1264 = vmatpush1.msra.mxu0 0.0
    %1265 = vmatprep.subr.mxu0 0.0
    %1266 = vmatpush1.msra.mxu0 0.0
    %1267 = vmatprep.subr.mxu0 0.0
    %1268 = vmatpush1.msra.mxu0 0.0
    %1269 = vmatprep.subr.mxu0 0.0
    %1270 = vmatpush1.msra.mxu0 %v1232
    %1271 = vmatprep.subr.mxu0 0.0
    %1272 = vmatpush1.msra.mxu0 %v1231
    %1273 = vmatprep.subr.mxu0 0.0
    %1274 = vmatpush1.msra.mxu0 %v1230
    %1275 = vmatprep.subr.mxu0 0.0
    %1276 = vmatpush1.msra.mxu0 %v1229
    %1277 = vmatprep.subr.mxu0 0.0
    %1278 = vmatpush2.msra.mxu0 0.0
    %1279 = vmatprep.subr.mxu0 0.0
    %1280 = vmatpush2.msra.mxu0 0.0
    %1281 = vmatprep.subr.mxu0 0.0
    %1282 = vmatpush2.msra.mxu0 0.0
    %1283 = vmatprep.subr.mxu0 0.0
    %1284 = vmatpush2.msra.mxu0 0.0
    %1285 = vmatprep.subr.mxu0 0.0
    %1286 = vmatpush2.msra.mxu0 0.0
    %1287 = vmatprep.subr.mxu0 0.0
    %1288 = vmatpush2.msra.mxu0 0.0
    %1289 = vmatprep.subr.mxu0 0.0
    %1290 = vmatpush2.msra.mxu0 0.0
    %1291 = vmatprep.subr.mxu0 0.0
    %1292 = vmatpush2.msra.mxu0 0.0
    %1293 = vmatprep.subr.mxu0 0.0
    %1294 = vmatpush2.msra.mxu0 0.0
    %1295 = vmatprep.subr.mxu0 0.0
    %1296 = vmatpush2.msra.mxu0 0.0
    %1297 = vmatprep.subr.mxu0 0.0
    %1298 = vmatpush2.msra.mxu0 0.0
    %1299 = vmatprep.subr.mxu0 0.0
    %1300 = vmatpush2.msra.mxu0 0.0
    %1301 = vmatprep.subr.mxu0 0.0
    %1302 = vmatpush2.msra.mxu0 0.0
    %1303 = vmatprep.subr.mxu0 0.0
    %1304 = vmatpush2.msra.mxu0 0.0
    %1305 = vmatprep.subr.mxu0 0.0
    %1306 = vmatpush2.msra.mxu0 0.0
    %1307 = vmatprep.subr.mxu0 0.0
    %1308 = vmatpush2.msra.mxu0 0.0
    %1309 = vmatprep.mubr.f32.mxu0 0.0
    %1310 = vmatmul.mubr.f32.gmra.mxu0 %v1240
    %v1311 = vpop.f32.mrf.mxu0
    %v1312 = vadd.f32 %v1238, %v1311
    %v1313 = vpop.f32.mrf.mxu0
    %1314 = vmatprep.mubr.f32.mxu0 0.0
    %1315 = vmatmul.mubr.f32.gmra.mxu0 %v1243
    %v1316 = vpop.f32.mrf.mxu0
    %v1317 = vadd.f32 %v1238, %v1316
    %v1318 = vpop.f32.mrf.mxu0
    %1319 = vdwg.mxu0
    %v1320 = vadd.f32 %v1312, %v822
    %v1321 = vadd.f32 %v1317, %v823
    %v1322 = vld [vmem:[#allocation2 + $0x14c] sm:$0x1]
    %v1323 = vunpack.c.l.bf16 %v1322
    %v1324 = vld [vmem:[#allocation2 + $0x150] sm:$0x1]
    %v1325 = vunpack.c.l.bf16 %v1324
    %v1326 = vsel %vm69, %v1320, 0.0
    %1327 = vadd.xlane.f32.xlu0 %v1326
    %v1328 = vpop.xlane.xlu0 %1327
    %v1329 = vsel %vm69, %v1321, 0.0
    %1330 = vadd.xlane.f32.xlu0 %v1329
    %v1331 = vpop.xlane.xlu0 %1330
    %v1332 = vmul.f32 %v1328, %v537
    %v1333 = vmul.f32 %v1331, %v537
    %v1334 = vsub.f32 %v1320, %v1332
    %v1335 = vsub.f32 %v1321, %v1333
    %v1336 = vmul.f32 %v1334, %v1334
    %v1337 = vmul.f32 %v1335, %v1335
    %v1338 = vsel %vm69, %v1336, 0.0
    %1339 = vadd.xlane.f32.xlu0 %v1338
    %v1340 = vpop.xlane.xlu0 %1339
    %v1341 = vsel %vm69, %v1337, 0.0
    %1342 = vadd.xlane.f32.xlu0 %v1341
    %v1343 = vpop.xlane.xlu0 %1342
    %v1344 = vmul.f32 %v1340, %v537
    %v1345 = vmul.f32 %v1343, %v537
    %v1346 = vadd.f32 %v1344, 1e-05
    %v1347 = vadd.f32 %v1345, 1e-05
    %v1348 = vrsqrt.pop %v1346
    %v1349 = vrsqrt.pop %v1347
    %v1350 = vmul.f32 %v1334, %v1348
    %v1351 = vmul.f32 %v1335, %v1349
    %v1352 = vlaneseq
    %v1353 = vshrl.u32 %v1352, 7
    %v1354 = vsub.s32 0, %v1353
    %v1355 = vrot.slane %v1323, %v1354
    %v1356 = vmul.f32 %v1350, %v1355
    %v1357 = vmul.f32 %v1351, %v1355
    %v1358 = vlaneseq
    %v1359 = vshrl.u32 %v1358, 7
    %v1360 = vsub.s32 0, %v1359
    %v1361 = vrot.slane %v1325, %v1360
    %v1362 = vadd.f32 %v1356, %v1361
    %v1363 = vadd.f32 %v1357, %v1361
    %v1364 = vld [vmem:[#allocation2 + $0xf4] sm:$0xf]
    %v1365 = vld [vmem:[#allocation2 + $0xf8] sm:$0xf]
    %v1366 = vld [vmem:[#allocation2 + $0xfc] sm:$0xf]
    %v1367 = vld [vmem:[#allocation2 + $0x100] sm:$0xf]
    %v1368 = vunpack.c.l.bf16 %v1364
    %v1369 = vunpack.c.l.bf16 %v1365
    %v1370 = vunpack.c.l.bf16 %v1366
    %v1371 = vunpack.c.l.bf16 %v1367
    %v1372 = vld [vmem:[#allocation2 + $0x104] sm:$0x1]
    %v1373 = vunpack.c.l.bf16 %v1372
    %v1374 = vlaneseq
    %v1375 = vshrl.u32 %v1374, 7
    %v1376 = vsub.s32 0, %v1375
    %v1377 = vrot.slane %v1373, %v1376
    %v1379 = vsel %vm69, %v1362, 0
    %v1382 = vsel %vm69, %v1363, 0
    %1384 = vmatprep.subr.mxu0 0.0
    %1385 = vmatpush1.msra.mxu0 0.0
    %1386 = vmatprep.subr.mxu0 0.0
    %1387 = vmatpush1.msra.mxu0 0.0
    %1388 = vmatprep.subr.mxu0 0.0
    %1389 = vmatpush1.msra.mxu0 0.0
    %1390 = vmatprep.subr.mxu0 0.0
    %1391 = vmatpush1.msra.mxu0 0.0
    %1392 = vmatprep.subr.mxu0 0.0
    %1393 = vmatpush1.msra.mxu0 0.0
    %1394 = vmatprep.subr.mxu0 0.0
    %1395 = vmatpush1.msra.mxu0 0.0
    %1396 = vmatprep.subr.mxu0 0.0
    %1397 = vmatpush1.msra.mxu0 0.0
    %1398 = vmatprep.subr.mxu0 0.0
    %1399 = vmatpush1.msra.mxu0 0.0
    %1400 = vmatprep.subr.mxu0 0.0
    %1401 = vmatpush1.msra.mxu0 0.0
    %1402 = vmatprep.subr.mxu0 0.0
    %1403 = vmatpush1.msra.mxu0 0.0
    %1404 = vmatprep.subr.mxu0 0.0
    %1405 = vmatpush1.msra.mxu0 0.0
    %1406 = vmatprep.subr.mxu0 0.0
    %1407 = vmatpush1.msra.mxu0 0.0
    %1408 = vmatprep.subr.mxu0 0.0
    %1409 = vmatpush1.msra.mxu0 %v1371
    %1410 = vmatprep.subr.mxu0 0.0
    %1411 = vmatpush1.msra.mxu0 %v1370
    %1412 = vmatprep.subr.mxu0 0.0
    %1413 = vmatpush1.msra.mxu0 %v1369
    %1414 = vmatprep.subr.mxu0 0.0
    %1415 = vmatpush1.msra.mxu0 %v1368
    %1416 = vmatprep.subr.mxu0 0.0
    %1417 = vmatpush2.msra.mxu0 0.0
    %1418 = vmatprep.subr.mxu0 0.0
    %1419 = vmatpush2.msra.mxu0 0.0
    %1420 = vmatprep.subr.mxu0 0.0
    %1421 = vmatpush2.msra.mxu0 0.0
    %1422 = vmatprep.subr.mxu0 0.0
    %1423 = vmatpush2.msra.mxu0 0.0
    %1424 = vmatprep.subr.mxu0 0.0
    %1425 = vmatpush2.msra.mxu0 0.0
    %1426 = vmatprep.subr.mxu0 0.0
    %1427 = vmatpush2.msra.mxu0 0.0
    %1428 = vmatprep.subr.mxu0 0.0
    %1429 = vmatpush2.msra.mxu0 0.0
    %1430 = vmatprep.subr.mxu0 0.0
    %1431 = vmatpush2.msra.mxu0 0.0
    %1432 = vmatprep.subr.mxu0 0.0
    %1433 = vmatpush2.msra.mxu0 0.0
    %1434 = vmatprep.subr.mxu0 0.0
    %1435 = vmatpush2.msra.mxu0 0.0
    %1436 = vmatprep.subr.mxu0 0.0
    %1437 = vmatpush2.msra.mxu0 0.0
    %1438 = vmatprep.subr.mxu0 0.0
    %1439 = vmatpush2.msra.mxu0 0.0
    %1440 = vmatprep.subr.mxu0 0.0
    %1441 = vmatpush2.msra.mxu0 0.0
    %1442 = vmatprep.subr.mxu0 0.0
    %1443 = vmatpush2.msra.mxu0 0.0
    %1444 = vmatprep.subr.mxu0 0.0
    %1445 = vmatpush2.msra.mxu0 0.0
    %1446 = vmatprep.subr.mxu0 0.0
    %1447 = vmatpush2.msra.mxu0 0.0
    %1448 = vmatprep.mubr.f32.mxu0 0.0
    %1449 = vmatmul.mubr.f32.gmra.mxu0 %v1379
    %v1450 = vpop.f32.mrf.mxu0
    %v1451 = vadd.f32 %v1377, %v1450
    %v1452 = vpop.f32.mrf.mxu0
    %1453 = vmatprep.mubr.f32.mxu0 0.0
    %1454 = vmatmul.mubr.f32.gmra.mxu0 %v1382
    %v1455 = vpop.f32.mrf.mxu0
    %v1456 = vadd.f32 %v1377, %v1455
    %v1457 = vpop.f32.mrf.mxu0
    %1458 = vdwg.mxu0
    %v1459 = vmax.f32 %v1451, 0.0
    %v1460 = vmax.f32 %v1456, 0.0
    %v1461 = vld [vmem:[#allocation2 + $0x108] sm:$0xf]
    %v1462 = vld [vmem:[#allocation2 + $0x10c] sm:$0xf]
    %v1463 = vld [vmem:[#allocation2 + $0x110] sm:$0xf]
    %v1464 = vld [vmem:[#allocation2 + $0x114] sm:$0xf]
    %v1465 = vld [vmem:[#allocation2 + $0x118] sm:$0xf]
    %v1466 = vld [vmem:[#allocation2 + $0x11c] sm:$0xf]
    %v1467 = vld [vmem:[#allocation2 + $0x120] sm:$0xf]
    %v1468 = vld [vmem:[#allocation2 + $0x124] sm:$0xf]
    %v1469 = vld [vmem:[#allocation2 + $0x128] sm:$0xf]
    %v1470 = vld [vmem:[#allocation2 + $0x12c] sm:$0xf]
    %v1471 = vld [vmem:[#allocation2 + $0x130] sm:$0xf]
    %v1472 = vld [vmem:[#allocation2 + $0x134] sm:$0xf]
    %v1473 = vld [vmem:[#allocation2 + $0x138] sm:$0xf]
    %v1474 = vld [vmem:[#allocation2 + $0x13c] sm:$0xf]
    %v1475 = vld [vmem:[#allocation2 + $0x140] sm:$0xf]
    %v1476 = vld [vmem:[#allocation2 + $0x144] sm:$0xf]
    %v1477 = vunpack.c.l.bf16 %v1461
    %v1478 = vunpack.c.l.bf16 %v1462
    %v1479 = vunpack.c.l.bf16 %v1463
    %v1480 = vunpack.c.l.bf16 %v1464
    %v1481 = vunpack.c.l.bf16 %v1465
    %v1482 = vunpack.c.l.bf16 %v1466
    %v1483 = vunpack.c.l.bf16 %v1467
    %v1484 = vunpack.c.l.bf16 %v1468
    %v1485 = vunpack.c.l.bf16 %v1469
    %v1486 = vunpack.c.l.bf16 %v1470
    %v1487 = vunpack.c.l.bf16 %v1471
    %v1488 = vunpack.c.l.bf16 %v1472
    %v1489 = vunpack.c.l.bf16 %v1473
    %v1490 = vunpack.c.l.bf16 %v1474
    %v1491 = vunpack.c.l.bf16 %v1475
    %v1492 = vunpack.c.l.bf16 %v1476
    %v1493 = vld [vmem:[#allocation2 + $0x148] sm:$0x1]
    %v1494 = vunpack.c.l.bf16 %v1493
    %v1495 = vlaneseq
    %v1496 = vshrl.u32 %v1495, 7
    %v1497 = vsub.s32 0, %v1496
    %v1498 = vrot.slane %v1494, %v1497
    %1499 = vmatprep.subr.mxu0 0.0
    %1500 = vmatpush1.msra.mxu0 %v1492
    %1501 = vmatprep.subr.mxu0 0.0
    %1502 = vmatpush1.msra.mxu0 %v1491
    %1503 = vmatprep.subr.mxu0 0.0
    %1504 = vmatpush1.msra.mxu0 %v1490
    %1505 = vmatprep.subr.mxu0 0.0
    %1506 = vmatpush1.msra.mxu0 %v1489
    %1507 = vmatprep.subr.mxu0 0.0
    %1508 = vmatpush1.msra.mxu0 %v1488
    %1509 = vmatprep.subr.mxu0 0.0
    %1510 = vmatpush1.msra.mxu0 %v1487
    %1511 = vmatprep.subr.mxu0 0.0
    %1512 = vmatpush1.msra.mxu0 %v1486
    %1513 = vmatprep.subr.mxu0 0.0
    %1514 = vmatpush1.msra.mxu0 %v1485
    %1515 = vmatprep.subr.mxu0 0.0
    %1516 = vmatpush1.msra.mxu0 %v1484
    %1517 = vmatprep.subr.mxu0 0.0
    %1518 = vmatpush1.msra.mxu0 %v1483
    %1519 = vmatprep.subr.mxu0 0.0
    %1520 = vmatpush1.msra.mxu0 %v1482
    %1521 = vmatprep.subr.mxu0 0.0
    %1522 = vmatpush1.msra.mxu0 %v1481
    %1523 = vmatprep.subr.mxu0 0.0
    %1524 = vmatpush1.msra.mxu0 %v1480
    %1525 = vmatprep.subr.mxu0 0.0
    %1526 = vmatpush1.msra.mxu0 %v1479
    %1527 = vmatprep.subr.mxu0 0.0
    %1528 = vmatpush1.msra.mxu0 %v1478
    %1529 = vmatprep.subr.mxu0 0.0
    %1530 = vmatpush1.msra.mxu0 %v1477
    %1531 = vmatprep.subr.mxu0 0.0
    %1532 = vmatpush2.msra.mxu0 0.0
    %1533 = vmatprep.subr.mxu0 0.0
    %1534 = vmatpush2.msra.mxu0 0.0
    %1535 = vmatprep.subr.mxu0 0.0
    %1536 = vmatpush2.msra.mxu0 0.0
    %1537 = vmatprep.subr.mxu0 0.0
    %1538 = vmatpush2.msra.mxu0 0.0
    %1539 = vmatprep.subr.mxu0 0.0
    %1540 = vmatpush2.msra.mxu0 0.0
    %1541 = vmatprep.subr.mxu0 0.0
    %1542 = vmatpush2.msra.mxu0 0.0
    %1543 = vmatprep.subr.mxu0 0.0
    %1544 = vmatpush2.msra.mxu0 0.0
    %1545 = vmatprep.subr.mxu0 0.0
    %1546 = vmatpush2.msra.mxu0 0.0
    %1547 = vmatprep.subr.mxu0 0.0
    %1548 = vmatpush2.msra.mxu0 0.0
    %1549 = vmatprep.subr.mxu0 0.0
    %1550 = vmatpush2.msra.mxu0 0.0
    %1551 = vmatprep.subr.mxu0 0.0
    %1552 = vmatpush2.msra.mxu0 0.0
    %1553 = vmatprep.subr.mxu0 0.0
    %1554 = vmatpush2.msra.mxu0 0.0
    %1555 = vmatprep.subr.mxu0 0.0
    %1556 = vmatpush2.msra.mxu0 0.0
    %1557 = vmatprep.subr.mxu0 0.0
    %1558 = vmatpush2.msra.mxu0 0.0
    %1559 = vmatprep.subr.mxu0 0.0
    %1560 = vmatpush2.msra.mxu0 0.0
    %1561 = vmatprep.subr.mxu0 0.0
    %1562 = vmatpush2.msra.mxu0 0.0
    %1563 = vmatprep.mubr.f32.mxu0 0.0
    %1564 = vmatmul.mubr.f32.gmra.mxu0 %v1459
    %v1565 = vpop.f32.mrf.mxu0
    %v1566 = vadd.f32 %v1498, %v1565
    %v1567 = vpop.f32.mrf.mxu0
    %1568 = vmatprep.mubr.f32.mxu0 0.0
    %1569 = vmatmul.mubr.f32.gmra.mxu0 %v1460
    %v1570 = vpop.f32.mrf.mxu0
    %v1571 = vadd.f32 %v1498, %v1570
    %v1572 = vpop.f32.mrf.mxu0
    %1573 = vdwg.mxu0
    %v1574 = vadd.f32 %v1362, %v1566
    %v1575 = vadd.f32 %v1363, %v1571
    %v1576 = vld [vmem:[#allocation2 + $0x154] sm:$0x1]
    %v1577 = vunpack.c.l.bf16 %v1576
    %v1578 = vld [vmem:[#allocation2 + $0x158] sm:$0x1]
    %v1579 = vunpack.c.l.bf16 %v1578
    %v1580 = vsel %vm69, %v1574, 0.0
    %1581 = vadd.xlane.f32.xlu0 %v1580
    %v1582 = vpop.xlane.xlu0 %1581
    %v1583 = vsel %vm69, %v1575, 0.0
    %1584 = vadd.xlane.f32.xlu0 %v1583
    %v1585 = vpop.xlane.xlu0 %1584
    %v1586 = vmul.f32 %v1582, %v537
    %v1587 = vmul.f32 %v1585, %v537
    %v1588 = vsub.f32 %v1574, %v1586
    %v1589 = vsub.f32 %v1575, %v1587
    %v1590 = vmul.f32 %v1588, %v1588
    %v1591 = vmul.f32 %v1589, %v1589
    %v1592 = vsel %vm69, %v1590, 0.0
    %1593 = vadd.xlane.f32.xlu0 %v1592
    %v1594 = vpop.xlane.xlu0 %1593
    %v1595 = vsel %vm69, %v1591, 0.0
    %1596 = vadd.xlane.f32.xlu0 %v1595
    %v1597 = vpop.xlane.xlu0 %1596
    %v1598 = vmul.f32 %v1594, %v537
    %v1599 = vmul.f32 %v1597, %v537
    %v1600 = vadd.f32 %v1598, 1e-05
    %v1601 = vadd.f32 %v1599, 1e-05
    %v1602 = vrsqrt.pop %v1600
    %v1603 = vrsqrt.pop %v1601
    %v1604 = vmul.f32 %v1588, %v1602
    %v1605 = vmul.f32 %v1589, %v1603
    %v1606 = vlaneseq
    %v1607 = vshrl.u32 %v1606, 7
    %v1608 = vsub.s32 0, %v1607
    %v1609 = vrot.slane %v1577, %v1608
    %v1610 = vmul.f32 %v1604, %v1609
    %v1611 = vmul.f32 %v1605, %v1609
    %v1612 = vlaneseq
    %v1613 = vshrl.u32 %v1612, 7
    %v1614 = vsub.s32 0, %v1613
    %v1615 = vrot.slane %v1579, %v1614
    %v1616 = vadd.f32 %v1610, %v1615
    %v1617 = vadd.f32 %v1611, %v1615
    %s1618 = scalar_lea.vmem [#allocation5], 32
    %v1619 = vld [vmem:[%s1618] sm:$0xff]
    %v1620 = vld [vmem:[%s1618 + $0x8] sm:$0xff]
    %v1621 = vsub.f32 %v1619, 1.0
    %v1622 = vsub.f32 %v1620, 1.0
    %v1623 = vmul.f32 %v1621, 1e+09
    %v1624 = vmul.f32 %v1622, 1e+09
    %v1625 = vld [vmem:[#allocation2 + $0x15c] sm:$0xf]
    %v1626 = vld [vmem:[#allocation2 + $0x160] sm:$0xf]
    %v1627 = vld [vmem:[#allocation2 + $0x164] sm:$0xf]
    %v1628 = vld [vmem:[#allocation2 + $0x168] sm:$0xf]
    %v1629 = vunpack.c.l.bf16 %v1625
    %v1630 = vunpack.c.l.bf16 %v1626
    %v1631 = vunpack.c.l.bf16 %v1627
    %v1632 = vunpack.c.l.bf16 %v1628
    %v1633 = vld [vmem:[#allocation2 + $0x16c] sm:$0x1]
    %v1634 = vunpack.c.l.bf16 %v1633
    %v1635 = vlaneseq
    %v1636 = vshrl.u32 %v1635, 7
    %v1637 = vsub.s32 0, %v1636
    %v1638 = vrot.slane %v1634, %v1637
    %v1640 = vsel %vm69, %v1616, 0
    %v1643 = vsel %vm69, %v1617, 0
    %1645 = vmatprep.subr.mxu0 0.0
    %1646 = vmatpush1.msra.mxu0 0.0
    %1647 = vmatprep.subr.mxu0 0.0
    %1648 = vmatpush1.msra.mxu0 0.0
    %1649 = vmatprep.subr.mxu0 0.0
    %1650 = vmatpush1.msra.mxu0 0.0
    %1651 = vmatprep.subr.mxu0 0.0
    %1652 = vmatpush1.msra.mxu0 0.0
    %1653 = vmatprep.subr.mxu0 0.0
    %1654 = vmatpush1.msra.mxu0 0.0
    %1655 = vmatprep.subr.mxu0 0.0
    %1656 = vmatpush1.msra.mxu0 0.0
    %1657 = vmatprep.subr.mxu0 0.0
    %1658 = vmatpush1.msra.mxu0 0.0
    %1659 = vmatprep.subr.mxu0 0.0
    %1660 = vmatpush1.msra.mxu0 0.0
    %1661 = vmatprep.subr.mxu0 0.0
    %1662 = vmatpush1.msra.mxu0 0.0
    %1663 = vmatprep.subr.mxu0 0.0
    %1664 = vmatpush1.msra.mxu0 0.0
    %1665 = vmatprep.subr.mxu0 0.0
    %1666 = vmatpush1.msra.mxu0 0.0
    %1667 = vmatprep.subr.mxu0 0.0
    %1668 = vmatpush1.msra.mxu0 0.0
    %1669 = vmatprep.subr.mxu0 0.0
    %1670 = vmatpush1.msra.mxu0 %v1632
    %1671 = vmatprep.subr.mxu0 0.0
    %1672 = vmatpush1.msra.mxu0 %v1631
    %1673 = vmatprep.subr.mxu0 0.0
    %1674 = vmatpush1.msra.mxu0 %v1630
    %1675 = vmatprep.subr.mxu0 0.0
    %1676 = vmatpush1.msra.mxu0 %v1629
    %1677 = vmatprep.subr.mxu0 0.0
    %1678 = vmatpush2.msra.mxu0 0.0
    %1679 = vmatprep.subr.mxu0 0.0
    %1680 = vmatpush2.msra.mxu0 0.0
    %1681 = vmatprep.subr.mxu0 0.0
    %1682 = vmatpush2.msra.mxu0 0.0
    %1683 = vmatprep.subr.mxu0 0.0
    %1684 = vmatpush2.msra.mxu0 0.0
    %1685 = vmatprep.subr.mxu0 0.0
    %1686 = vmatpush2.msra.mxu0 0.0
    %1687 = vmatprep.subr.mxu0 0.0
    %1688 = vmatpush2.msra.mxu0 0.0
    %1689 = vmatprep.subr.mxu0 0.0
    %1690 = vmatpush2.msra.mxu0 0.0
    %1691 = vmatprep.subr.mxu0 0.0
    %1692 = vmatpush2.msra.mxu0 0.0
    %1693 = vmatprep.subr.mxu0 0.0
    %1694 = vmatpush2.msra.mxu0 0.0
    %1695 = vmatprep.subr.mxu0 0.0
    %1696 = vmatpush2.msra.mxu0 0.0
    %1697 = vmatprep.subr.mxu0 0.0
    %1698 = vmatpush2.msra.mxu0 0.0
    %1699 = vmatprep.subr.mxu0 0.0
    %1700 = vmatpush2.msra.mxu0 0.0
    %1701 = vmatprep.subr.mxu0 0.0
    %1702 = vmatpush2.msra.mxu0 0.0
    %1703 = vmatprep.subr.mxu0 0.0
    %1704 = vmatpush2.msra.mxu0 0.0
    %1705 = vmatprep.subr.mxu0 0.0
    %1706 = vmatpush2.msra.mxu0 0.0
    %1707 = vmatprep.subr.mxu0 0.0
    %1708 = vmatpush2.msra.mxu0 0.0
    %1709 = vmatprep.mubr.f32.mxu0 0.0
    %1710 = vmatmul.mubr.f32.gmra.mxu0 %v1640
    %v1711 = vpop.f32.mrf.mxu0
    %v1712 = vadd.f32 %v1638, %v1711
    %v1713 = vpop.f32.mrf.mxu0
    %1714 = vmatprep.mubr.f32.mxu0 0.0
    %1715 = vmatmul.mubr.f32.gmra.mxu0 %v1643
    %v1716 = vpop.f32.mrf.mxu0
    %v1717 = vadd.f32 %v1638, %v1716
    %v1718 = vpop.f32.mrf.mxu0
    %1719 = vdwg.mxu0
    %1721 = vrot.lane.b32.xlu0 %v1712, 96
    %v1722 = vpop.permute.xlu0 %1721
    %v1723 = vsel %vm69, %v1712, 0
    %v1725 = vsel %vm69, %v1722, 0
    %1727 = vmatprep.subr.mxu0 0.0
    %1728 = vmatpush1.xpose.msra.mxu0 0.0
    %1729 = vmatprep.subr.mxu0 0.0
    %1730 = vmatpush1.xpose.msra.mxu0 0.0
    %1731 = vmatprep.subr.mxu0 0.0
    %1732 = vmatpush1.xpose.msra.mxu0 0.0
    %1733 = vmatprep.subr.mxu0 0.0
    %1734 = vmatpush1.xpose.msra.mxu0 0.0
    %1735 = vmatprep.subr.mxu0 0.0
    %1736 = vmatpush1.xpose.msra.mxu0 0.0
    %1737 = vmatprep.subr.mxu0 0.0
    %1738 = vmatpush1.xpose.msra.mxu0 0.0
    %1739 = vmatprep.subr.mxu0 0.0
    %1740 = vmatpush1.xpose.msra.mxu0 0.0
    %1741 = vmatprep.subr.mxu0 0.0
    %1742 = vmatpush1.xpose.msra.mxu0 0.0
    %1743 = vmatprep.subr.mxu0 0.0
    %1744 = vmatpush1.xpose.msra.mxu0 0.0
    %1745 = vmatprep.subr.mxu0 0.0
    %1746 = vmatpush1.xpose.msra.mxu0 0.0
    %1747 = vmatprep.subr.mxu0 0.0
    %1748 = vmatpush1.xpose.msra.mxu0 0.0
    %1749 = vmatprep.subr.mxu0 0.0
    %1750 = vmatpush1.xpose.msra.mxu0 0.0
    %1751 = vmatprep.subr.mxu0 0.0
    %1752 = vmatpush1.xpose.msra.mxu0 0.0
    %1753 = vmatprep.subr.mxu0 0.0
    %1754 = vmatpush1.xpose.msra.mxu0 0.0
    %1755 = vmatprep.subr.mxu0 0.0
    %1756 = vmatpush1.xpose.msra.mxu0 0.0
    %1757 = vmatprep.subr.mxu0 0.0
    %1758 = vmatpush1.xpose.msra.mxu0 %v1725
    %1759 = vmatprep.subr.mxu0 0.0
    %1760 = vmatpush2.xpose.msra.mxu0 0.0
    %1761 = vmatprep.subr.mxu0 0.0
    %1762 = vmatpush2.xpose.msra.mxu0 0.0
    %1763 = vmatprep.subr.mxu0 0.0
    %1764 = vmatpush2.xpose.msra.mxu0 0.0
    %1765 = vmatprep.subr.mxu0 0.0
    %1766 = vmatpush2.xpose.msra.mxu0 0.0
    %1767 = vmatprep.subr.mxu0 0.0
    %1768 = vmatpush2.xpose.msra.mxu0 0.0
    %1769 = vmatprep.subr.mxu0 0.0
    %1770 = vmatpush2.xpose.msra.mxu0 0.0
    %1771 = vmatprep.subr.mxu0 0.0
    %1772 = vmatpush2.xpose.msra.mxu0 0.0
    %1773 = vmatprep.subr.mxu0 0.0
    %1774 = vmatpush2.xpose.msra.mxu0 0.0
    %1775 = vmatprep.subr.mxu0 0.0
    %1776 = vmatpush2.xpose.msra.mxu0 0.0
    %1777 = vmatprep.subr.mxu0 0.0
    %1778 = vmatpush2.xpose.msra.mxu0 0.0
    %1779 = vmatprep.subr.mxu0 0.0
    %1780 = vmatpush2.xpose.msra.mxu0 0.0
    %1781 = vmatprep.subr.mxu0 0.0
    %1782 = vmatpush2.xpose.msra.mxu0 0.0
    %1783 = vmatprep.subr.mxu0 0.0
    %1784 = vmatpush2.xpose.msra.mxu0 0.0
    %1785 = vmatprep.subr.mxu0 0.0
    %1786 = vmatpush2.xpose.msra.mxu0 0.0
    %1787 = vmatprep.subr.mxu0 0.0
    %1788 = vmatpush2.xpose.msra.mxu0 0.0
    %1789 = vmatprep.subr.mxu0 0.0
    %1790 = vmatpush2.xpose.msra.mxu0 0.0
    %1791 = vmatprep.mubr.f32.mxu0 0.0
    %1792 = vmatmul.mubr.f32.gmra.mxu0 %v1723
    %v1793 = vpop.f32.mrf.mxu0
    %v1794 = vadd.f32 0.0, %v1793
    %v1795 = vpop.f32.mrf.mxu0
    %1796 = vdwg.mxu0
    %1798 = vrot.lane.b32.xlu0 %v1717, 96
    %v1799 = vpop.permute.xlu0 %1798
    %v1800 = vsel %vm69, %v1717, 0
    %v1802 = vsel %vm69, %v1799, 0
    %1804 = vmatprep.subr.mxu0 0.0
    %1805 = vmatpush1.xpose.msra.mxu0 0.0
    %1806 = vmatprep.subr.mxu0 0.0
    %1807 = vmatpush1.xpose.msra.mxu0 0.0
    %1808 = vmatprep.subr.mxu0 0.0
    %1809 = vmatpush1.xpose.msra.mxu0 0.0
    %1810 = vmatprep.subr.mxu0 0.0
    %1811 = vmatpush1.xpose.msra.mxu0 0.0
    %1812 = vmatprep.subr.mxu0 0.0
    %1813 = vmatpush1.xpose.msra.mxu0 0.0
    %1814 = vmatprep.subr.mxu0 0.0
    %1815 = vmatpush1.xpose.msra.mxu0 0.0
    %1816 = vmatprep.subr.mxu0 0.0
    %1817 = vmatpush1.xpose.msra.mxu0 0.0
    %1818 = vmatprep.subr.mxu0 0.0
    %1819 = vmatpush1.xpose.msra.mxu0 0.0
    %1820 = vmatprep.subr.mxu0 0.0
    %1821 = vmatpush1.xpose.msra.mxu0 0.0
    %1822 = vmatprep.subr.mxu0 0.0
    %1823 = vmatpush1.xpose.msra.mxu0 0.0
    %1824 = vmatprep.subr.mxu0 0.0
    %1825 = vmatpush1.xpose.msra.mxu0 0.0
    %1826 = vmatprep.subr.mxu0 0.0
    %1827 = vmatpush1.xpose.msra.mxu0 0.0
    %1828 = vmatprep.subr.mxu0 0.0
    %1829 = vmatpush1.xpose.msra.mxu0 0.0
    %1830 = vmatprep.subr.mxu0 0.0
    %1831 = vmatpush1.xpose.msra.mxu0 0.0
    %1832 = vmatprep.subr.mxu0 0.0
    %1833 = vmatpush1.xpose.msra.mxu0 0.0
    %1834 = vmatprep.subr.mxu0 0.0
    %1835 = vmatpush1.xpose.msra.mxu0 %v1802
    %1836 = vmatprep.subr.mxu0 0.0
    %1837 = vmatpush2.xpose.msra.mxu0 0.0
    %1838 = vmatprep.subr.mxu0 0.0
    %1839 = vmatpush2.xpose.msra.mxu0 0.0
    %1840 = vmatprep.subr.mxu0 0.0
    %1841 = vmatpush2.xpose.msra.mxu0 0.0
    %1842 = vmatprep.subr.mxu0 0.0
    %1843 = vmatpush2.xpose.msra.mxu0 0.0
    %1844 = vmatprep.subr.mxu0 0.0
    %1845 = vmatpush2.xpose.msra.mxu0 0.0
    %1846 = vmatprep.subr.mxu0 0.0
    %1847 = vmatpush2.xpose.msra.mxu0 0.0
    %1848 = vmatprep.subr.mxu0 0.0
    %1849 = vmatpush2.xpose.msra.mxu0 0.0
    %1850 = vmatprep.subr.mxu0 0.0
    %1851 = vmatpush2.xpose.msra.mxu0 0.0
    %1852 = vmatprep.subr.mxu0 0.0
    %1853 = vmatpush2.xpose.msra.mxu0 0.0
    %1854 = vmatprep.subr.mxu0 0.0
    %1855 = vmatpush2.xpose.msra.mxu0 0.0
    %1856 = vmatprep.subr.mxu0 0.0
    %1857 = vmatpush2.xpose.msra.mxu0 0.0
    %1858 = vmatprep.subr.mxu0 0.0
    %1859 = vmatpush2.xpose.msra.mxu0 0.0
    %1860 = vmatprep.subr.mxu0 0.0
    %1861 = vmatpush2.xpose.msra.mxu0 0.0
    %1862 = vmatprep.subr.mxu0 0.0
    %1863 = vmatpush2.xpose.msra.mxu0 0.0
    %1864 = vmatprep.subr.mxu0 0.0
    %1865 = vmatpush2.xpose.msra.mxu0 0.0
    %1866 = vmatprep.subr.mxu0 0.0
    %1867 = vmatpush2.xpose.msra.mxu0 0.0
    %1868 = vmatprep.mubr.f32.mxu0 0.0
    %1869 = vmatmul.mubr.f32.gmra.mxu0 %v1800
    %v1870 = vpop.f32.mrf.mxu0
    %v1871 = vadd.f32 0.0, %v1870
    %v1872 = vpop.f32.mrf.mxu0
    %1873 = vdwg.mxu0
    %v1874 = vmul.f32 %v1794, 0.17677669
    %v1875 = vmul.f32 %v1871, 0.17677669
    %v1876 = vadd.f32 %v1874, %v1623
    %v1877 = vadd.f32 %v1875, %v1624
    %vm1878 = vcmask 64512
    %v1879 = vsel %vm1878, %v1876, -inf
    %1880 = vmax.xlane.f32.xlu0 %v1879
    %v1881 = vpop.xlane.xlu0 %1880
    %v1882 = vsel %vm1878, %v1877, -inf
    %1883 = vmax.xlane.f32.xlu0 %v1882
    %v1884 = vpop.xlane.xlu0 %1883
    %v1885 = vsub.f32 %v1876, %v1881
    %v1886 = vsub.f32 %v1877, %v1884
    %v1887 = vmul.f32 %v1885, 1.442695
    %v1888 = vpow.pop %v1887
    %v1889 = vmul.f32 %v1886, 1.442695
    %v1890 = vpow.pop %v1889
    %v1891 = vsel %vm1878, %v1888, 0.0
    %1892 = vadd.xlane.f32.xlu0 %v1891
    %v1893 = vpop.xlane.xlu0 %1892
    %v1894 = vsel %vm1878, %v1890, 0.0
    %1895 = vadd.xlane.f32.xlu0 %v1894
    %v1896 = vpop.xlane.xlu0 %1895
    %v1897 = vrcp.pop %v1893
    %v1898 = vrcp.pop %v1896
    %v1899 = vmul.f32 %v1888, %v1897
    %v1900 = vmul.f32 %v1890, %v1898
    %1901 = vrot.lane.b32.xlu0 %v1712, 64
    %v1902 = vpop.permute.xlu0 %1901
    %v1905 = vsel %vm1878, %v1899, 0
    %1907 = vmatprep.subr.mxu0 0.0
    %1908 = vmatpush1.msra.mxu0 0.0
    %1909 = vmatprep.subr.mxu0 0.0
    %1910 = vmatpush1.msra.mxu0 0.0
    %1911 = vmatprep.subr.mxu0 0.0
    %1912 = vmatpush1.msra.mxu0 0.0
    %1913 = vmatprep.subr.mxu0 0.0
    %1914 = vmatpush1.msra.mxu0 0.0
    %1915 = vmatprep.subr.mxu0 0.0
    %1916 = vmatpush1.msra.mxu0 0.0
    %1917 = vmatprep.subr.mxu0 0.0
    %1918 = vmatpush1.msra.mxu0 0.0
    %1919 = vmatprep.subr.mxu0 0.0
    %1920 = vmatpush1.msra.mxu0 0.0
    %1921 = vmatprep.subr.mxu0 0.0
    %1922 = vmatpush1.msra.mxu0 0.0
    %1923 = vmatprep.subr.mxu0 0.0
    %1924 = vmatpush1.msra.mxu0 0.0
    %1925 = vmatprep.subr.mxu0 0.0
    %1926 = vmatpush1.msra.mxu0 0.0
    %1927 = vmatprep.subr.mxu0 0.0
    %1928 = vmatpush1.msra.mxu0 0.0
    %1929 = vmatprep.subr.mxu0 0.0
    %1930 = vmatpush1.msra.mxu0 0.0
    %1931 = vmatprep.subr.mxu0 0.0
    %1932 = vmatpush1.msra.mxu0 0.0
    %1933 = vmatprep.subr.mxu0 0.0
    %1934 = vmatpush1.msra.mxu0 0.0
    %1935 = vmatprep.subr.mxu0 0.0
    %1936 = vmatpush1.msra.mxu0 0.0
    %1937 = vmatprep.subr.mxu0 0.0
    %1938 = vmatpush1.msra.mxu0 %v1902
    %1939 = vmatprep.subr.mxu0 0.0
    %1940 = vmatpush2.msra.mxu0 0.0
    %1941 = vmatprep.subr.mxu0 0.0
    %1942 = vmatpush2.msra.mxu0 0.0
    %1943 = vmatprep.subr.mxu0 0.0
    %1944 = vmatpush2.msra.mxu0 0.0
    %1945 = vmatprep.subr.mxu0 0.0
    %1946 = vmatpush2.msra.mxu0 0.0
    %1947 = vmatprep.subr.mxu0 0.0
    %1948 = vmatpush2.msra.mxu0 0.0
    %1949 = vmatprep.subr.mxu0 0.0
    %1950 = vmatpush2.msra.mxu0 0.0
    %1951 = vmatprep.subr.mxu0 0.0
    %1952 = vmatpush2.msra.mxu0 0.0
    %1953 = vmatprep.subr.mxu0 0.0
    %1954 = vmatpush2.msra.mxu0 0.0
    %1955 = vmatprep.subr.mxu0 0.0
    %1956 = vmatpush2.msra.mxu0 0.0
    %1957 = vmatprep.subr.mxu0 0.0
    %1958 = vmatpush2.msra.mxu0 0.0
    %1959 = vmatprep.subr.mxu0 0.0
    %1960 = vmatpush2.msra.mxu0 0.0
    %1961 = vmatprep.subr.mxu0 0.0
    %1962 = vmatpush2.msra.mxu0 0.0
    %1963 = vmatprep.subr.mxu0 0.0
    %1964 = vmatpush2.msra.mxu0 0.0
    %1965 = vmatprep.subr.mxu0 0.0
    %1966 = vmatpush2.msra.mxu0 0.0
    %1967 = vmatprep.subr.mxu0 0.0
    %1968 = vmatpush2.msra.mxu0 0.0
    %1969 = vmatprep.subr.mxu0 0.0
    %1970 = vmatpush2.msra.mxu0 0.0
    %1971 = vmatprep.mubr.f32.mxu0 0.0
    %1972 = vmatmul.mubr.f32.gmra.mxu0 %v1905
    %v1973 = vpop.f32.mrf.mxu0
    %v1974 = vadd.f32 0.0, %v1973
    %v1975 = vpop.f32.mrf.mxu0
    %1976 = vdwg.mxu0
    %1977 = vrot.lane.b32.xlu0 %v1717, 64
    %v1978 = vpop.permute.xlu0 %1977
    %v1981 = vsel %vm1878, %v1900, 0
    %1983 = vmatprep.subr.mxu0 0.0
    %1984 = vmatpush1.msra.mxu0 0.0
    %1985 = vmatprep.subr.mxu0 0.0
    %1986 = vmatpush1.msra.mxu0 0.0
    %1987 = vmatprep.subr.mxu0 0.0
    %1988 = vmatpush1.msra.mxu0 0.0
    %1989 = vmatprep.subr.mxu0 0.0
    %1990 = vmatpush1.msra.mxu0 0.0
    %1991 = vmatprep.subr.mxu0 0.0
    %1992 = vmatpush1.msra.mxu0 0.0
    %1993 = vmatprep.subr.mxu0 0.0
    %1994 = vmatpush1.msra.mxu0 0.0
    %1995 = vmatprep.subr.mxu0 0.0
    %1996 = vmatpush1.msra.mxu0 0.0
    %1997 = vmatprep.subr.mxu0 0.0
    %1998 = vmatpush1.msra.mxu0 0.0
    %1999 = vmatprep.subr.mxu0 0.0
    %2000 = vmatpush1.msra.mxu0 0.0
    %2001 = vmatprep.subr.mxu0 0.0
    %2002 = vmatpush1.msra.mxu0 0.0
    %2003 = vmatprep.subr.mxu0 0.0
    %2004 = vmatpush1.msra.mxu0 0.0
    %2005 = vmatprep.subr.mxu0 0.0
    %2006 = vmatpush1.msra.mxu0 0.0
    %2007 = vmatprep.subr.mxu0 0.0
    %2008 = vmatpush1.msra.mxu0 0.0
    %2009 = vmatprep.subr.mxu0 0.0
    %2010 = vmatpush1.msra.mxu0 0.0
    %2011 = vmatprep.subr.mxu0 0.0
    %2012 = vmatpush1.msra.mxu0 0.0
    %2013 = vmatprep.subr.mxu0 0.0
    %2014 = vmatpush1.msra.mxu0 %v1978
    %2015 = vmatprep.subr.mxu0 0.0
    %2016 = vmatpush2.msra.mxu0 0.0
    %2017 = vmatprep.subr.mxu0 0.0
    %2018 = vmatpush2.msra.mxu0 0.0
    %2019 = vmatprep.subr.mxu0 0.0
    %2020 = vmatpush2.msra.mxu0 0.0
    %2021 = vmatprep.subr.mxu0 0.0
    %2022 = vmatpush2.msra.mxu0 0.0
    %2023 = vmatprep.subr.mxu0 0.0
    %2024 = vmatpush2.msra.mxu0 0.0
    %2025 = vmatprep.subr.mxu0 0.0
    %2026 = vmatpush2.msra.mxu0 0.0
    %2027 = vmatprep.subr.mxu0 0.0
    %2028 = vmatpush2.msra.mxu0 0.0
    %2029 = vmatprep.subr.mxu0 0.0
    %2030 = vmatpush2.msra.mxu0 0.0
    %2031 = vmatprep.subr.mxu0 0.0
    %2032 = vmatpush2.msra.mxu0 0.0
    %2033 = vmatprep.subr.mxu0 0.0
    %2034 = vmatpush2.msra.mxu0 0.0
    %2035 = vmatprep.subr.mxu0 0.0
    %2036 = vmatpush2.msra.mxu0 0.0
    %2037 = vmatprep.subr.mxu0 0.0
    %2038 = vmatpush2.msra.mxu0 0.0
    %2039 = vmatprep.subr.mxu0 0.0
    %2040 = vmatpush2.msra.mxu0 0.0
    %2041 = vmatprep.subr.mxu0 0.0
    %2042 = vmatpush2.msra.mxu0 0.0
    %2043 = vmatprep.subr.mxu0 0.0
    %2044 = vmatpush2.msra.mxu0 0.0
    %2045 = vmatprep.subr.mxu0 0.0
    %2046 = vmatpush2.msra.mxu0 0.0
    %2047 = vmatprep.mubr.f32.mxu0 0.0
    %2048 = vmatmul.mubr.f32.gmra.mxu0 %v1981
    %v2049 = vpop.f32.mrf.mxu0
    %v2050 = vadd.f32 0.0, %v2049
    %v2051 = vpop.f32.mrf.mxu0
    %2052 = vdwg.mxu0
    %v2053 = vld [vmem:[#allocation2 + $0x170] sm:$0xf]
    %v2054 = vld [vmem:[#allocation2 + $0x174] sm:$0xf]
    %v2055 = vld [vmem:[#allocation2 + $0x178] sm:$0xf]
    %v2056 = vld [vmem:[#allocation2 + $0x17c] sm:$0xf]
    %v2057 = vunpack.c.l.bf16 %v2053
    %v2058 = vunpack.c.l.bf16 %v2054
    %v2059 = vunpack.c.l.bf16 %v2055
    %v2060 = vunpack.c.l.bf16 %v2056
    %v2061 = vld [vmem:[#allocation2 + $0x180] sm:$0x1]
    %v2062 = vunpack.c.l.bf16 %v2061
    %v2063 = vlaneseq
    %v2064 = vshrl.u32 %v2063, 7
    %v2065 = vsub.s32 0, %v2064
    %v2066 = vrot.slane %v2062, %v2065
    %v2068 = vsel %vm69, %v1974, 0
    %v2071 = vsel %vm69, %v2050, 0
    %2073 = vmatprep.subr.mxu0 0.0
    %2074 = vmatpush1.msra.mxu0 0.0
    %2075 = vmatprep.subr.mxu0 0.0
    %2076 = vmatpush1.msra.mxu0 0.0
    %2077 = vmatprep.subr.mxu0 0.0
    %2078 = vmatpush1.msra.mxu0 0.0
    %2079 = vmatprep.subr.mxu0 0.0
    %2080 = vmatpush1.msra.mxu0 0.0
    %2081 = vmatprep.subr.mxu0 0.0
    %2082 = vmatpush1.msra.mxu0 0.0
    %2083 = vmatprep.subr.mxu0 0.0
    %2084 = vmatpush1.msra.mxu0 0.0
    %2085 = vmatprep.subr.mxu0 0.0
    %2086 = vmatpush1.msra.mxu0 0.0
    %2087 = vmatprep.subr.mxu0 0.0
    %2088 = vmatpush1.msra.mxu0 0.0
    %2089 = vmatprep.subr.mxu0 0.0
    %2090 = vmatpush1.msra.mxu0 0.0
    %2091 = vmatprep.subr.mxu0 0.0
    %2092 = vmatpush1.msra.mxu0 0.0
    %2093 = vmatprep.subr.mxu0 0.0
    %2094 = vmatpush1.msra.mxu0 0.0
    %2095 = vmatprep.subr.mxu0 0.0
    %2096 = vmatpush1.msra.mxu0 0.0
    %2097 = vmatprep.subr.mxu0 0.0
    %2098 = vmatpush1.msra.mxu0 %v2060
    %2099 = vmatprep.subr.mxu0 0.0
    %2100 = vmatpush1.msra.mxu0 %v2059
    %2101 = vmatprep.subr.mxu0 0.0
    %2102 = vmatpush1.msra.mxu0 %v2058
    %2103 = vmatprep.subr.mxu0 0.0
    %2104 = vmatpush1.msra.mxu0 %v2057
    %2105 = vmatprep.subr.mxu0 0.0
    %2106 = vmatpush2.msra.mxu0 0.0
    %2107 = vmatprep.subr.mxu0 0.0
    %2108 = vmatpush2.msra.mxu0 0.0
    %2109 = vmatprep.subr.mxu0 0.0
    %2110 = vmatpush2.msra.mxu0 0.0
    %2111 = vmatprep.subr.mxu0 0.0
    %2112 = vmatpush2.msra.mxu0 0.0
    %2113 = vmatprep.subr.mxu0 0.0
    %2114 = vmatpush2.msra.mxu0 0.0
    %2115 = vmatprep.subr.mxu0 0.0
    %2116 = vmatpush2.msra.mxu0 0.0
    %2117 = vmatprep.subr.mxu0 0.0
    %2118 = vmatpush2.msra.mxu0 0.0
    %2119 = vmatprep.subr.mxu0 0.0
    %2120 = vmatpush2.msra.mxu0 0.0
    %2121 = vmatprep.subr.mxu0 0.0
    %2122 = vmatpush2.msra.mxu0 0.0
    %2123 = vmatprep.subr.mxu0 0.0
    %2124 = vmatpush2.msra.mxu0 0.0
    %2125 = vmatprep.subr.mxu0 0.0
    %2126 = vmatpush2.msra.mxu0 0.0
    %2127 = vmatprep.subr.mxu0 0.0
    %2128 = vmatpush2.msra.mxu0 0.0
    %2129 = vmatprep.subr.mxu0 0.0
    %2130 = vmatpush2.msra.mxu0 0.0
    %2131 = vmatprep.subr.mxu0 0.0
    %2132 = vmatpush2.msra.mxu0 0.0
    %2133 = vmatprep.subr.mxu0 0.0
    %2134 = vmatpush2.msra.mxu0 0.0
    %2135 = vmatprep.subr.mxu0 0.0
    %2136 = vmatpush2.msra.mxu0 0.0
    %2137 = vmatprep.mubr.f32.mxu0 0.0
    %2138 = vmatmul.mubr.f32.gmra.mxu0 %v2068
    %v2139 = vpop.f32.mrf.mxu0
    %v2140 = vadd.f32 %v2066, %v2139
    %v2141 = vpop.f32.mrf.mxu0
    %2142 = vmatprep.mubr.f32.mxu0 0.0
    %2143 = vmatmul.mubr.f32.gmra.mxu0 %v2071
    %v2144 = vpop.f32.mrf.mxu0
    %v2145 = vadd.f32 %v2066, %v2144
    %v2146 = vpop.f32.mrf.mxu0
    %2147 = vdwg.mxu0
    %v2148 = vadd.f32 %v2140, %v1616
    %v2149 = vadd.f32 %v2145, %v1617
    %v2150 = vld [vmem:[#allocation2 + $0x1dc] sm:$0x1]
    %v2151 = vunpack.c.l.bf16 %v2150
    %v2152 = vld [vmem:[#allocation2 + $0x1e0] sm:$0x1]
    %v2153 = vunpack.c.l.bf16 %v2152
    %v2154 = vsel %vm69, %v2148, 0.0
    %2155 = vadd.xlane.f32.xlu0 %v2154
    %v2156 = vpop.xlane.xlu0 %2155
    %v2157 = vsel %vm69, %v2149, 0.0
    %2158 = vadd.xlane.f32.xlu0 %v2157
    %v2159 = vpop.xlane.xlu0 %2158
    %v2160 = vmul.f32 %v2156, %v537
    %v2161 = vmul.f32 %v2159, %v537
    %v2162 = vsub.f32 %v2148, %v2160
    %v2163 = vsub.f32 %v2149, %v2161
    %v2164 = vmul.f32 %v2162, %v2162
    %v2165 = vmul.f32 %v2163, %v2163
    %v2166 = vsel %vm69, %v2164, 0.0
    %2167 = vadd.xlane.f32.xlu0 %v2166
    %v2168 = vpop.xlane.xlu0 %2167
    %v2169 = vsel %vm69, %v2165, 0.0
    %2170 = vadd.xlane.f32.xlu0 %v2169
    %v2171 = vpop.xlane.xlu0 %2170
    %v2172 = vmul.f32 %v2168, %v537
    %v2173 = vmul.f32 %v2171, %v537
    %v2174 = vadd.f32 %v2172, 1e-05
    %v2175 = vadd.f32 %v2173, 1e-05
    %v2176 = vrsqrt.pop %v2174
    %v2177 = vrsqrt.pop %v2175
    %v2178 = vmul.f32 %v2162, %v2176
    %v2179 = vmul.f32 %v2163, %v2177
    %v2180 = vlaneseq
    %v2181 = vshrl.u32 %v2180, 7
    %v2182 = vsub.s32 0, %v2181
    %v2183 = vrot.slane %v2151, %v2182
    %v2184 = vmul.f32 %v2178, %v2183
    %v2185 = vmul.f32 %v2179, %v2183
    %v2186 = vlaneseq
    %v2187 = vshrl.u32 %v2186, 7
    %v2188 = vsub.s32 0, %v2187
    %v2189 = vrot.slane %v2153, %v2188
    %v2190 = vadd.f32 %v2184, %v2189
    %v2191 = vadd.f32 %v2185, %v2189
    %v2192 = vld [vmem:[#allocation2 + $0x184] sm:$0xf]
    %v2193 = vld [vmem:[#allocation2 + $0x188] sm:$0xf]
    %v2194 = vld [vmem:[#allocation2 + $0x18c] sm:$0xf]
    %v2195 = vld [vmem:[#allocation2 + $0x190] sm:$0xf]
    %v2196 = vunpack.c.l.bf16 %v2192
    %v2197 = vunpack.c.l.bf16 %v2193
    %v2198 = vunpack.c.l.bf16 %v2194
    %v2199 = vunpack.c.l.bf16 %v2195
    %v2200 = vld [vmem:[#allocation2 + $0x194] sm:$0x1]
    %v2201 = vunpack.c.l.bf16 %v2200
    %v2202 = vlaneseq
    %v2203 = vshrl.u32 %v2202, 7
    %v2204 = vsub.s32 0, %v2203
    %v2205 = vrot.slane %v2201, %v2204
    %v2207 = vsel %vm69, %v2190, 0
    %v2210 = vsel %vm69, %v2191, 0
    %2212 = vmatprep.subr.mxu0 0.0
    %2213 = vmatpush1.msra.mxu0 0.0
    %2214 = vmatprep.subr.mxu0 0.0
    %2215 = vmatpush1.msra.mxu0 0.0
    %2216 = vmatprep.subr.mxu0 0.0
    %2217 = vmatpush1.msra.mxu0 0.0
    %2218 = vmatprep.subr.mxu0 0.0
    %2219 = vmatpush1.msra.mxu0 0.0
    %2220 = vmatprep.subr.mxu0 0.0
    %2221 = vmatpush1.msra.mxu0 0.0
    %2222 = vmatprep.subr.mxu0 0.0
    %2223 = vmatpush1.msra.mxu0 0.0
    %2224 = vmatprep.subr.mxu0 0.0
    %2225 = vmatpush1.msra.mxu0 0.0
    %2226 = vmatprep.subr.mxu0 0.0
    %2227 = vmatpush1.msra.mxu0 0.0
    %2228 = vmatprep.subr.mxu0 0.0
    %2229 = vmatpush1.msra.mxu0 0.0
    %2230 = vmatprep.subr.mxu0 0.0
    %2231 = vmatpush1.msra.mxu0 0.0
    %2232 = vmatprep.subr.mxu0 0.0
    %2233 = vmatpush1.msra.mxu0 0.0
    %2234 = vmatprep.subr.mxu0 0.0
    %2235 = vmatpush1.msra.mxu0 0.0
    %2236 = vmatprep.subr.mxu0 0.0
    %2237 = vmatpush1.msra.mxu0 %v2199
    %2238 = vmatprep.subr.mxu0 0.0
    %2239 = vmatpush1.msra.mxu0 %v2198
    %2240 = vmatprep.subr.mxu0 0.0
    %2241 = vmatpush1.msra.mxu0 %v2197
    %2242 = vmatprep.subr.mxu0 0.0
    %2243 = vmatpush1.msra.mxu0 %v2196
    %2244 = vmatprep.subr.mxu0 0.0
    %2245 = vmatpush2.msra.mxu0 0.0
    %2246 = vmatprep.subr.mxu0 0.0
    %2247 = vmatpush2.msra.mxu0 0.0
    %2248 = vmatprep.subr.mxu0 0.0
    %2249 = vmatpush2.msra.mxu0 0.0
    %2250 = vmatprep.subr.mxu0 0.0
    %2251 = vmatpush2.msra.mxu0 0.0
    %2252 = vmatprep.subr.mxu0 0.0
    %2253 = vmatpush2.msra.mxu0 0.0
    %2254 = vmatprep.subr.mxu0 0.0
    %2255 = vmatpush2.msra.mxu0 0.0
    %2256 = vmatprep.subr.mxu0 0.0
    %2257 = vmatpush2.msra.mxu0 0.0
    %2258 = vmatprep.subr.mxu0 0.0
    %2259 = vmatpush2.msra.mxu0 0.0
    %2260 = vmatprep.subr.mxu0 0.0
    %2261 = vmatpush2.msra.mxu0 0.0
    %2262 = vmatprep.subr.mxu0 0.0
    %2263 = vmatpush2.msra.mxu0 0.0
    %2264 = vmatprep.subr.mxu0 0.0
    %2265 = vmatpush2.msra.mxu0 0.0
    %2266 = vmatprep.subr.mxu0 0.0
    %2267 = vmatpush2.msra.mxu0 0.0
    %2268 = vmatprep.subr.mxu0 0.0
    %2269 = vmatpush2.msra.mxu0 0.0
    %2270 = vmatprep.subr.mxu0 0.0
    %2271 = vmatpush2.msra.mxu0 0.0
    %2272 = vmatprep.subr.mxu0 0.0
    %2273 = vmatpush2.msra.mxu0 0.0
    %2274 = vmatprep.subr.mxu0 0.0
    %2275 = vmatpush2.msra.mxu0 0.0
    %2276 = vmatprep.mubr.f32.mxu0 0.0
    %2277 = vmatmul.mubr.f32.gmra.mxu0 %v2207
    %v2278 = vpop.f32.mrf.mxu0
    %v2279 = vadd.f32 %v2205, %v2278
    %v2280 = vpop.f32.mrf.mxu0
    %2281 = vmatprep.mubr.f32.mxu0 0.0
    %2282 = vmatmul.mubr.f32.gmra.mxu0 %v2210
    %v2283 = vpop.f32.mrf.mxu0
    %v2284 = vadd.f32 %v2205, %v2283
    %v2285 = vpop.f32.mrf.mxu0
    %2286 = vdwg.mxu0
    %v2287 = vmax.f32 %v2279, 0.0
    %v2288 = vmax.f32 %v2284, 0.0
    %v2289 = vld [vmem:[#allocation2 + $0x198] sm:$0xf]
    %v2290 = vld [vmem:[#allocation2 + $0x19c] sm:$0xf]
    %v2291 = vld [vmem:[#allocation2 + $0x1a0] sm:$0xf]
    %v2292 = vld [vmem:[#allocation2 + $0x1a4] sm:$0xf]
    %v2293 = vld [vmem:[#allocation2 + $0x1a8] sm:$0xf]
    %v2294 = vld [vmem:[#allocation2 + $0x1ac] sm:$0xf]
    %v2295 = vld [vmem:[#allocation2 + $0x1b0] sm:$0xf]
    %v2296 = vld [vmem:[#allocation2 + $0x1b4] sm:$0xf]
    %v2297 = vld [vmem:[#allocation2 + $0x1b8] sm:$0xf]
    %v2298 = vld [vmem:[#allocation2 + $0x1bc] sm:$0xf]
    %v2299 = vld [vmem:[#allocation2 + $0x1c0] sm:$0xf]
    %v2300 = vld [vmem:[#allocation2 + $0x1c4] sm:$0xf]
    %v2301 = vld [vmem:[#allocation2 + $0x1c8] sm:$0xf]
    %v2302 = vld [vmem:[#allocation2 + $0x1cc] sm:$0xf]
    %v2303 = vld [vmem:[#allocation2 + $0x1d0] sm:$0xf]
    %v2304 = vld [vmem:[#allocation2 + $0x1d4] sm:$0xf]
    %v2305 = vunpack.c.l.bf16 %v2289
    %v2306 = vunpack.c.l.bf16 %v2290
    %v2307 = vunpack.c.l.bf16 %v2291
    %v2308 = vunpack.c.l.bf16 %v2292
    %v2309 = vunpack.c.l.bf16 %v2293
    %v2310 = vunpack.c.l.bf16 %v2294
    %v2311 = vunpack.c.l.bf16 %v2295
    %v2312 = vunpack.c.l.bf16 %v2296
    %v2313 = vunpack.c.l.bf16 %v2297
    %v2314 = vunpack.c.l.bf16 %v2298
    %v2315 = vunpack.c.l.bf16 %v2299
    %v2316 = vunpack.c.l.bf16 %v2300
    %v2317 = vunpack.c.l.bf16 %v2301
    %v2318 = vunpack.c.l.bf16 %v2302
    %v2319 = vunpack.c.l.bf16 %v2303
    %v2320 = vunpack.c.l.bf16 %v2304
    %v2321 = vld [vmem:[#allocation2 + $0x1d8] sm:$0x1]
    %v2322 = vunpack.c.l.bf16 %v2321
    %v2323 = vlaneseq
    %v2324 = vshrl.u32 %v2323, 7
    %v2325 = vsub.s32 0, %v2324
    %v2326 = vrot.slane %v2322, %v2325
    %2327 = vmatprep.subr.mxu0 0.0
    %2328 = vmatpush1.msra.mxu0 %v2320
    %2329 = vmatprep.subr.mxu0 0.0
    %2330 = vmatpush1.msra.mxu0 %v2319
    %2331 = vmatprep.subr.mxu0 0.0
    %2332 = vmatpush1.msra.mxu0 %v2318
    %2333 = vmatprep.subr.mxu0 0.0
    %2334 = vmatpush1.msra.mxu0 %v2317
    %2335 = vmatprep.subr.mxu0 0.0
    %2336 = vmatpush1.msra.mxu0 %v2316
    %2337 = vmatprep.subr.mxu0 0.0
    %2338 = vmatpush1.msra.mxu0 %v2315
    %2339 = vmatprep.subr.mxu0 0.0
    %2340 = vmatpush1.msra.mxu0 %v2314
    %2341 = vmatprep.subr.mxu0 0.0
    %2342 = vmatpush1.msra.mxu0 %v2313
    %2343 = vmatprep.subr.mxu0 0.0
    %2344 = vmatpush1.msra.mxu0 %v2312
    %2345 = vmatprep.subr.mxu0 0.0
    %2346 = vmatpush1.msra.mxu0 %v2311
    %2347 = vmatprep.subr.mxu0 0.0
    %2348 = vmatpush1.msra.mxu0 %v2310
    %2349 = vmatprep.subr.mxu0 0.0
    %2350 = vmatpush1.msra.mxu0 %v2309
    %2351 = vmatprep.subr.mxu0 0.0
    %2352 = vmatpush1.msra.mxu0 %v2308
    %2353 = vmatprep.subr.mxu0 0.0
    %2354 = vmatpush1.msra.mxu0 %v2307
    %2355 = vmatprep.subr.mxu0 0.0
    %2356 = vmatpush1.msra.mxu0 %v2306
    %2357 = vmatprep.subr.mxu0 0.0
    %2358 = vmatpush1.msra.mxu0 %v2305
    %2359 = vmatprep.subr.mxu0 0.0
    %2360 = vmatpush2.msra.mxu0 0.0
    %2361 = vmatprep.subr.mxu0 0.0
    %2362 = vmatpush2.msra.mxu0 0.0
    %2363 = vmatprep.subr.mxu0 0.0
    %2364 = vmatpush2.msra.mxu0 0.0
    %2365 = vmatprep.subr.mxu0 0.0
    %2366 = vmatpush2.msra.mxu0 0.0
    %2367 = vmatprep.subr.mxu0 0.0
    %2368 = vmatpush2.msra.mxu0 0.0
    %2369 = vmatprep.subr.mxu0 0.0
    %2370 = vmatpush2.msra.mxu0 0.0
    %2371 = vmatprep.subr.mxu0 0.0
    %2372 = vmatpush2.msra.mxu0 0.0
    %2373 = vmatprep.subr.mxu0 0.0
    %2374 = vmatpush2.msra.mxu0 0.0
    %2375 = vmatprep.subr.mxu0 0.0
    %2376 = vmatpush2.msra.mxu0 0.0
    %2377 = vmatprep.subr.mxu0 0.0
    %2378 = vmatpush2.msra.mxu0 0.0
    %2379 = vmatprep.subr.mxu0 0.0
    %2380 = vmatpush2.msra.mxu0 0.0
    %2381 = vmatprep.subr.mxu0 0.0
    %2382 = vmatpush2.msra.mxu0 0.0
    %2383 = vmatprep.subr.mxu0 0.0
    %2384 = vmatpush2.msra.mxu0 0.0
    %2385 = vmatprep.subr.mxu0 0.0
    %2386 = vmatpush2.msra.mxu0 0.0
    %2387 = vmatprep.subr.mxu0 0.0
    %2388 = vmatpush2.msra.mxu0 0.0
    %2389 = vmatprep.subr.mxu0 0.0
    %2390 = vmatpush2.msra.mxu0 0.0
    %2391 = vmatprep.mubr.f32.mxu0 0.0
    %2392 = vmatmul.mubr.f32.gmra.mxu0 %v2287
    %v2393 = vpop.f32.mrf.mxu0
    %v2394 = vadd.f32 %v2326, %v2393
    %v2395 = vpop.f32.mrf.mxu0
    %2396 = vmatprep.mubr.f32.mxu0 0.0
    %2397 = vmatmul.mubr.f32.gmra.mxu0 %v2288
    %v2398 = vpop.f32.mrf.mxu0
    %v2399 = vadd.f32 %v2326, %v2398
    %v2400 = vpop.f32.mrf.mxu0
    %2401 = vdwg.mxu0
    %v2402 = vadd.f32 %v2190, %v2394
    %v2403 = vadd.f32 %v2191, %v2399
    %v2404 = vld [vmem:[#allocation2 + $0x1e4] sm:$0x1]
    %v2405 = vunpack.c.l.bf16 %v2404
    %v2406 = vld [vmem:[#allocation2 + $0x1e8] sm:$0x1]
    %v2407 = vunpack.c.l.bf16 %v2406
    %v2408 = vsel %vm69, %v2402, 0.0
    %2409 = vadd.xlane.f32.xlu0 %v2408
    %v2410 = vpop.xlane.xlu0 %2409
    %v2411 = vsel %vm69, %v2403, 0.0
    %2412 = vadd.xlane.f32.xlu0 %v2411
    %v2413 = vpop.xlane.xlu0 %2412
    %v2414 = vmul.f32 %v2410, %v537
    %v2415 = vmul.f32 %v2413, %v537
    %v2416 = vsub.f32 %v2402, %v2414
    %v2417 = vsub.f32 %v2403, %v2415
    %v2418 = vmul.f32 %v2416, %v2416
    %v2419 = vmul.f32 %v2417, %v2417
    %v2420 = vsel %vm69, %v2418, 0.0
    %2421 = vadd.xlane.f32.xlu0 %v2420
    %v2422 = vpop.xlane.xlu0 %2421
    %v2423 = vsel %vm69, %v2419, 0.0
    %2424 = vadd.xlane.f32.xlu0 %v2423
    %v2425 = vpop.xlane.xlu0 %2424
    %v2426 = vmul.f32 %v2422, %v537
    %v2427 = vmul.f32 %v2425, %v537
    %v2428 = vadd.f32 %v2426, 1e-05
    %v2429 = vadd.f32 %v2427, 1e-05
    %v2430 = vrsqrt.pop %v2428
    %v2431 = vrsqrt.pop %v2429
    %v2432 = vmul.f32 %v2416, %v2430
    %v2433 = vmul.f32 %v2417, %v2431
    %v2434 = vlaneseq
    %v2435 = vshrl.u32 %v2434, 7
    %v2436 = vsub.s32 0, %v2435
    %v2437 = vrot.slane %v2405, %v2436
    %v2438 = vmul.f32 %v2432, %v2437
    %v2439 = vmul.f32 %v2433, %v2437
    %v2440 = vlaneseq
    %v2441 = vshrl.u32 %v2440, 7
    %v2442 = vsub.s32 0, %v2441
    %v2443 = vrot.slane %v2407, %v2442
    %v2444 = vadd.f32 %v2438, %v2443
    %v2445 = vadd.f32 %v2439, %v2443
    %s2446 = scalar_lea.vmem [#allocation5], 48
    %v2447 = vld [vmem:[%s2446] sm:$0xff]
    %v2448 = vld [vmem:[%s2446 + $0x8] sm:$0xff]
    %v2449 = vsub.f32 %v2447, 1.0
    %v2450 = vsub.f32 %v2448, 1.0
    %v2451 = vmul.f32 %v2449, 1e+09
    %v2452 = vmul.f32 %v2450, 1e+09
    %v2453 = vld [vmem:[#allocation2 + $0x15c] sm:$0xf]
    %v2454 = vld [vmem:[#allocation2 + $0x160] sm:$0xf]
    %v2455 = vld [vmem:[#allocation2 + $0x164] sm:$0xf]
    %v2456 = vld [vmem:[#allocation2 + $0x168] sm:$0xf]
    %v2457 = vunpack.c.l.bf16 %v2453
    %v2458 = vunpack.c.l.bf16 %v2454
    %v2459 = vunpack.c.l.bf16 %v2455
    %v2460 = vunpack.c.l.bf16 %v2456
    %v2461 = vld [vmem:[#allocation2 + $0x16c] sm:$0x1]
    %v2462 = vunpack.c.l.bf16 %v2461
    %v2463 = vlaneseq
    %v2464 = vshrl.u32 %v2463, 7
    %v2465 = vsub.s32 0, %v2464
    %v2466 = vrot.slane %v2462, %v2465
    %v2468 = vsel %vm69, %v2444, 0
    %v2471 = vsel %vm69, %v2445, 0
    %2473 = vmatprep.subr.mxu0 0.0
    %2474 = vmatpush1.msra.mxu0 0.0
    %2475 = vmatprep.subr.mxu0 0.0
    %2476 = vmatpush1.msra.mxu0 0.0
    %2477 = vmatprep.subr.mxu0 0.0
    %2478 = vmatpush1.msra.mxu0 0.0
    %2479 = vmatprep.subr.mxu0 0.0
    %2480 = vmatpush1.msra.mxu0 0.0
    %2481 = vmatprep.subr.mxu0 0.0
    %2482 = vmatpush1.msra.mxu0 0.0
    %2483 = vmatprep.subr.mxu0 0.0
    %2484 = vmatpush1.msra.mxu0 0.0
    %2485 = vmatprep.subr.mxu0 0.0
    %2486 = vmatpush1.msra.mxu0 0.0
    %2487 = vmatprep.subr.mxu0 0.0
    %2488 = vmatpush1.msra.mxu0 0.0
    %2489 = vmatprep.subr.mxu0 0.0
    %2490 = vmatpush1.msra.mxu0 0.0
    %2491 = vmatprep.subr.mxu0 0.0
    %2492 = vmatpush1.msra.mxu0 0.0
    %2493 = vmatprep.subr.mxu0 0.0
    %2494 = vmatpush1.msra.mxu0 0.0
    %2495 = vmatprep.subr.mxu0 0.0
    %2496 = vmatpush1.msra.mxu0 0.0
    %2497 = vmatprep.subr.mxu0 0.0
    %2498 = vmatpush1.msra.mxu0 %v2460
    %2499 = vmatprep.subr.mxu0 0.0
    %2500 = vmatpush1.msra.mxu0 %v2459
    %2501 = vmatprep.subr.mxu0 0.0
    %2502 = vmatpush1.msra.mxu0 %v2458
    %2503 = vmatprep.subr.mxu0 0.0
    %2504 = vmatpush1.msra.mxu0 %v2457
    %2505 = vmatprep.subr.mxu0 0.0
    %2506 = vmatpush2.msra.mxu0 0.0
    %2507 = vmatprep.subr.mxu0 0.0
    %2508 = vmatpush2.msra.mxu0 0.0
    %2509 = vmatprep.subr.mxu0 0.0
    %2510 = vmatpush2.msra.mxu0 0.0
    %2511 = vmatprep.subr.mxu0 0.0
    %2512 = vmatpush2.msra.mxu0 0.0
    %2513 = vmatprep.subr.mxu0 0.0
    %2514 = vmatpush2.msra.mxu0 0.0
    %2515 = vmatprep.subr.mxu0 0.0
    %2516 = vmatpush2.msra.mxu0 0.0
    %2517 = vmatprep.subr.mxu0 0.0
    %2518 = vmatpush2.msra.mxu0 0.0
    %2519 = vmatprep.subr.mxu0 0.0
    %2520 = vmatpush2.msra.mxu0 0.0
    %2521 = vmatprep.subr.mxu0 0.0
    %2522 = vmatpush2.msra.mxu0 0.0
    %2523 = vmatprep.subr.mxu0 0.0
    %2524 = vmatpush2.msra.mxu0 0.0
    %2525 = vmatprep.subr.mxu0 0.0
    %2526 = vmatpush2.msra.mxu0 0.0
    %2527 = vmatprep.subr.mxu0 0.0
    %2528 = vmatpush2.msra.mxu0 0.0
    %2529 = vmatprep.subr.mxu0 0.0
    %2530 = vmatpush2.msra.mxu0 0.0
    %2531 = vmatprep.subr.mxu0 0.0
    %2532 = vmatpush2.msra.mxu0 0.0
    %2533 = vmatprep.subr.mxu0 0.0
    %2534 = vmatpush2.msra.mxu0 0.0
    %2535 = vmatprep.subr.mxu0 0.0
    %2536 = vmatpush2.msra.mxu0 0.0
    %2537 = vmatprep.mubr.f32.mxu0 0.0
    %2538 = vmatmul.mubr.f32.gmra.mxu0 %v2468
    %v2539 = vpop.f32.mrf.mxu0
    %v2540 = vadd.f32 %v2466, %v2539
    %v2541 = vpop.f32.mrf.mxu0
    %2542 = vmatprep.mubr.f32.mxu0 0.0
    %2543 = vmatmul.mubr.f32.gmra.mxu0 %v2471
    %v2544 = vpop.f32.mrf.mxu0
    %v2545 = vadd.f32 %v2466, %v2544
    %v2546 = vpop.f32.mrf.mxu0
    %2547 = vdwg.mxu0
    %2549 = vrot.lane.b32.xlu0 %v2540, 96
    %v2550 = vpop.permute.xlu0 %2549
    %v2551 = vsel %vm69, %v2540, 0
    %v2553 = vsel %vm69, %v2550, 0
    %2555 = vmatprep.subr.mxu0 0.0
    %2556 = vmatpush1.xpose.msra.mxu0 0.0
    %2557 = vmatprep.subr.mxu0 0.0
    %2558 = vmatpush1.xpose.msra.mxu0 0.0
    %2559 = vmatprep.subr.mxu0 0.0
    %2560 = vmatpush1.xpose.msra.mxu0 0.0
    %2561 = vmatprep.subr.mxu0 0.0
    %2562 = vmatpush1.xpose.msra.mxu0 0.0
    %2563 = vmatprep.subr.mxu0 0.0
    %2564 = vmatpush1.xpose.msra.mxu0 0.0
    %2565 = vmatprep.subr.mxu0 0.0
    %2566 = vmatpush1.xpose.msra.mxu0 0.0
    %2567 = vmatprep.subr.mxu0 0.0
    %2568 = vmatpush1.xpose.msra.mxu0 0.0
    %2569 = vmatprep.subr.mxu0 0.0
    %2570 = vmatpush1.xpose.msra.mxu0 0.0
    %2571 = vmatprep.subr.mxu0 0.0
    %2572 = vmatpush1.xpose.msra.mxu0 0.0
    %2573 = vmatprep.subr.mxu0 0.0
    %2574 = vmatpush1.xpose.msra.mxu0 0.0
    %2575 = vmatprep.subr.mxu0 0.0
    %2576 = vmatpush1.xpose.msra.mxu0 0.0
    %2577 = vmatprep.subr.mxu0 0.0
    %2578 = vmatpush1.xpose.msra.mxu0 0.0
    %2579 = vmatprep.subr.mxu0 0.0
    %2580 = vmatpush1.xpose.msra.mxu0 0.0
    %2581 = vmatprep.subr.mxu0 0.0
    %2582 = vmatpush1.xpose.msra.mxu0 0.0
    %2583 = vmatprep.subr.mxu0 0.0
    %2584 = vmatpush1.xpose.msra.mxu0 0.0
    %2585 = vmatprep.subr.mxu0 0.0
    %2586 = vmatpush1.xpose.msra.mxu0 %v2553
    %2587 = vmatprep.subr.mxu0 0.0
    %2588 = vmatpush2.xpose.msra.mxu0 0.0
    %2589 = vmatprep.subr.mxu0 0.0
    %2590 = vmatpush2.xpose.msra.mxu0 0.0
    %2591 = vmatprep.subr.mxu0 0.0
    %2592 = vmatpush2.xpose.msra.mxu0 0.0
    %2593 = vmatprep.subr.mxu0 0.0
    %2594 = vmatpush2.xpose.msra.mxu0 0.0
    %2595 = vmatprep.subr.mxu0 0.0
    %2596 = vmatpush2.xpose.msra.mxu0 0.0
    %2597 = vmatprep.subr.mxu0 0.0
    %2598 = vmatpush2.xpose.msra.mxu0 0.0
    %2599 = vmatprep.subr.mxu0 0.0
    %2600 = vmatpush2.xpose.msra.mxu0 0.0
    %2601 = vmatprep.subr.mxu0 0.0
    %2602 = vmatpush2.xpose.msra.mxu0 0.0
    %2603 = vmatprep.subr.mxu0 0.0
    %2604 = vmatpush2.xpose.msra.mxu0 0.0
    %2605 = vmatprep.subr.mxu0 0.0
    %2606 = vmatpush2.xpose.msra.mxu0 0.0
    %2607 = vmatprep.subr.mxu0 0.0
    %2608 = vmatpush2.xpose.msra.mxu0 0.0
    %2609 = vmatprep.subr.mxu0 0.0
    %2610 = vmatpush2.xpose.msra.mxu0 0.0
    %2611 = vmatprep.subr.mxu0 0.0
    %2612 = vmatpush2.xpose.msra.mxu0 0.0
    %2613 = vmatprep.subr.mxu0 0.0
    %2614 = vmatpush2.xpose.msra.mxu0 0.0
    %2615 = vmatprep.subr.mxu0 0.0
    %2616 = vmatpush2.xpose.msra.mxu0 0.0
    %2617 = vmatprep.subr.mxu0 0.0
    %2618 = vmatpush2.xpose.msra.mxu0 0.0
    %2619 = vmatprep.mubr.f32.mxu0 0.0
    %2620 = vmatmul.mubr.f32.gmra.mxu0 %v2551
    %v2621 = vpop.f32.mrf.mxu0
    %v2622 = vadd.f32 0.0, %v2621
    %v2623 = vpop.f32.mrf.mxu0
    %2624 = vdwg.mxu0
    %2626 = vrot.lane.b32.xlu0 %v2545, 96
    %v2627 = vpop.permute.xlu0 %2626
    %v2628 = vsel %vm69, %v2545, 0
    %v2630 = vsel %vm69, %v2627, 0
    %2632 = vmatprep.subr.mxu0 0.0
    %2633 = vmatpush1.xpose.msra.mxu0 0.0
    %2634 = vmatprep.subr.mxu0 0.0
    %2635 = vmatpush1.xpose.msra.mxu0 0.0
    %2636 = vmatprep.subr.mxu0 0.0
    %2637 = vmatpush1.xpose.msra.mxu0 0.0
    %2638 = vmatprep.subr.mxu0 0.0
    %2639 = vmatpush1.xpose.msra.mxu0 0.0
    %2640 = vmatprep.subr.mxu0 0.0
    %2641 = vmatpush1.xpose.msra.mxu0 0.0
    %2642 = vmatprep.subr.mxu0 0.0
    %2643 = vmatpush1.xpose.msra.mxu0 0.0
    %2644 = vmatprep.subr.mxu0 0.0
    %2645 = vmatpush1.xpose.msra.mxu0 0.0
    %2646 = vmatprep.subr.mxu0 0.0
    %2647 = vmatpush1.xpose.msra.mxu0 0.0
    %2648 = vmatprep.subr.mxu0 0.0
    %2649 = vmatpush1.xpose.msra.mxu0 0.0
    %2650 = vmatprep.subr.mxu0 0.0
    %2651 = vmatpush1.xpose.msra.mxu0 0.0
    %2652 = vmatprep.subr.mxu0 0.0
    %2653 = vmatpush1.xpose.msra.mxu0 0.0
    %2654 = vmatprep.subr.mxu0 0.0
    %2655 = vmatpush1.xpose.msra.mxu0 0.0
    %2656 = vmatprep.subr.mxu0 0.0
    %2657 = vmatpush1.xpose.msra.mxu0 0.0
    %2658 = vmatprep.subr.mxu0 0.0
    %2659 = vmatpush1.xpose.msra.mxu0 0.0
    %2660 = vmatprep.subr.mxu0 0.0
    %2661 = vmatpush1.xpose.msra.mxu0 0.0
    %2662 = vmatprep.subr.mxu0 0.0
    %2663 = vmatpush1.xpose.msra.mxu0 %v2630
    %2664 = vmatprep.subr.mxu0 0.0
    %2665 = vmatpush2.xpose.msra.mxu0 0.0
    %2666 = vmatprep.subr.mxu0 0.0
    %2667 = vmatpush2.xpose.msra.mxu0 0.0
    %2668 = vmatprep.subr.mxu0 0.0
    %2669 = vmatpush2.xpose.msra.mxu0 0.0
    %2670 = vmatprep.subr.mxu0 0.0
    %2671 = vmatpush2.xpose.msra.mxu0 0.0
    %2672 = vmatprep.subr.mxu0 0.0
    %2673 = vmatpush2.xpose.msra.mxu0 0.0
    %2674 = vmatprep.subr.mxu0 0.0
    %2675 = vmatpush2.xpose.msra.mxu0 0.0
    %2676 = vmatprep.subr.mxu0 0.0
    %2677 = vmatpush2.xpose.msra.mxu0 0.0
    %2678 = vmatprep.subr.mxu0 0.0
    %2679 = vmatpush2.xpose.msra.mxu0 0.0
    %2680 = vmatprep.subr.mxu0 0.0
    %2681 = vmatpush2.xpose.msra.mxu0 0.0
    %2682 = vmatprep.subr.mxu0 0.0
    %2683 = vmatpush2.xpose.msra.mxu0 0.0
    %2684 = vmatprep.subr.mxu0 0.0
    %2685 = vmatpush2.xpose.msra.mxu0 0.0
    %2686 = vmatprep.subr.mxu0 0.0
    %2687 = vmatpush2.xpose.msra.mxu0 0.0
    %2688 = vmatprep.subr.mxu0 0.0
    %2689 = vmatpush2.xpose.msra.mxu0 0.0
    %2690 = vmatprep.subr.mxu0 0.0
    %2691 = vmatpush2.xpose.msra.mxu0 0.0
    %2692 = vmatprep.subr.mxu0 0.0
    %2693 = vmatpush2.xpose.msra.mxu0 0.0
    %2694 = vmatprep.subr.mxu0 0.0
    %2695 = vmatpush2.xpose.msra.mxu0 0.0
    %2696 = vmatprep.mubr.f32.mxu0 0.0
    %2697 = vmatmul.mubr.f32.gmra.mxu0 %v2628
    %v2698 = vpop.f32.mrf.mxu0
    %v2699 = vadd.f32 0.0, %v2698
    %v2700 = vpop.f32.mrf.mxu0
    %2701 = vdwg.mxu0
    %v2702 = vmul.f32 %v2622, 0.17677669
    %v2703 = vmul.f32 %v2699, 0.17677669
    %v2704 = vadd.f32 %v2702, %v2451
    %v2705 = vadd.f32 %v2703, %v2452
    %v2706 = vsel %vm1878, %v2704, -inf
    %2707 = vmax.xlane.f32.xlu0 %v2706
    %v2708 = vpop.xlane.xlu0 %2707
    %v2709 = vsel %vm1878, %v2705, -inf
    %2710 = vmax.xlane.f32.xlu0 %v2709
    %v2711 = vpop.xlane.xlu0 %2710
    %v2712 = vsub.f32 %v2704, %v2708
    %v2713 = vsub.f32 %v2705, %v2711
    %v2714 = vmul.f32 %v2712, 1.442695
    %v2715 = vpow.pop %v2714
    %v2716 = vmul.f32 %v2713, 1.442695
    %v2717 = vpow.pop %v2716
    %v2718 = vsel %vm1878, %v2715, 0.0
    %2719 = vadd.xlane.f32.xlu0 %v2718
    %v2720 = vpop.xlane.xlu0 %2719
    %v2721 = vsel %vm1878, %v2717, 0.0
    %2722 = vadd.xlane.f32.xlu0 %v2721
    %v2723 = vpop.xlane.xlu0 %2722
    %v2724 = vrcp.pop %v2720
    %v2725 = vrcp.pop %v2723
    %v2726 = vmul.f32 %v2715, %v2724
    %v2727 = vmul.f32 %v2717, %v2725
    %2728 = vrot.lane.b32.xlu0 %v2540, 64
    %v2729 = vpop.permute.xlu0 %2728
    %v2732 = vsel %vm1878, %v2726, 0
    %2734 = vmatprep.subr.mxu0 0.0
    %2735 = vmatpush1.msra.mxu0 0.0
    %2736 = vmatprep.subr.mxu0 0.0
    %2737 = vmatpush1.msra.mxu0 0.0
    %2738 = vmatprep.subr.mxu0 0.0
    %2739 = vmatpush1.msra.mxu0 0.0
    %2740 = vmatprep.subr.mxu0 0.0
    %2741 = vmatpush1.msra.mxu0 0.0
    %2742 = vmatprep.subr.mxu0 0.0
    %2743 = vmatpush1.msra.mxu0 0.0
    %2744 = vmatprep.subr.mxu0 0.0
    %2745 = vmatpush1.msra.mxu0 0.0
    %2746 = vmatprep.subr.mxu0 0.0
    %2747 = vmatpush1.msra.mxu0 0.0
    %2748 = vmatprep.subr.mxu0 0.0
    %2749 = vmatpush1.msra.mxu0 0.0
    %2750 = vmatprep.subr.mxu0 0.0
    %2751 = vmatpush1.msra.mxu0 0.0
    %2752 = vmatprep.subr.mxu0 0.0
    %2753 = vmatpush1.msra.mxu0 0.0
    %2754 = vmatprep.subr.mxu0 0.0
    %2755 = vmatpush1.msra.mxu0 0.0
    %2756 = vmatprep.subr.mxu0 0.0
    %2757 = vmatpush1.msra.mxu0 0.0
    %2758 = vmatprep.subr.mxu0 0.0
    %2759 = vmatpush1.msra.mxu0 0.0
    %2760 = vmatprep.subr.mxu0 0.0
    %2761 = vmatpush1.msra.mxu0 0.0
    %2762 = vmatprep.subr.mxu0 0.0
    %2763 = vmatpush1.msra.mxu0 0.0
    %2764 = vmatprep.subr.mxu0 0.0
    %2765 = vmatpush1.msra.mxu0 %v2729
    %2766 = vmatprep.subr.mxu0 0.0
    %2767 = vmatpush2.msra.mxu0 0.0
    %2768 = vmatprep.subr.mxu0 0.0
    %2769 = vmatpush2.msra.mxu0 0.0
    %2770 = vmatprep.subr.mxu0 0.0
    %2771 = vmatpush2.msra.mxu0 0.0
    %2772 = vmatprep.subr.mxu0 0.0
    %2773 = vmatpush2.msra.mxu0 0.0
    %2774 = vmatprep.subr.mxu0 0.0
    %2775 = vmatpush2.msra.mxu0 0.0
    %2776 = vmatprep.subr.mxu0 0.0
    %2777 = vmatpush2.msra.mxu0 0.0
    %2778 = vmatprep.subr.mxu0 0.0
    %2779 = vmatpush2.msra.mxu0 0.0
    %2780 = vmatprep.subr.mxu0 0.0
    %2781 = vmatpush2.msra.mxu0 0.0
    %2782 = vmatprep.subr.mxu0 0.0
    %2783 = vmatpush2.msra.mxu0 0.0
    %2784 = vmatprep.subr.mxu0 0.0
    %2785 = vmatpush2.msra.mxu0 0.0
    %2786 = vmatprep.subr.mxu0 0.0
    %2787 = vmatpush2.msra.mxu0 0.0
    %2788 = vmatprep.subr.mxu0 0.0
    %2789 = vmatpush2.msra.mxu0 0.0
    %2790 = vmatprep.subr.mxu0 0.0
    %2791 = vmatpush2.msra.mxu0 0.0
    %2792 = vmatprep.subr.mxu0 0.0
    %2793 = vmatpush2.msra.mxu0 0.0
    %2794 = vmatprep.subr.mxu0 0.0
    %2795 = vmatpush2.msra.mxu0 0.0
    %2796 = vmatprep.subr.mxu0 0.0
    %2797 = vmatpush2.msra.mxu0 0.0
    %2798 = vmatprep.mubr.f32.mxu0 0.0
    %2799 = vmatmul.mubr.f32.gmra.mxu0 %v2732
    %v2800 = vpop.f32.mrf.mxu0
    %v2801 = vadd.f32 0.0, %v2800
    %v2802 = vpop.f32.mrf.mxu0
    %2803 = vdwg.mxu0
    %2804 = vrot.lane.b32.xlu0 %v2545, 64
    %v2805 = vpop.permute.xlu0 %2804
    %v2808 = vsel %vm1878, %v2727, 0
    %2810 = vmatprep.subr.mxu0 0.0
    %2811 = vmatpush1.msra.mxu0 0.0
    %2812 = vmatprep.subr.mxu0 0.0
    %2813 = vmatpush1.msra.mxu0 0.0
    %2814 = vmatprep.subr.mxu0 0.0
    %2815 = vmatpush1.msra.mxu0 0.0
    %2816 = vmatprep.subr.mxu0 0.0
    %2817 = vmatpush1.msra.mxu0 0.0
    %2818 = vmatprep.subr.mxu0 0.0
    %2819 = vmatpush1.msra.mxu0 0.0
    %2820 = vmatprep.subr.mxu0 0.0
    %2821 = vmatpush1.msra.mxu0 0.0
    %2822 = vmatprep.subr.mxu0 0.0
    %2823 = vmatpush1.msra.mxu0 0.0
    %2824 = vmatprep.subr.mxu0 0.0
    %2825 = vmatpush1.msra.mxu0 0.0
    %2826 = vmatprep.subr.mxu0 0.0
    %2827 = vmatpush1.msra.mxu0 0.0
    %2828 = vmatprep.subr.mxu0 0.0
    %2829 = vmatpush1.msra.mxu0 0.0
    %2830 = vmatprep.subr.mxu0 0.0
    %2831 = vmatpush1.msra.mxu0 0.0
    %2832 = vmatprep.subr.mxu0 0.0
    %2833 = vmatpush1.msra.mxu0 0.0
    %2834 = vmatprep.subr.mxu0 0.0
    %2835 = vmatpush1.msra.mxu0 0.0
    %2836 = vmatprep.subr.mxu0 0.0
    %2837 = vmatpush1.msra.mxu0 0.0
    %2838 = vmatprep.subr.mxu0 0.0
    %2839 = vmatpush1.msra.mxu0 0.0
    %2840 = vmatprep.subr.mxu0 0.0
    %2841 = vmatpush1.msra.mxu0 %v2805
    %2842 = vmatprep.subr.mxu0 0.0
    %2843 = vmatpush2.msra.mxu0 0.0
    %2844 = vmatprep.subr.mxu0 0.0
    %2845 = vmatpush2.msra.mxu0 0.0
    %2846 = vmatprep.subr.mxu0 0.0
    %2847 = vmatpush2.msra.mxu0 0.0
    %2848 = vmatprep.subr.mxu0 0.0
    %2849 = vmatpush2.msra.mxu0 0.0
    %2850 = vmatprep.subr.mxu0 0.0
    %2851 = vmatpush2.msra.mxu0 0.0
    %2852 = vmatprep.subr.mxu0 0.0
    %2853 = vmatpush2.msra.mxu0 0.0
    %2854 = vmatprep.subr.mxu0 0.0
    %2855 = vmatpush2.msra.mxu0 0.0
    %2856 = vmatprep.subr.mxu0 0.0
    %2857 = vmatpush2.msra.mxu0 0.0
    %2858 = vmatprep.subr.mxu0 0.0
    %2859 = vmatpush2.msra.mxu0 0.0
    %2860 = vmatprep.subr.mxu0 0.0
    %2861 = vmatpush2.msra.mxu0 0.0
    %2862 = vmatprep.subr.mxu0 0.0
    %2863 = vmatpush2.msra.mxu0 0.0
    %2864 = vmatprep.subr.mxu0 0.0
    %2865 = vmatpush2.msra.mxu0 0.0
    %2866 = vmatprep.subr.mxu0 0.0
    %2867 = vmatpush2.msra.mxu0 0.0
    %2868 = vmatprep.subr.mxu0 0.0
    %2869 = vmatpush2.msra.mxu0 0.0
    %2870 = vmatprep.subr.mxu0 0.0
    %2871 = vmatpush2.msra.mxu0 0.0
    %2872 = vmatprep.subr.mxu0 0.0
    %2873 = vmatpush2.msra.mxu0 0.0
    %2874 = vmatprep.mubr.f32.mxu0 0.0
    %2875 = vmatmul.mubr.f32.gmra.mxu0 %v2808
    %v2876 = vpop.f32.mrf.mxu0
    %v2877 = vadd.f32 0.0, %v2876
    %v2878 = vpop.f32.mrf.mxu0
    %2879 = vdwg.mxu0
    %v2880 = vld [vmem:[#allocation2 + $0x170] sm:$0xf]
    %v2881 = vld [vmem:[#allocation2 + $0x174] sm:$0xf]
    %v2882 = vld [vmem:[#allocation2 + $0x178] sm:$0xf]
    %v2883 = vld [vmem:[#allocation2 + $0x17c] sm:$0xf]
    %v2884 = vunpack.c.l.bf16 %v2880
    %v2885 = vunpack.c.l.bf16 %v2881
    %v2886 = vunpack.c.l.bf16 %v2882
    %v2887 = vunpack.c.l.bf16 %v2883
    %v2888 = vld [vmem:[#allocation2 + $0x180] sm:$0x1]
    %v2889 = vunpack.c.l.bf16 %v2888
    %v2890 = vlaneseq
    %v2891 = vshrl.u32 %v2890, 7
    %v2892 = vsub.s32 0, %v2891
    %v2893 = vrot.slane %v2889, %v2892
    %v2895 = vsel %vm69, %v2801, 0
    %v2898 = vsel %vm69, %v2877, 0
    %2900 = vmatprep.subr.mxu0 0.0
    %2901 = vmatpush1.msra.mxu0 0.0
    %2902 = vmatprep.subr.mxu0 0.0
    %2903 = vmatpush1.msra.mxu0 0.0
    %2904 = vmatprep.subr.mxu0 0.0
    %2905 = vmatpush1.msra.mxu0 0.0
    %2906 = vmatprep.subr.mxu0 0.0
    %2907 = vmatpush1.msra.mxu0 0.0
    %2908 = vmatprep.subr.mxu0 0.0
    %2909 = vmatpush1.msra.mxu0 0.0
    %2910 = vmatprep.subr.mxu0 0.0
    %2911 = vmatpush1.msra.mxu0 0.0
    %2912 = vmatprep.subr.mxu0 0.0
    %2913 = vmatpush1.msra.mxu0 0.0
    %2914 = vmatprep.subr.mxu0 0.0
    %2915 = vmatpush1.msra.mxu0 0.0
    %2916 = vmatprep.subr.mxu0 0.0
    %2917 = vmatpush1.msra.mxu0 0.0
    %2918 = vmatprep.subr.mxu0 0.0
    %2919 = vmatpush1.msra.mxu0 0.0
    %2920 = vmatprep.subr.mxu0 0.0
    %2921 = vmatpush1.msra.mxu0 0.0
    %2922 = vmatprep.subr.mxu0 0.0
    %2923 = vmatpush1.msra.mxu0 0.0
    %2924 = vmatprep.subr.mxu0 0.0
    %2925 = vmatpush1.msra.mxu0 %v2887
    %2926 = vmatprep.subr.mxu0 0.0
    %2927 = vmatpush1.msra.mxu0 %v2886
    %2928 = vmatprep.subr.mxu0 0.0
    %2929 = vmatpush1.msra.mxu0 %v2885
    %2930 = vmatprep.subr.mxu0 0.0
    %2931 = vmatpush1.msra.mxu0 %v2884
    %2932 = vmatprep.subr.mxu0 0.0
    %2933 = vmatpush2.msra.mxu0 0.0
    %2934 = vmatprep.subr.mxu0 0.0
    %2935 = vmatpush2.msra.mxu0 0.0
    %2936 = vmatprep.subr.mxu0 0.0
    %2937 = vmatpush2.msra.mxu0 0.0
    %2938 = vmatprep.subr.mxu0 0.0
    %2939 = vmatpush2.msra.mxu0 0.0
    %2940 = vmatprep.subr.mxu0 0.0
    %2941 = vmatpush2.msra.mxu0 0.0
    %2942 = vmatprep.subr.mxu0 0.0
    %2943 = vmatpush2.msra.mxu0 0.0
    %2944 = vmatprep.subr.mxu0 0.0
    %2945 = vmatpush2.msra.mxu0 0.0
    %2946 = vmatprep.subr.mxu0 0.0
    %2947 = vmatpush2.msra.mxu0 0.0
    %2948 = vmatprep.subr.mxu0 0.0
    %2949 = vmatpush2.msra.mxu0 0.0
    %2950 = vmatprep.subr.mxu0 0.0
    %2951 = vmatpush2.msra.mxu0 0.0
    %2952 = vmatprep.subr.mxu0 0.0
    %2953 = vmatpush2.msra.mxu0 0.0
    %2954 = vmatprep.subr.mxu0 0.0
    %2955 = vmatpush2.msra.mxu0 0.0
    %2956 = vmatprep.subr.mxu0 0.0
    %2957 = vmatpush2.msra.mxu0 0.0
    %2958 = vmatprep.subr.mxu0 0.0
    %2959 = vmatpush2.msra.mxu0 0.0
    %2960 = vmatprep.subr.mxu0 0.0
    %2961 = vmatpush2.msra.mxu0 0.0
    %2962 = vmatprep.subr.mxu0 0.0
    %2963 = vmatpush2.msra.mxu0 0.0
    %2964 = vmatprep.mubr.f32.mxu0 0.0
    %2965 = vmatmul.mubr.f32.gmra.mxu0 %v2895
    %v2966 = vpop.f32.mrf.mxu0
    %v2967 = vadd.f32 %v2893, %v2966
    %v2968 = vpop.f32.mrf.mxu0
    %2969 = vmatprep.mubr.f32.mxu0 0.0
    %2970 = vmatmul.mubr.f32.gmra.mxu0 %v2898
    %v2971 = vpop.f32.mrf.mxu0
    %v2972 = vadd.f32 %v2893, %v2971
    %v2973 = vpop.f32.mrf.mxu0
    %2974 = vdwg.mxu0
    %v2975 = vadd.f32 %v2967, %v2444
    %v2976 = vadd.f32 %v2972, %v2445
    %v2977 = vld [vmem:[#allocation2 + $0x1dc] sm:$0x1]
    %v2978 = vunpack.c.l.bf16 %v2977
    %v2979 = vld [vmem:[#allocation2 + $0x1e0] sm:$0x1]
    %v2980 = vunpack.c.l.bf16 %v2979
    %v2981 = vsel %vm69, %v2975, 0.0
    %2982 = vadd.xlane.f32.xlu0 %v2981
    %v2983 = vpop.xlane.xlu0 %2982
    %v2984 = vsel %vm69, %v2976, 0.0
    %2985 = vadd.xlane.f32.xlu0 %v2984
    %v2986 = vpop.xlane.xlu0 %2985
    %v2987 = vmul.f32 %v2983, %v537
    %v2988 = vmul.f32 %v2986, %v537
    %v2989 = vsub.f32 %v2975, %v2987
    %v2990 = vsub.f32 %v2976, %v2988
    %v2991 = vmul.f32 %v2989, %v2989
    %v2992 = vmul.f32 %v2990, %v2990
    %v2993 = vsel %vm69, %v2991, 0.0
    %2994 = vadd.xlane.f32.xlu0 %v2993
    %v2995 = vpop.xlane.xlu0 %2994
    %v2996 = vsel %vm69, %v2992, 0.0
    %2997 = vadd.xlane.f32.xlu0 %v2996
    %v2998 = vpop.xlane.xlu0 %2997
    %v2999 = vmul.f32 %v2995, %v537
    %v3000 = vmul.f32 %v2998, %v537
    %v3001 = vadd.f32 %v2999, 1e-05
    %v3002 = vadd.f32 %v3000, 1e-05
    %v3003 = vrsqrt.pop %v3001
    %v3004 = vrsqrt.pop %v3002
    %v3005 = vmul.f32 %v2989, %v3003
    %v3006 = vmul.f32 %v2990, %v3004
    %v3007 = vlaneseq
    %v3008 = vshrl.u32 %v3007, 7
    %v3009 = vsub.s32 0, %v3008
    %v3010 = vrot.slane %v2978, %v3009
    %v3011 = vmul.f32 %v3005, %v3010
    %v3012 = vmul.f32 %v3006, %v3010
    %v3013 = vlaneseq
    %v3014 = vshrl.u32 %v3013, 7
    %v3015 = vsub.s32 0, %v3014
    %v3016 = vrot.slane %v2980, %v3015
    %v3017 = vadd.f32 %v3011, %v3016
    %v3018 = vadd.f32 %v3012, %v3016
    %v3019 = vld [vmem:[#allocation2 + $0x184] sm:$0xf]
    %v3020 = vld [vmem:[#allocation2 + $0x188] sm:$0xf]
    %v3021 = vld [vmem:[#allocation2 + $0x18c] sm:$0xf]
    %v3022 = vld [vmem:[#allocation2 + $0x190] sm:$0xf]
    %v3023 = vunpack.c.l.bf16 %v3019
    %v3024 = vunpack.c.l.bf16 %v3020
    %v3025 = vunpack.c.l.bf16 %v3021
    %v3026 = vunpack.c.l.bf16 %v3022
    %v3027 = vld [vmem:[#allocation2 + $0x194] sm:$0x1]
    %v3028 = vunpack.c.l.bf16 %v3027
    %v3029 = vlaneseq
    %v3030 = vshrl.u32 %v3029, 7
    %v3031 = vsub.s32 0, %v3030
    %v3032 = vrot.slane %v3028, %v3031
    %v3034 = vsel %vm69, %v3017, 0
    %v3037 = vsel %vm69, %v3018, 0
    %3039 = vmatprep.subr.mxu0 0.0
    %3040 = vmatpush1.msra.mxu0 0.0
    %3041 = vmatprep.subr.mxu0 0.0
    %3042 = vmatpush1.msra.mxu0 0.0
    %3043 = vmatprep.subr.mxu0 0.0
    %3044 = vmatpush1.msra.mxu0 0.0
    %3045 = vmatprep.subr.mxu0 0.0
    %3046 = vmatpush1.msra.mxu0 0.0
    %3047 = vmatprep.subr.mxu0 0.0
    %3048 = vmatpush1.msra.mxu0 0.0
    %3049 = vmatprep.subr.mxu0 0.0
    %3050 = vmatpush1.msra.mxu0 0.0
    %3051 = vmatprep.subr.mxu0 0.0
    %3052 = vmatpush1.msra.mxu0 0.0
    %3053 = vmatprep.subr.mxu0 0.0
    %3054 = vmatpush1.msra.mxu0 0.0
    %3055 = vmatprep.subr.mxu0 0.0
    %3056 = vmatpush1.msra.mxu0 0.0
    %3057 = vmatprep.subr.mxu0 0.0
    %3058 = vmatpush1.msra.mxu0 0.0
    %3059 = vmatprep.subr.mxu0 0.0
    %3060 = vmatpush1.msra.mxu0 0.0
    %3061 = vmatprep.subr.mxu0 0.0
    %3062 = vmatpush1.msra.mxu0 0.0
    %3063 = vmatprep.subr.mxu0 0.0
    %3064 = vmatpush1.msra.mxu0 %v3026
    %3065 = vmatprep.subr.mxu0 0.0
    %3066 = vmatpush1.msra.mxu0 %v3025
    %3067 = vmatprep.subr.mxu0 0.0
    %3068 = vmatpush1.msra.mxu0 %v3024
    %3069 = vmatprep.subr.mxu0 0.0
    %3070 = vmatpush1.msra.mxu0 %v3023
    %3071 = vmatprep.subr.mxu0 0.0
    %3072 = vmatpush2.msra.mxu0 0.0
    %3073 = vmatprep.subr.mxu0 0.0
    %3074 = vmatpush2.msra.mxu0 0.0
    %3075 = vmatprep.subr.mxu0 0.0
    %3076 = vmatpush2.msra.mxu0 0.0
    %3077 = vmatprep.subr.mxu0 0.0
    %3078 = vmatpush2.msra.mxu0 0.0
    %3079 = vmatprep.subr.mxu0 0.0
    %3080 = vmatpush2.msra.mxu0 0.0
    %3081 = vmatprep.subr.mxu0 0.0
    %3082 = vmatpush2.msra.mxu0 0.0
    %3083 = vmatprep.subr.mxu0 0.0
    %3084 = vmatpush2.msra.mxu0 0.0
    %3085 = vmatprep.subr.mxu0 0.0
    %3086 = vmatpush2.msra.mxu0 0.0
    %3087 = vmatprep.subr.mxu0 0.0
    %3088 = vmatpush2.msra.mxu0 0.0
    %3089 = vmatprep.subr.mxu0 0.0
    %3090 = vmatpush2.msra.mxu0 0.0
    %3091 = vmatprep.subr.mxu0 0.0
    %3092 = vmatpush2.msra.mxu0 0.0
    %3093 = vmatprep.subr.mxu0 0.0
    %3094 = vmatpush2.msra.mxu0 0.0
    %3095 = vmatprep.subr.mxu0 0.0
    %3096 = vmatpush2.msra.mxu0 0.0
    %3097 = vmatprep.subr.mxu0 0.0
    %3098 = vmatpush2.msra.mxu0 0.0
    %3099 = vmatprep.subr.mxu0 0.0
    %3100 = vmatpush2.msra.mxu0 0.0
    %3101 = vmatprep.subr.mxu0 0.0
    %3102 = vmatpush2.msra.mxu0 0.0
    %3103 = vmatprep.mubr.f32.mxu0 0.0
    %3104 = vmatmul.mubr.f32.gmra.mxu0 %v3034
    %v3105 = vpop.f32.mrf.mxu0
    %v3106 = vadd.f32 %v3032, %v3105
    %v3107 = vpop.f32.mrf.mxu0
    %3108 = vmatprep.mubr.f32.mxu0 0.0
    %3109 = vmatmul.mubr.f32.gmra.mxu0 %v3037
    %v3110 = vpop.f32.mrf.mxu0
    %v3111 = vadd.f32 %v3032, %v3110
    %v3112 = vpop.f32.mrf.mxu0
    %3113 = vdwg.mxu0
    %v3114 = vmax.f32 %v3106, 0.0
    %v3115 = vmax.f32 %v3111, 0.0
    %v3116 = vld [vmem:[#allocation2 + $0x198] sm:$0xf]
    %v3117 = vld [vmem:[#allocation2 + $0x19c] sm:$0xf]
    %v3118 = vld [vmem:[#allocation2 + $0x1a0] sm:$0xf]
    %v3119 = vld [vmem:[#allocation2 + $0x1a4] sm:$0xf]
    %v3120 = vld [vmem:[#allocation2 + $0x1a8] sm:$0xf]
    %v3121 = vld [vmem:[#allocation2 + $0x1ac] sm:$0xf]
    %v3122 = vld [vmem:[#allocation2 + $0x1b0] sm:$0xf]
    %v3123 = vld [vmem:[#allocation2 + $0x1b4] sm:$0xf]
    %v3124 = vld [vmem:[#allocation2 + $0x1b8] sm:$0xf]
    %v3125 = vld [vmem:[#allocation2 + $0x1bc] sm:$0xf]
    %v3126 = vld [vmem:[#allocation2 + $0x1c0] sm:$0xf]
    %v3127 = vld [vmem:[#allocation2 + $0x1c4] sm:$0xf]
    %v3128 = vld [vmem:[#allocation2 + $0x1c8] sm:$0xf]
    %v3129 = vld [vmem:[#allocation2 + $0x1cc] sm:$0xf]
    %v3130 = vld [vmem:[#allocation2 + $0x1d0] sm:$0xf]
    %v3131 = vld [vmem:[#allocation2 + $0x1d4] sm:$0xf]
    %v3132 = vunpack.c.l.bf16 %v3116
    %v3133 = vunpack.c.l.bf16 %v3117
    %v3134 = vunpack.c.l.bf16 %v3118
    %v3135 = vunpack.c.l.bf16 %v3119
    %v3136 = vunpack.c.l.bf16 %v3120
    %v3137 = vunpack.c.l.bf16 %v3121
    %v3138 = vunpack.c.l.bf16 %v3122
    %v3139 = vunpack.c.l.bf16 %v3123
    %v3140 = vunpack.c.l.bf16 %v3124
    %v3141 = vunpack.c.l.bf16 %v3125
    %v3142 = vunpack.c.l.bf16 %v3126
    %v3143 = vunpack.c.l.bf16 %v3127
    %v3144 = vunpack.c.l.bf16 %v3128
    %v3145 = vunpack.c.l.bf16 %v3129
    %v3146 = vunpack.c.l.bf16 %v3130
    %v3147 = vunpack.c.l.bf16 %v3131
    %v3148 = vld [vmem:[#allocation2 + $0x1d8] sm:$0x1]
    %v3149 = vunpack.c.l.bf16 %v3148
    %v3150 = vlaneseq
    %v3151 = vshrl.u32 %v3150, 7
    %v3152 = vsub.s32 0, %v3151
    %v3153 = vrot.slane %v3149, %v3152
    %3154 = vmatprep.subr.mxu0 0.0
    %3155 = vmatpush1.msra.mxu0 %v3147
    %3156 = vmatprep.subr.mxu0 0.0
    %3157 = vmatpush1.msra.mxu0 %v3146
    %3158 = vmatprep.subr.mxu0 0.0
    %3159 = vmatpush1.msra.mxu0 %v3145
    %3160 = vmatprep.subr.mxu0 0.0
    %3161 = vmatpush1.msra.mxu0 %v3144
    %3162 = vmatprep.subr.mxu0 0.0
    %3163 = vmatpush1.msra.mxu0 %v3143
    %3164 = vmatprep.subr.mxu0 0.0
    %3165 = vmatpush1.msra.mxu0 %v3142
    %3166 = vmatprep.subr.mxu0 0.0
    %3167 = vmatpush1.msra.mxu0 %v3141
    %3168 = vmatprep.subr.mxu0 0.0
    %3169 = vmatpush1.msra.mxu0 %v3140
    %3170 = vmatprep.subr.mxu0 0.0
    %3171 = vmatpush1.msra.mxu0 %v3139
    %3172 = vmatprep.subr.mxu0 0.0
    %3173 = vmatpush1.msra.mxu0 %v3138
    %3174 = vmatprep.subr.mxu0 0.0
    %3175 = vmatpush1.msra.mxu0 %v3137
    %3176 = vmatprep.subr.mxu0 0.0
    %3177 = vmatpush1.msra.mxu0 %v3136
    %3178 = vmatprep.subr.mxu0 0.0
    %3179 = vmatpush1.msra.mxu0 %v3135
    %3180 = vmatprep.subr.mxu0 0.0
    %3181 = vmatpush1.msra.mxu0 %v3134
    %3182 = vmatprep.subr.mxu0 0.0
    %3183 = vmatpush1.msra.mxu0 %v3133
    %3184 = vmatprep.subr.mxu0 0.0
    %3185 = vmatpush1.msra.mxu0 %v3132
    %3186 = vmatprep.subr.mxu0 0.0
    %3187 = vmatpush2.msra.mxu0 0.0
    %3188 = vmatprep.subr.mxu0 0.0
    %3189 = vmatpush2.msra.mxu0 0.0
    %3190 = vmatprep.subr.mxu0 0.0
    %3191 = vmatpush2.msra.mxu0 0.0
    %3192 = vmatprep.subr.mxu0 0.0
    %3193 = vmatpush2.msra.mxu0 0.0
    %3194 = vmatprep.subr.mxu0 0.0
    %3195 = vmatpush2.msra.mxu0 0.0
    %3196 = vmatprep.subr.mxu0 0.0
    %3197 = vmatpush2.msra.mxu0 0.0
    %3198 = vmatprep.subr.mxu0 0.0
    %3199 = vmatpush2.msra.mxu0 0.0
    %3200 = vmatprep.subr.mxu0 0.0
    %3201 = vmatpush2.msra.mxu0 0.0
    %3202 = vmatprep.subr.mxu0 0.0
    %3203 = vmatpush2.msra.mxu0 0.0
    %3204 = vmatprep.subr.mxu0 0.0
    %3205 = vmatpush2.msra.mxu0 0.0
    %3206 = vmatprep.subr.mxu0 0.0
    %3207 = vmatpush2.msra.mxu0 0.0
    %3208 = vmatprep.subr.mxu0 0.0
    %3209 = vmatpush2.msra.mxu0 0.0
    %3210 = vmatprep.subr.mxu0 0.0
    %3211 = vmatpush2.msra.mxu0 0.0
    %3212 = vmatprep.subr.mxu0 0.0
    %3213 = vmatpush2.msra.mxu0 0.0
    %3214 = vmatprep.subr.mxu0 0.0
    %3215 = vmatpush2.msra.mxu0 0.0
    %3216 = vmatprep.subr.mxu0 0.0
    %3217 = vmatpush2.msra.mxu0 0.0
    %3218 = vmatprep.mubr.f32.mxu0 0.0
    %3219 = vmatmul.mubr.f32.gmra.mxu0 %v3114
    %v3220 = vpop.f32.mrf.mxu0
    %v3221 = vadd.f32 %v3153, %v3220
    %v3222 = vpop.f32.mrf.mxu0
    %3223 = vmatprep.mubr.f32.mxu0 0.0
    %3224 = vmatmul.mubr.f32.gmra.mxu0 %v3115
    %v3225 = vpop.f32.mrf.mxu0
    %v3226 = vadd.f32 %v3153, %v3225
    %v3227 = vpop.f32.mrf.mxu0
    %3228 = vdwg.mxu0
    %v3229 = vadd.f32 %v3017, %v3221
    %v3230 = vadd.f32 %v3018, %v3226
    %v3231 = vld [vmem:[#allocation2 + $0x1e4] sm:$0x1]
    %v3232 = vunpack.c.l.bf16 %v3231
    %v3233 = vld [vmem:[#allocation2 + $0x1e8] sm:$0x1]
    %v3234 = vunpack.c.l.bf16 %v3233
    %v3235 = vsel %vm69, %v3229, 0.0
    %3236 = vadd.xlane.f32.xlu0 %v3235
    %v3237 = vpop.xlane.xlu0 %3236
    %v3238 = vsel %vm69, %v3230, 0.0
    %3239 = vadd.xlane.f32.xlu0 %v3238
    %v3240 = vpop.xlane.xlu0 %3239
    %v3241 = vmul.f32 %v3237, %v537
    %v3242 = vmul.f32 %v3240, %v537
    %v3243 = vsub.f32 %v3229, %v3241
    %v3244 = vsub.f32 %v3230, %v3242
    %v3245 = vmul.f32 %v3243, %v3243
    %v3246 = vmul.f32 %v3244, %v3244
    %v3247 = vsel %vm69, %v3245, 0.0
    %3248 = vadd.xlane.f32.xlu0 %v3247
    %v3249 = vpop.xlane.xlu0 %3248
    %v3250 = vsel %vm69, %v3246, 0.0
    %3251 = vadd.xlane.f32.xlu0 %v3250
    %v3252 = vpop.xlane.xlu0 %3251
    %v3253 = vmul.f32 %v3249, %v537
    %v3254 = vmul.f32 %v3252, %v537
    %v3255 = vadd.f32 %v3253, 1e-05
    %v3256 = vadd.f32 %v3254, 1e-05
    %v3257 = vrsqrt.pop %v3255
    %v3258 = vrsqrt.pop %v3256
    %v3259 = vmul.f32 %v3243, %v3257
    %v3260 = vmul.f32 %v3244, %v3258
    %v3261 = vlaneseq
    %v3262 = vshrl.u32 %v3261, 7
    %v3263 = vsub.s32 0, %v3262
    %v3264 = vrot.slane %v3232, %v3263
    %v3265 = vmul.f32 %v3259, %v3264
    %v3266 = vmul.f32 %v3260, %v3264
    %v3267 = vlaneseq
    %v3268 = vshrl.u32 %v3267, 7
    %v3269 = vsub.s32 0, %v3268
    %v3270 = vrot.slane %v3234, %v3269
    %v3271 = vadd.f32 %v3265, %v3270
    %v3272 = vadd.f32 %v3266, %v3270
    %v3273 = vld [vmem:[%s2] sm:$0x3]
    %v3274 = vld [vmem:[#allocation2 + $0x1ec] sm:$0xf]
    %v3275 = vunpack.c.l.bf16 %v3274
    %v3276 = vld [vmem:[#allocation2 + $0x1f0] sm:$0x1]
    %v3277 = vunpack.c.l.bf16 %v3276
    %v3278 = vlaneseq
    %v3279 = vshrl.u32 %v3278, 7
    %v3280 = vsub.s32 0, %v3279
    %v3281 = vrot.slane %v3277, %v3280
    %v3283 = vsel %vm1878, %v3273, 0
    %3285 = vmatprep.subr.mxu0 0.0
    %3286 = vmatpush1.msra.mxu0 0.0
    %3287 = vmatprep.subr.mxu0 0.0
    %3288 = vmatpush1.msra.mxu0 0.0
    %3289 = vmatprep.subr.mxu0 0.0
    %3290 = vmatpush1.msra.mxu0 0.0
    %3291 = vmatprep.subr.mxu0 0.0
    %3292 = vmatpush1.msra.mxu0 0.0
    %3293 = vmatprep.subr.mxu0 0.0
    %3294 = vmatpush1.msra.mxu0 0.0
    %3295 = vmatprep.subr.mxu0 0.0
    %3296 = vmatpush1.msra.mxu0 0.0
    %3297 = vmatprep.subr.mxu0 0.0
    %3298 = vmatpush1.msra.mxu0 0.0
    %3299 = vmatprep.subr.mxu0 0.0
    %3300 = vmatpush1.msra.mxu0 0.0
    %3301 = vmatprep.subr.mxu0 0.0
    %3302 = vmatpush1.msra.mxu0 0.0
    %3303 = vmatprep.subr.mxu0 0.0
    %3304 = vmatpush1.msra.mxu0 0.0
    %3305 = vmatprep.subr.mxu0 0.0
    %3306 = vmatpush1.msra.mxu0 0.0
    %3307 = vmatprep.subr.mxu0 0.0
    %3308 = vmatpush1.msra.mxu0 0.0
    %3309 = vmatprep.subr.mxu0 0.0
    %3310 = vmatpush1.msra.mxu0 0.0
    %3311 = vmatprep.subr.mxu0 0.0
    %3312 = vmatpush1.msra.mxu0 0.0
    %3313 = vmatprep.subr.mxu0 0.0
    %3314 = vmatpush1.msra.mxu0 0.0
    %3315 = vmatprep.subr.mxu0 0.0
    %3316 = vmatpush1.msra.mxu0 %v3275
    %3317 = vmatprep.subr.mxu0 0.0
    %3318 = vmatpush2.msra.mxu0 0.0
    %3319 = vmatprep.subr.mxu0 0.0
    %3320 = vmatpush2.msra.mxu0 0.0
    %3321 = vmatprep.subr.mxu0 0.0
    %3322 = vmatpush2.msra.mxu0 0.0
    %3323 = vmatprep.subr.mxu0 0.0
    %3324 = vmatpush2.msra.mxu0 0.0
    %3325 = vmatprep.subr.mxu0 0.0
    %3326 = vmatpush2.msra.mxu0 0.0
    %3327 = vmatprep.subr.mxu0 0.0
    %3328 = vmatpush2.msra.mxu0 0.0
    %3329 = vmatprep.subr.mxu0 0.0
    %3330 = vmatpush2.msra.mxu0 0.0
    %3331 = vmatprep.subr.mxu0 0.0
    %3332 = vmatpush2.msra.mxu0 0.0
    %3333 = vmatprep.subr.mxu0 0.0
    %3334 = vmatpush2.msra.mxu0 0.0
    %3335 = vmatprep.subr.mxu0 0.0
    %3336 = vmatpush2.msra.mxu0 0.0
    %3337 = vmatprep.subr.mxu0 0.0
    %3338 = vmatpush2.msra.mxu0 0.0
    %3339 = vmatprep.subr.mxu0 0.0
    %3340 = vmatpush2.msra.mxu0 0.0
    %3341 = vmatprep.subr.mxu0 0.0
    %3342 = vmatpush2.msra.mxu0 0.0
    %3343 = vmatprep.subr.mxu0 0.0
    %3344 = vmatpush2.msra.mxu0 0.0
    %3345 = vmatprep.subr.mxu0 0.0
    %3346 = vmatpush2.msra.mxu0 0.0
    %3347 = vmatprep.subr.mxu0 0.0
    %3348 = vmatpush2.msra.mxu0 0.0
    %3349 = vmatprep.mubr.f32.mxu0 0.0
    %3350 = vmatmul.mubr.f32.gmra.mxu0 %v3283
    %v3351 = vpop.f32.mrf.mxu0
    %v3352 = vadd.f32 %v3281, %v3351
    %v3353 = vpop.f32.mrf.mxu0
    %3354 = vdwg.mxu0
    %v3355 = vmax.f32 %v3352, 0.0
    %v3356 = vld [vmem:[#allocation2 + $0x1f4] sm:$0xf]
    %v3357 = vld [vmem:[#allocation2 + $0x1f8] sm:$0xf]
    %v3358 = vunpack.c.l.bf16 %v3356
    %v3359 = vunpack.c.l.bf16 %v3357
    %v3360 = vld [vmem:[#allocation2 + $0x1fc] sm:$0x1]
    %v3361 = vunpack.c.l.bf16 %v3360
    %v3362 = vlaneseq
    %v3363 = vshrl.u32 %v3362, 7
    %v3364 = vsub.s32 0, %v3363
    %v3365 = vrot.slane %v3361, %v3364
    %v3367 = vsel %vm320, %v3355, 0
    %3369 = vmatprep.subr.mxu0 0.0
    %3370 = vmatpush1.msra.mxu0 0.0
    %3371 = vmatprep.subr.mxu0 0.0
    %3372 = vmatpush1.msra.mxu0 0.0
    %3373 = vmatprep.subr.mxu0 0.0
    %3374 = vmatpush1.msra.mxu0 0.0
    %3375 = vmatprep.subr.mxu0 0.0
    %3376 = vmatpush1.msra.mxu0 0.0
    %3377 = vmatprep.subr.mxu0 0.0
    %3378 = vmatpush1.msra.mxu0 0.0
    %3379 = vmatprep.subr.mxu0 0.0
    %3380 = vmatpush1.msra.mxu0 0.0
    %3381 = vmatprep.subr.mxu0 0.0
    %3382 = vmatpush1.msra.mxu0 0.0
    %3383 = vmatprep.subr.mxu0 0.0
    %3384 = vmatpush1.msra.mxu0 0.0
    %3385 = vmatprep.subr.mxu0 0.0
    %3386 = vmatpush1.msra.mxu0 0.0
    %3387 = vmatprep.subr.mxu0 0.0
    %3388 = vmatpush1.msra.mxu0 0.0
    %3389 = vmatprep.subr.mxu0 0.0
    %3390 = vmatpush1.msra.mxu0 0.0
    %3391 = vmatprep.subr.mxu0 0.0
    %3392 = vmatpush1.msra.mxu0 0.0
    %3393 = vmatprep.subr.mxu0 0.0
    %3394 = vmatpush1.msra.mxu0 0.0
    %3395 = vmatprep.subr.mxu0 0.0
    %3396 = vmatpush1.msra.mxu0 0.0
    %3397 = vmatprep.subr.mxu0 0.0
    %3398 = vmatpush1.msra.mxu0 %v3359
    %3399 = vmatprep.subr.mxu0 0.0
    %3400 = vmatpush1.msra.mxu0 %v3358
    %3401 = vmatprep.subr.mxu0 0.0
    %3402 = vmatpush2.msra.mxu0 0.0
    %3403 = vmatprep.subr.mxu0 0.0
    %3404 = vmatpush2.msra.mxu0 0.0
    %3405 = vmatprep.subr.mxu0 0.0
    %3406 = vmatpush2.msra.mxu0 0.0
    %3407 = vmatprep.subr.mxu0 0.0
    %3408 = vmatpush2.msra.mxu0 0.0
    %3409 = vmatprep.subr.mxu0 0.0
    %3410 = vmatpush2.msra.mxu0 0.0
    %3411 = vmatprep.subr.mxu0 0.0
    %3412 = vmatpush2.msra.mxu0 0.0
    %3413 = vmatprep.subr.mxu0 0.0
    %3414 = vmatpush2.msra.mxu0 0.0
    %3415 = vmatprep.subr.mxu0 0.0
    %3416 = vmatpush2.msra.mxu0 0.0
    %3417 = vmatprep.subr.mxu0 0.0
    %3418 = vmatpush2.msra.mxu0 0.0
    %3419 = vmatprep.subr.mxu0 0.0
    %3420 = vmatpush2.msra.mxu0 0.0
    %3421 = vmatprep.subr.mxu0 0.0
    %3422 = vmatpush2.msra.mxu0 0.0
    %3423 = vmatprep.subr.mxu0 0.0
    %3424 = vmatpush2.msra.mxu0 0.0
    %3425 = vmatprep.subr.mxu0 0.0
    %3426 = vmatpush2.msra.mxu0 0.0
    %3427 = vmatprep.subr.mxu0 0.0
    %3428 = vmatpush2.msra.mxu0 0.0
    %3429 = vmatprep.subr.mxu0 0.0
    %3430 = vmatpush2.msra.mxu0 0.0
    %3431 = vmatprep.subr.mxu0 0.0
    %3432 = vmatpush2.msra.mxu0 0.0
    %3433 = vmatprep.mubr.f32.mxu0 0.0
    %3434 = vmatmul.mubr.f32.gmra.mxu0 %v3367
    %v3435 = vpop.f32.mrf.mxu0
    %v3436 = vadd.f32 %v3365, %v3435
    %v3437 = vpop.f32.mrf.mxu0
    %3438 = vdwg.mxu0
    %v3439 = vmax.f32 %v3436, 0.0
    %v3440 = vld [vmem:[#allocation2 + $0x200] sm:$0xf]
    %v3441 = vld [vmem:[#allocation2 + $0x204] sm:$0xf]
    %v3442 = vunpack.c.l.bf16 %v3440
    %v3443 = vunpack.c.l.bf16 %v3441
    %v3444 = vld [vmem:[#allocation2 + $0x208] sm:$0x1]
    %v3445 = vunpack.c.l.bf16 %v3444
    %v3446 = vlaneseq
    %v3447 = vshrl.u32 %v3446, 7
    %v3448 = vsub.s32 0, %v3447
    %v3449 = vrot.slane %v3445, %v3448
    %v3451 = vsel %vm320, %v3439, 0
    %3453 = vmatprep.subr.mxu0 0.0
    %3454 = vmatpush1.msra.mxu0 0.0
    %3455 = vmatprep.subr.mxu0 0.0
    %3456 = vmatpush1.msra.mxu0 0.0
    %3457 = vmatprep.subr.mxu0 0.0
    %3458 = vmatpush1.msra.mxu0 0.0
    %3459 = vmatprep.subr.mxu0 0.0
    %3460 = vmatpush1.msra.mxu0 0.0
    %3461 = vmatprep.subr.mxu0 0.0
    %3462 = vmatpush1.msra.mxu0 0.0
    %3463 = vmatprep.subr.mxu0 0.0
    %3464 = vmatpush1.msra.mxu0 0.0
    %3465 = vmatprep.subr.mxu0 0.0
    %3466 = vmatpush1.msra.mxu0 0.0
    %3467 = vmatprep.subr.mxu0 0.0
    %3468 = vmatpush1.msra.mxu0 0.0
    %3469 = vmatprep.subr.mxu0 0.0
    %3470 = vmatpush1.msra.mxu0 0.0
    %3471 = vmatprep.subr.mxu0 0.0
    %3472 = vmatpush1.msra.mxu0 0.0
    %3473 = vmatprep.subr.mxu0 0.0
    %3474 = vmatpush1.msra.mxu0 0.0
    %3475 = vmatprep.subr.mxu0 0.0
    %3476 = vmatpush1.msra.mxu0 0.0
    %3477 = vmatprep.subr.mxu0 0.0
    %3478 = vmatpush1.msra.mxu0 0.0
    %3479 = vmatprep.subr.mxu0 0.0
    %3480 = vmatpush1.msra.mxu0 0.0
    %3481 = vmatprep.subr.mxu0 0.0
    %3482 = vmatpush1.msra.mxu0 %v3443
    %3483 = vmatprep.subr.mxu0 0.0
    %3484 = vmatpush1.msra.mxu0 %v3442
    %3485 = vmatprep.subr.mxu0 0.0
    %3486 = vmatpush2.msra.mxu0 0.0
    %3487 = vmatprep.subr.mxu0 0.0
    %3488 = vmatpush2.msra.mxu0 0.0
    %3489 = vmatprep.subr.mxu0 0.0
    %3490 = vmatpush2.msra.mxu0 0.0
    %3491 = vmatprep.subr.mxu0 0.0
    %3492 = vmatpush2.msra.mxu0 0.0
    %3493 = vmatprep.subr.mxu0 0.0
    %3494 = vmatpush2.msra.mxu0 0.0
    %3495 = vmatprep.subr.mxu0 0.0
    %3496 = vmatpush2.msra.mxu0 0.0
    %3497 = vmatprep.subr.mxu0 0.0
    %3498 = vmatpush2.msra.mxu0 0.0
    %3499 = vmatprep.subr.mxu0 0.0
    %3500 = vmatpush2.msra.mxu0 0.0
    %3501 = vmatprep.subr.mxu0 0.0
    %3502 = vmatpush2.msra.mxu0 0.0
    %3503 = vmatprep.subr.mxu0 0.0
    %3504 = vmatpush2.msra.mxu0 0.0
    %3505 = vmatprep.subr.mxu0 0.0
    %3506 = vmatpush2.msra.mxu0 0.0
    %3507 = vmatprep.subr.mxu0 0.0
    %3508 = vmatpush2.msra.mxu0 0.0
    %3509 = vmatprep.subr.mxu0 0.0
    %3510 = vmatpush2.msra.mxu0 0.0
    %3511 = vmatprep.subr.mxu0 0.0
    %3512 = vmatpush2.msra.mxu0 0.0
    %3513 = vmatprep.subr.mxu0 0.0
    %3514 = vmatpush2.msra.mxu0 0.0
    %3515 = vmatprep.subr.mxu0 0.0
    %3516 = vmatpush2.msra.mxu0 0.0
    %3517 = vmatprep.mubr.f32.mxu0 0.0
    %3518 = vmatmul.mubr.f32.gmra.mxu0 %v3451
    %v3519 = vpop.f32.mrf.mxu0
    %v3520 = vadd.f32 %v3449, %v3519
    %v3521 = vpop.f32.mrf.mxu0
    %3522 = vdwg.mxu0
    %v3523 = vld [vmem:[#allocation2 + $0x20c] sm:$0x1]
    %v3524 = vunpack.c.l.bf16 %v3523
    %v3525 = vld [vmem:[#allocation2 + $0x210] sm:$0x1]
    %v3526 = vunpack.c.l.bf16 %v3525
    %vm3527 = vcmask 254976
    %v3528 = vsel %vm3527, %v3520, 0.0
    %3529 = vadd.xlane.f32.xlu0 %v3528
    %v3530 = vpop.xlane.xlu0 %3529
    %v3531 = vmul.f32 %v3530, %v537
    %v3532 = vsub.f32 %v3520, %v3531
    %v3533 = vmul.f32 %v3532, %v3532
    %v3534 = vsel %vm3527, %v3533, 0.0
    %3535 = vadd.xlane.f32.xlu0 %v3534
    %v3536 = vpop.xlane.xlu0 %3535
    %v3537 = vmul.f32 %v3536, %v537
    %v3538 = vadd.f32 %v3537, 1e-05
    %v3539 = vrsqrt.pop %v3538
    %v3540 = vmul.f32 %v3532, %v3539
    %v3541 = vlaneseq
    %v3542 = vshrl.u32 %v3541, 7
    %v3543 = vsub.s32 0, %v3542
    %v3544 = vrot.slane %v3524, %v3543
    %v3545 = vmul.f32 %v3540, %v3544
    %v3546 = vlaneseq
    %v3547 = vshrl.u32 %v3546, 7
    %v3548 = vsub.s32 0, %v3547
    %v3549 = vrot.slane %v3526, %v3548
    %v3550 = vadd.f32 %v3545, %v3549
    %v3551 = vld [vmem:[#allocation2 + $0x214] sm:$0xf]
    %v3552 = vld [vmem:[#allocation2 + $0x218] sm:$0xf]
    %v3553 = vld [vmem:[#allocation2 + $0x21c] sm:$0xf]
    %v3554 = vld [vmem:[#allocation2 + $0x220] sm:$0xf]
    %v3555 = vunpack.c.l.bf16 %v3551
    %v3556 = vunpack.c.l.bf16 %v3552
    %v3557 = vunpack.c.l.bf16 %v3553
    %v3558 = vunpack.c.l.bf16 %v3554
    %v3559 = vld [vmem:[#allocation2 + $0x224] sm:$0x1]
    %v3560 = vunpack.c.l.bf16 %v3559
    %v3561 = vlaneseq
    %v3562 = vshrl.u32 %v3561, 7
    %v3563 = vsub.s32 0, %v3562
    %v3564 = vrot.slane %v3560, %v3563
    %v3567 = vrot.slane %v3272, 7
    %vm3568 = vcmask 1041409
    %v3569 = vsel %vm3568, %v3567, %v3271
    %v3570 = vsel %vm69, %v3569, 0
    %3572 = vmatprep.subr.mxu0 0.0
    %3573 = vmatpush1.msra.mxu0 0.0
    %3574 = vmatprep.subr.mxu0 0.0
    %3575 = vmatpush1.msra.mxu0 0.0
    %3576 = vmatprep.subr.mxu0 0.0
    %3577 = vmatpush1.msra.mxu0 0.0
    %3578 = vmatprep.subr.mxu0 0.0
    %3579 = vmatpush1.msra.mxu0 0.0
    %3580 = vmatprep.subr.mxu0 0.0
    %3581 = vmatpush1.msra.mxu0 0.0
    %3582 = vmatprep.subr.mxu0 0.0
    %3583 = vmatpush1.msra.mxu0 0.0
    %3584 = vmatprep.subr.mxu0 0.0
    %3585 = vmatpush1.msra.mxu0 0.0
    %3586 = vmatprep.subr.mxu0 0.0
    %3587 = vmatpush1.msra.mxu0 0.0
    %3588 = vmatprep.subr.mxu0 0.0
    %3589 = vmatpush1.msra.mxu0 0.0
    %3590 = vmatprep.subr.mxu0 0.0
    %3591 = vmatpush1.msra.mxu0 0.0
    %3592 = vmatprep.subr.mxu0 0.0
    %3593 = vmatpush1.msra.mxu0 0.0
    %3594 = vmatprep.subr.mxu0 0.0
    %3595 = vmatpush1.msra.mxu0 0.0
    %3596 = vmatprep.subr.mxu0 0.0
    %3597 = vmatpush1.msra.mxu0 %v3558
    %3598 = vmatprep.subr.mxu0 0.0
    %3599 = vmatpush1.msra.mxu0 %v3557
    %3600 = vmatprep.subr.mxu0 0.0
    %3601 = vmatpush1.msra.mxu0 %v3556
    %3602 = vmatprep.subr.mxu0 0.0
    %3603 = vmatpush1.msra.mxu0 %v3555
    %3604 = vmatprep.subr.mxu0 0.0
    %3605 = vmatpush2.msra.mxu0 0.0
    %3606 = vmatprep.subr.mxu0 0.0
    %3607 = vmatpush2.msra.mxu0 0.0
    %3608 = vmatprep.subr.mxu0 0.0
    %3609 = vmatpush2.msra.mxu0 0.0
    %3610 = vmatprep.subr.mxu0 0.0
    %3611 = vmatpush2.msra.mxu0 0.0
    %3612 = vmatprep.subr.mxu0 0.0
    %3613 = vmatpush2.msra.mxu0 0.0
    %3614 = vmatprep.subr.mxu0 0.0
    %3615 = vmatpush2.msra.mxu0 0.0
    %3616 = vmatprep.subr.mxu0 0.0
    %3617 = vmatpush2.msra.mxu0 0.0
    %3618 = vmatprep.subr.mxu0 0.0
    %3619 = vmatpush2.msra.mxu0 0.0
    %3620 = vmatprep.subr.mxu0 0.0
    %3621 = vmatpush2.msra.mxu0 0.0
    %3622 = vmatprep.subr.mxu0 0.0
    %3623 = vmatpush2.msra.mxu0 0.0
    %3624 = vmatprep.subr.mxu0 0.0
    %3625 = vmatpush2.msra.mxu0 0.0
    %3626 = vmatprep.subr.mxu0 0.0
    %3627 = vmatpush2.msra.mxu0 0.0
    %3628 = vmatprep.subr.mxu0 0.0
    %3629 = vmatpush2.msra.mxu0 0.0
    %3630 = vmatprep.subr.mxu0 0.0
    %3631 = vmatpush2.msra.mxu0 0.0
    %3632 = vmatprep.subr.mxu0 0.0
    %3633 = vmatpush2.msra.mxu0 0.0
    %3634 = vmatprep.subr.mxu0 0.0
    %3635 = vmatpush2.msra.mxu0 0.0
    %3636 = vmatprep.mubr.f32.mxu0 0.0
    %3637 = vmatmul.mubr.f32.gmra.mxu0 %v3570
    %v3638 = vpop.f32.mrf.mxu0
    %v3639 = vadd.f32 %v3564, %v3638
    %v3640 = vpop.f32.mrf.mxu0
    %3641 = vdwg.mxu0
    %3643 = vrot.lane.b32.xlu0 %v3639, 32
    %v3644 = vpop.permute.xlu0 %3643
    %v3646 = vsel %vm69, %v3550, %v3644
    %vm3647 = vcmask 269312
    %v3648 = vsel %vm3647, %v3646, 0.0
    %3649 = vst [vmem:[#allocation7] sm:$0x3] %v3648
    // Predicated region
    $region22: #{tpu_custom_call.1} parent=1 // pred_check
      _
    $region23: #{tpu_custom_call.1} parent=1 // pred_check_branch
      %3651 = sbr.rel (0) target = $region25
    $region24: #{tpu_custom_call.1} parent=1 // pred_region
      %s3653 = ssub.s32 32, 32
      %3654 = vsyncadd [#allocation4], %s3653
      %s3656 = sshll.u32 [#allocation7], 4
      %s3657 = int_to_ptr.vmem [resolvable:$true] %s3656
      %3659 = dma.vmem_to_hbm [thread:$0]  %s3657, 32, %s3, [#allocation4]
    $region25: #{tpu_custom_call.1} parent=1 // pred_fallthru
      _
    // Predicated region
    $region26: #{tpu_custom_call.1} parent=1 // pred_check
      _
    $region27: #{tpu_custom_call.1} parent=1 // pred_check_branch
      %3661 = sbr.rel (0) target = $region29
    $region28: #{tpu_custom_call.1} parent=1 // pred_region
      %3662 = dma.done [#allocation4], 32
    $region29: #{tpu_custom_call.1} parent=1 // pred_fallthru
      _
    %3663 = vsyncpa [#allocation3], 1
    %3664 = vsyncpa [#allocation6], 1
    %3665 = vsyncpa [#allocation4], 1

</llo_original>
